<compile_context>
chip_gen: v5e
topology: v5e:2x2
jax: 0.10.0
libtpu: 0.0.40
codegen_flags: <defaults>
</compile_context>

<pallas_src>
import jax
import jax.numpy as jnp
from jax.experimental import pallas as pl
from jax.experimental.pallas import tpu as pltpu

INPUT_SIZE = 784
HIDDEN = 2048
NUM_CLASSES = 10
N_PAD = 128   # lane-dense classifier width (zero-padded, sliced off in the wrapper)


def _round_up(n, m):
    return ((n + m - 1) // m) * m


def _pick_tile_b(B, tile_b):
    """Batch tile: the full (16-aligned) batch when small, else `tile_b`; a single big
    tile is split in two so both v7x TensorCores get work under ("parallel",)."""
    Bp = _round_up(B, 16)          # 16: bf16 sublane packing granularity
    if Bp <= tile_b:
        if Bp >= 512:              # big enough to be worth splitting across 2 TCs
            return _round_up((Bp + 1) // 2, 16)
        return Bp
    return tile_b


def mlp_kernel(x_ref, w1_ref, b1_ref, w2_ref, b2_ref, o_ref):
    # Layer 1: bf16 x bf16 -> f32 accumulation on the MXU.
    h = jnp.dot(x_ref[...], w1_ref[...], preferred_element_type=jnp.float32)
    h = h + b1_ref[...]
    # Layer 2: cast h to bf16 so the MXU runs single-pass bf16 inputs (f32 accumulate).
    out = jnp.dot(h.astype(jnp.bfloat16), w2_ref[...],
                  preferred_element_type=jnp.float32)
    o_ref[...] = (out + b2_ref[...]).astype(o_ref.dtype)


def logistic_regression_forward(x, w1, b1, w2, b2, *, tile_b=512):
    """x: (B, 784); w1: (784, 2048); b1: (1, 2048); w2: (2048, 10); b2: (1, 10)."""
    B = x.shape[0]
    tile_b = _pick_tile_b(B, tile_b)
    Bp = _round_up(B, tile_b)

    # Stream the big operands in bf16 (halves HBM bytes; MXU-native fast path).
    x_bf = x if x.dtype == jnp.bfloat16 else x.astype(jnp.bfloat16)
    if Bp != B:
        x_bf = jnp.pad(x_bf, ((0, Bp - B), (0, 0)))

    w1_bf = w1.astype(jnp.bfloat16)
    b1_f = b1.reshape(1, HIDDEN).astype(jnp.float32)
    # Lane-pad the classifier head 10 -> 128 with zero columns (compute-free on the MXU,
    # gives an unmasked lane-dense output store).
    w2_bf = jnp.zeros((HIDDEN, N_PAD), jnp.bfloat16)
    w2_bf = w2_bf.at[:, :NUM_CLASSES].set(w2.astype(jnp.bfloat16))
    b2_f = jnp.zeros((1, N_PAD), jnp.float32)
    b2_f = b2_f.at[:, :NUM_CLASSES].set(b2.reshape(1, NUM_CLASSES).astype(jnp.float32))

    grid = (Bp // tile_b,)

    out = pl.pallas_call(
        mlp_kernel,
        out_shape=jax.ShapeDtypeStruct((Bp, N_PAD), jnp.float32),
        grid=grid,
        in_specs=[
            # x tiles stream per grid step (double-buffered by the pipeline).
            pl.BlockSpec((tile_b, INPUT_SIZE), lambda i: (i, 0)),
            # Weights/biases: constant block index -> fetched once, VMEM-resident.
            pl.BlockSpec((INPUT_SIZE, HIDDEN), lambda i: (0, 0)),
            pl.BlockSpec((1, HIDDEN), lambda i: (0, 0)),
            pl.BlockSpec((HIDDEN, N_PAD), lambda i: (0, 0)),
            pl.BlockSpec((1, N_PAD), lambda i: (0, 0)),
        ],
        out_specs=pl.BlockSpec((tile_b, N_PAD), lambda i: (i, 0)),
        compiler_params=pltpu.CompilerParams(
            dimension_semantics=("parallel",),   # batch tiles are independent (megacore)
            vmem_limit_bytes=48 << 20,           # ~14-18 MiB actual at tile_b=512
        ),
    )(x_bf, w1_bf, b1_f, w2_bf, b2_f)

    return out[:B, :NUM_CLASSES]


def init_params(key):
    """Deterministic init mimicking nn.Linear defaults (uniform +/- 1/sqrt(fan_in)).

    Layout is (in, out) == PyTorch weight.T; everything is produced in f32 and the
    wrapper handles bf16 streaming casts.
    """
    k1, k2, k3, k4 = jax.random.split(key, 4)
    bound1 = 1.0 / float(jnp.sqrt(jnp.float32(INPUT_SIZE)))
    bound2 = 1.0 / float(jnp.sqrt(jnp.float32(HIDDEN)))
    w1 = jax.random.uniform(k1, (INPUT_SIZE, HIDDEN), jnp.float32, -bound1, bound1)
    b1 = jax.random.uniform(k2, (1, HIDDEN), jnp.float32, -bound1, bound1)
    w2 = jax.random.uniform(k3, (HIDDEN, NUM_CLASSES), jnp.float32, -bound2, bound2)
    b2 = jax.random.uniform(k4, (1, NUM_CLASSES), jnp.float32, -bound2, bound2)
    return w1, b1, w2, b2


if __name__ == "__main__":
    key = jax.random.PRNGKey(0)
    kx, kp = jax.random.split(key)

    # Small batch, deliberately not 16-aligned: exercises the pad + slice path while
    # keeping shapes consistent with the module (784 -> 2048 -> 10).
    B = 12
    x = jax.random.normal(kx, (B, INPUT_SIZE), jnp.float32)
    w1, b1, w2, b2 = init_params(kp)

    out = logistic_regression_forward(x, w1, b1, w2, b2)
    out = jax.block_until_ready(out)

    # Pure-JAX reference mirroring the kernel's bf16 storage of x/W1/W2 (upcasts are
    # exact), computed at HIGHEST precision so remaining differences come only from the
    # kernel's bf16 cast of h and MXU accumulation order.
    x_r = x.astype(jnp.bfloat16).astype(jnp.float32)
    w1_r = w1.astype(jnp.bfloat16).astype(jnp.float32)
    w2_r = w2.astype(jnp.bfloat16).astype(jnp.float32)
    h_r = jnp.dot(x_r, w1_r, precision=jax.lax.Precision.HIGHEST) + b1
    ref = jnp.dot(h_r, w2_r, precision=jax.lax.Precision.HIGHEST) + b2

    assert out.shape == (B, NUM_CLASSES)
    assert bool(jnp.allclose(out, ref, atol=2e-2, rtol=2e-2)), "mismatch vs reference"

    print("KERNEL_OK")
</pallas_src>

<mosaic_0001>
module attributes {stable_mosaic.version = 11 : i64} {
  func.func @mlp_kernel(%arg0: i32, %arg1: memref<16x784xbf16, #tpu.memory_space<vmem>>, %arg2: memref<784x2048xbf16, #tpu.memory_space<vmem>>, %arg3: memref<1x2048xf32, #tpu.memory_space<vmem>>, %arg4: memref<2048x128xbf16, #tpu.memory_space<vmem>>, %arg5: memref<1x128xf32, #tpu.memory_space<vmem>>, %arg6: memref<16x128xf32, #tpu.memory_space<vmem>>) attributes {dimension_semantics = [#tpu.dimension_semantics<parallel>], iteration_bounds = array<i64: 1>, scalar_prefetch = 0 : i64, scratch_operands = 0 : i64, tpu.core_type = #tpu.core_type<tc>, window_params = [{transform_indices = @transform_0, window_bounds = array<i64: 16, 784>}, {pipeline_mode = #tpu.pipeline_mode<synchronous>, transform_indices = @transform_1, window_bounds = array<i64: 784, 2048>}, {pipeline_mode = #tpu.pipeline_mode<synchronous>, transform_indices = @transform_2, window_bounds = array<i64: 1, 2048>}, {pipeline_mode = #tpu.pipeline_mode<synchronous>, transform_indices = @transform_3, window_bounds = array<i64: 2048, 128>}, {pipeline_mode = #tpu.pipeline_mode<synchronous>, transform_indices = @transform_4, window_bounds = array<i64: 1, 128>}, {transform_indices = @transform_5, window_bounds = array<i64: 16, 128>}]} {
    %c0 = arith.constant 0 : index
    %c0_0 = arith.constant 0 : index
    %0 = vector.load %arg1[%c0, %c0_0] : memref<16x784xbf16, #tpu.memory_space<vmem>>, vector<16x784xbf16>
    %c0_1 = arith.constant 0 : index
    %c0_2 = arith.constant 0 : index
    %1 = vector.load %arg2[%c0_1, %c0_2] : memref<784x2048xbf16, #tpu.memory_space<vmem>>, vector<784x2048xbf16>
    %cst = arith.constant dense<0.000000e+00> : vector<16x2048xf32>
    %2 = tpu.matmul %0, %1, %cst {dimension_numbers = #tpu.dot_dimension_numbers<[1], [0], [0], [1], [0, 0, 1, 1], [], []>} : vector<16x784xbf16>, vector<784x2048xbf16>, vector<16x2048xf32> -> vector<16x2048xf32>
    %c0_3 = arith.constant 0 : index
    %c0_4 = arith.constant 0 : index
    %3 = vector.load %arg3[%c0_3, %c0_4] : memref<1x2048xf32, #tpu.memory_space<vmem>>, vector<1x2048xf32>
    %4 = vector.broadcast %3 : vector<1x2048xf32> to vector<16x2048xf32>
    %5 = arith.addf %2, %4 : vector<16x2048xf32>
    %6 = arith.truncf %5 : vector<16x2048xf32> to vector<16x2048xbf16>
    %c0_5 = arith.constant 0 : index
    %c0_6 = arith.constant 0 : index
    %7 = vector.load %arg4[%c0_5, %c0_6] : memref<2048x128xbf16, #tpu.memory_space<vmem>>, vector<2048x128xbf16>
    %cst_7 = arith.constant dense<0.000000e+00> : vector<16x128xf32>
    %8 = tpu.matmul %6, %7, %cst_7 {dimension_numbers = #tpu.dot_dimension_numbers<[1], [0], [0], [1], [0, 0, 1, 1], [], []>} : vector<16x2048xbf16>, vector<2048x128xbf16>, vector<16x128xf32> -> vector<16x128xf32>
    %c0_8 = arith.constant 0 : index
    %c0_9 = arith.constant 0 : index
    %9 = vector.load %arg5[%c0_8, %c0_9] : memref<1x128xf32, #tpu.memory_space<vmem>>, vector<1x128xf32>
    %10 = vector.broadcast %9 : vector<1x128xf32> to vector<16x128xf32>
    %11 = arith.addf %8, %10 : vector<16x128xf32>
    %c0_10 = arith.constant 0 : index
    %c0_11 = arith.constant 0 : index
    %12 = vector.load %arg6[%c0_10, %c0_11] : memref<16x128xf32, #tpu.memory_space<vmem>>, vector<16x128xf32>
    tpu.vector_store %arg6[%c0_10, %c0_11], %11 {strides = array<i32>} : memref<16x128xf32, #tpu.memory_space<vmem>>, vector<16x128xf32>,
    return
  }
  func.func @transform_0(%arg0: i32) -> (i32, i32) {
    %c0_i32 = arith.constant 0 : i32
    %c0_i32_0 = arith.constant 0 : i32
    return %arg0, %c0_i32 : i32, i32
  }
  func.func @transform_1(%arg0: i32) -> (i32, i32) {
    %c0_i32 = arith.constant 0 : i32
    %c0_i32_0 = arith.constant 0 : i32
    %c0_i32_1 = arith.constant 0 : i32
    return %c0_i32, %c0_i32_0 : i32, i32
  }
  func.func @transform_2(%arg0: i32) -> (i32, i32) {
    %c0_i32 = arith.constant 0 : i32
    %c0_i32_0 = arith.constant 0 : i32
    %c0_i32_1 = arith.constant 0 : i32
    return %c0_i32, %c0_i32_0 : i32, i32
  }
  func.func @transform_3(%arg0: i32) -> (i32, i32) {
    %c0_i32 = arith.constant 0 : i32
    %c0_i32_0 = arith.constant 0 : i32
    %c0_i32_1 = arith.constant 0 : i32
    return %c0_i32, %c0_i32_0 : i32, i32
  }
  func.func @transform_4(%arg0: i32) -> (i32, i32) {
    %c0_i32 = arith.constant 0 : i32
    %c0_i32_0 = arith.constant 0 : i32
    %c0_i32_1 = arith.constant 0 : i32
    return %c0_i32, %c0_i32_0 : i32, i32
  }
  func.func @transform_5(%arg0: i32) -> (i32, i32) {
    %c0_i32 = arith.constant 0 : i32
    %c0_i32_0 = arith.constant 0 : i32
    return %arg0, %c0_i32 : i32, i32
  }
}

</mosaic_0001>

<llo_original>
// kernel: tpu_custom_call.1
$region0: #{tpu_custom_call.1}
  #allocation0 [shape = 'u32[]', space=smem, size = 0x4, offset = 0x4, fixed_abs, tag = 'smem constant byte address 0x4 - core index']
  #allocation1 [shape = 'u32[72,128]{1,0:T(1,128)}', space=vmem, size = 0x9000, scoped, tag = 'internal scratch']
  %s0 = inlined_call_operand.hbm [shape: bf16[16,784], index: 0, kind: input, shape index: {}]
  %s1 = inlined_call_operand.hbm [shape: bf16[784,2048], index: 1, kind: input, shape index: {}]
  %s2 = inlined_call_operand.hbm [shape: f32[1,2048], index: 2, kind: input, shape index: {}]
  %s3 = inlined_call_operand.hbm [shape: bf16[2048,128], index: 3, kind: input, shape index: {}]
  %s4 = inlined_call_operand.hbm [shape: f32[1,128], index: 4, kind: input, shape index: {}]
  %s5 = inlined_call_operand.hbm [shape: f32[16,128], index: 5, kind: output, shape index: {}]
  %s6 = sld [smem:[#allocation0]]
  $region50: #{tpu_custom_call.1} parent=0
    _
  %s8 = ssub.s32 1, %s6
  %s9 = scalar_select 0, %s8, %s6
  $region1: #{tpu_custom_call.1} parent=0
    #allocation2 [shape = 'u8[28672]{0}', space=vmem, size = 0x7000, scoped, tag = 'input window, operand 0, single buffered']
    #allocation3 [shape = 's32[1]{0}', space=sflag, size = 0x4, scoped, tag = 'scoped memory for tpu_custom_call.1']
    #allocation4 [shape = 's32[1]{0}', space=sflag, size = 0x4, scoped, tag = 'scoped memory for tpu_custom_call.1']
    #allocation5 [shape = 'u8[3211264]{0}', space=vmem, size = 0x310000, scoped, tag = 'input window, operand 1, single buffered']
    #allocation6 [shape = 's32[1]{0}', space=sflag, size = 0x4, scoped, tag = 'scoped memory for tpu_custom_call.1']
    #allocation7 [shape = 'u8[8192]{0}', space=vmem, size = 0x2000, scoped, tag = 'input window, operand 2, single buffered']
    #allocation8 [shape = 'u8[524288]{0}', space=vmem, size = 0x80000, scoped, tag = 'input window, operand 3, single buffered']
    #allocation9 [shape = 's32[1]{0}', space=sflag, size = 0x4, scoped, tag = 'scoped memory for tpu_custom_call.1']
    #allocation10 [shape = 'u8[512]{0}', space=vmem, size = 0x400, scoped, tag = 'input window, operand 4, single buffered']
    #allocation11 [shape = 'u8[8192]{0}', space=vmem, size = 0x2000, scoped, tag = 'output window, operand 0, single buffered']
    %10 = vsyncpa [#allocation3], 0
    %11 = vsyncpa [#allocation6], 0
    %12 = vsyncpa [#allocation9], 0
    %13 = vsyncpa [#allocation4], 0
    // Predicated region
    $region2: #{tpu_custom_call.1} parent=1 // pred_check
      _
    $region3: #{tpu_custom_call.1} parent=1 // pred_check_branch
      %15 = sbr.rel (0) target = $region5
    $region4: #{tpu_custom_call.1} parent=1 // pred_region
      %17 = vsyncadd [#allocation3], 0
      %s18 = sshll.u32 %s0, 4
      %s19 = int_to_ptr.hbm [resolvable:$true] %s18
      %s20 = sshll.u32 [#allocation2], 4
      %s21 = int_to_ptr.vmem [resolvable:$true] %s20
      %26 = dma.hbm_to_vmem [thread:$0]  %s19, 896, %s21, [#allocation3], 448, 448, 28
    $region5: #{tpu_custom_call.1} parent=1 // pred_fallthru
      _
    // Predicated region
    $region6: #{tpu_custom_call.1} parent=1 // pred_check
      _
    $region7: #{tpu_custom_call.1} parent=1 // pred_check_branch
      %28 = sbr.rel (0) target = $region9
    $region8: #{tpu_custom_call.1} parent=1 // pred_region
      %30 = vsyncadd [#allocation6], 0
      %s31 = sshll.u32 %s1, 4
      %s32 = int_to_ptr.hbm [resolvable:$true] %s31
      %s33 = sshll.u32 [#allocation5], 4
      %s34 = int_to_ptr.vmem [resolvable:$true] %s33
      %39 = dma.hbm_to_vmem [thread:$0]  %s32, 100352, %s34, [#allocation6], 1024, 1024, 64
    $region9: #{tpu_custom_call.1} parent=1 // pred_fallthru
      _
    // Predicated region
    $region10: #{tpu_custom_call.1} parent=1 // pred_check
      _
    $region11: #{tpu_custom_call.1} parent=1 // pred_check_branch
      %41 = sbr.rel (0) target = $region13
    $region12: #{tpu_custom_call.1} parent=1 // pred_region
      %43 = vsyncadd [#allocation6], 0
      %s45 = sshll.u32 %s2, 4
      %s46 = int_to_ptr.hbm [resolvable:$true] %s45
      %s47 = sshll.u32 [#allocation7], 4
      %s48 = int_to_ptr.vmem [resolvable:$true] %s47
      %50 = dma.hbm_to_vmem [thread:$0]  %s46, 256, %s48, [#allocation6]
    $region13: #{tpu_custom_call.1} parent=1 // pred_fallthru
      _
    // Predicated region
    $region14: #{tpu_custom_call.1} parent=1 // pred_check
      _
    $region15: #{tpu_custom_call.1} parent=1 // pred_check_branch
      %52 = sbr.rel (0) target = $region17
    $region16: #{tpu_custom_call.1} parent=1 // pred_region
      %54 = vsyncadd [#allocation9], 0
      %s55 = sshll.u32 %s3, 4
      %s56 = int_to_ptr.hbm [resolvable:$true] %s55
      %s57 = sshll.u32 [#allocation8], 4
      %s58 = int_to_ptr.vmem [resolvable:$true] %s57
      %63 = dma.hbm_to_vmem [thread:$0]  %s56, 16384, %s58, [#allocation9], 64, 64, 4
    $region17: #{tpu_custom_call.1} parent=1 // pred_fallthru
      _
    // Predicated region
    $region18: #{tpu_custom_call.1} parent=1 // pred_check
      _
    $region19: #{tpu_custom_call.1} parent=1 // pred_check_branch
      %65 = sbr.rel (0) target = $region21
    $region20: #{tpu_custom_call.1} parent=1 // pred_region
      %67 = vsyncadd [#allocation9], 0
      %s69 = sshll.u32 %s4, 4
      %s70 = int_to_ptr.hbm [resolvable:$true] %s69
      %s71 = sshll.u32 [#allocation10], 4
      %s72 = int_to_ptr.vmem [resolvable:$true] %s71
      %74 = dma.hbm_to_vmem [thread:$0]  %s70, 16, %s72, [#allocation9]
    $region21: #{tpu_custom_call.1} parent=1 // pred_fallthru
      _
    // Predicated region
    $region22: #{tpu_custom_call.1} parent=1 // pred_check
      _
    $region23: #{tpu_custom_call.1} parent=1 // pred_check_branch
      %76 = sbr.rel (0) target = $region25
    $region24: #{tpu_custom_call.1} parent=1 // pred_region
      %78 = dma.done [#allocation3], 896
    $region25: #{tpu_custom_call.1} parent=1 // pred_fallthru
      _
    // Predicated region
    $region26: #{tpu_custom_call.1} parent=1 // pred_check
      _
    $region27: #{tpu_custom_call.1} parent=1 // pred_check_branch
      %80 = sbr.rel (0) target = $region29
    $region28: #{tpu_custom_call.1} parent=1 // pred_region
      %82 = dma.done [#allocation6], 100352
    $region29: #{tpu_custom_call.1} parent=1 // pred_fallthru
      _
    // Predicated region
    $region30: #{tpu_custom_call.1} parent=1 // pred_check
      _
    $region31: #{tpu_custom_call.1} parent=1 // pred_check_branch
      %84 = sbr.rel (0) target = $region33
    $region32: #{tpu_custom_call.1} parent=1 // pred_region
      %86 = dma.done [#allocation6], 256
    $region33: #{tpu_custom_call.1} parent=1 // pred_fallthru
      _
    // Predicated region
    $region34: #{tpu_custom_call.1} parent=1 // pred_check
      _
    $region35: #{tpu_custom_call.1} parent=1 // pred_check_branch
      %88 = sbr.rel (0) target = $region37
    $region36: #{tpu_custom_call.1} parent=1 // pred_region
      %90 = dma.done [#allocation9], 16384
    $region37: #{tpu_custom_call.1} parent=1 // pred_fallthru
      _
    // Predicated region
    $region38: #{tpu_custom_call.1} parent=1 // pred_check
      _
    $region39: #{tpu_custom_call.1} parent=1 // pred_check_branch
      %92 = sbr.rel (0) target = $region41
    $region40: #{tpu_custom_call.1} parent=1 // pred_region
      %94 = dma.done [#allocation9], 16
    $region41: #{tpu_custom_call.1} parent=1 // pred_fallthru
      _
    %v96 = vld [vmem:[#allocation2] sm:$0xff]
    %v97 = vld [vmem:[#allocation2 + $0x8] sm:$0xff]
    %v98 = vld [vmem:[#allocation2 + $0x10] sm:$0xff]
    %v99 = vld [vmem:[#allocation2 + $0x18] sm:$0xf]
    %v100 = vld [vmem:[#allocation2 + $0x1c] sm:$0xff]
    %v101 = vld [vmem:[#allocation2 + $0x24] sm:$0xff]
    %v102 = vld [vmem:[#allocation2 + $0x2c] sm:$0xff]
    %v103 = vld [vmem:[#allocation2 + $0x34] sm:$0xf]
    %v104 = vld [vmem:[#allocation5] sm:$0xff]
    %v105 = vld [vmem:[#allocation5 + $0x8] sm:$0xff]
    %v106 = vld [vmem:[#allocation5 + $0x10] sm:$0xff]
    %v107 = vld [vmem:[#allocation5 + $0x18] sm:$0xff]
    %v108 = vld [vmem:[#allocation5 + $0x20] sm:$0xff]
    %v109 = vld [vmem:[#allocation5 + $0x28] sm:$0xff]
    %v110 = vld [vmem:[#allocation5 + $0x30] sm:$0xff]
    %v111 = vld [vmem:[#allocation5 + $0x38] sm:$0xff]
    %v112 = vld [vmem:[#allocation5 + $0x40] sm:$0xff]
    %v113 = vld [vmem:[#allocation5 + $0x48] sm:$0xff]
    %v114 = vld [vmem:[#allocation5 + $0x50] sm:$0xff]
    %v115 = vld [vmem:[#allocation5 + $0x58] sm:$0xff]
    %v116 = vld [vmem:[#allocation5 + $0x60] sm:$0xff]
    %v117 = vld [vmem:[#allocation5 + $0x68] sm:$0xff]
    %v118 = vld [vmem:[#allocation5 + $0x70] sm:$0xff]
    %v119 = vld [vmem:[#allocation5 + $0x78] sm:$0xff]
    %v120 = vld [vmem:[#allocation5 + $0x80] sm:$0xff]
    %v121 = vld [vmem:[#allocation5 + $0x88] sm:$0xff]
    %v122 = vld [vmem:[#allocation5 + $0x90] sm:$0xff]
    %v123 = vld [vmem:[#allocation5 + $0x98] sm:$0xff]
    %v124 = vld [vmem:[#allocation5 + $0xa0] sm:$0xff]
    %v125 = vld [vmem:[#allocation5 + $0xa8] sm:$0xff]
    %v126 = vld [vmem:[#allocation5 + $0xb0] sm:$0xff]
    %v127 = vld [vmem:[#allocation5 + $0xb8] sm:$0xff]
    %v128 = vld [vmem:[#allocation5 + $0xc0] sm:$0xff]
    %v129 = vld [vmem:[#allocation5 + $0xc8] sm:$0xff]
    %v130 = vld [vmem:[#allocation5 + $0xd0] sm:$0xff]
    %v131 = vld [vmem:[#allocation5 + $0xd8] sm:$0xff]
    %v132 = vld [vmem:[#allocation5 + $0xe0] sm:$0xff]
    %v133 = vld [vmem:[#allocation5 + $0xe8] sm:$0xff]
    %v134 = vld [vmem:[#allocation5 + $0xf0] sm:$0xff]
    %v135 = vld [vmem:[#allocation5 + $0xf8] sm:$0xff]
    %v136 = vld [vmem:[#allocation5 + $0x100] sm:$0xff]
    %v137 = vld [vmem:[#allocation5 + $0x108] sm:$0xff]
    %v138 = vld [vmem:[#allocation5 + $0x110] sm:$0xff]
    %v139 = vld [vmem:[#allocation5 + $0x118] sm:$0xff]
    %v140 = vld [vmem:[#allocation5 + $0x120] sm:$0xff]
    %v141 = vld [vmem:[#allocation5 + $0x128] sm:$0xff]
    %v142 = vld [vmem:[#allocation5 + $0x130] sm:$0xff]
    %v143 = vld [vmem:[#allocation5 + $0x138] sm:$0xff]
    %v144 = vld [vmem:[#allocation5 + $0x140] sm:$0xff]
    %v145 = vld [vmem:[#allocation5 + $0x148] sm:$0xff]
    %v146 = vld [vmem:[#allocation5 + $0x150] sm:$0xff]
    %v147 = vld [vmem:[#allocation5 + $0x158] sm:$0xff]
    %v148 = vld [vmem:[#allocation5 + $0x160] sm:$0xff]
    %v149 = vld [vmem:[#allocation5 + $0x168] sm:$0xff]
    %v150 = vld [vmem:[#allocation5 + $0x170] sm:$0xff]
    %v151 = vld [vmem:[#allocation5 + $0x178] sm:$0xff]
    %v152 = vld [vmem:[#allocation5 + $0x180] sm:$0xff]
    %v153 = vld [vmem:[#allocation5 + $0x188] sm:$0xff]
    %v154 = vld [vmem:[#allocation5 + $0x190] sm:$0xff]
    %v155 = vld [vmem:[#allocation5 + $0x198] sm:$0xff]
    %v156 = vld [vmem:[#allocation5 + $0x1a0] sm:$0xff]
    %v157 = vld [vmem:[#allocation5 + $0x1a8] sm:$0xff]
    %v158 = vld [vmem:[#allocation5 + $0x1b0] sm:$0xff]
    %v159 = vld [vmem:[#allocation5 + $0x1b8] sm:$0xff]
    %v160 = vld [vmem:[#allocation5 + $0x1c0] sm:$0xff]
    %v161 = vld [vmem:[#allocation5 + $0x1c8] sm:$0xff]
    %v162 = vld [vmem:[#allocation5 + $0x1d0] sm:$0xff]
    %v163 = vld [vmem:[#allocation5 + $0x1d8] sm:$0xff]
    %v164 = vld [vmem:[#allocation5 + $0x1e0] sm:$0xff]
    %v165 = vld [vmem:[#allocation5 + $0x1e8] sm:$0xff]
    %v166 = vld [vmem:[#allocation5 + $0x1f0] sm:$0xff]
    %v167 = vld [vmem:[#allocation5 + $0x1f8] sm:$0xff]
    %v168 = vld [vmem:[#allocation5 + $0x200] sm:$0xff]
    %v169 = vld [vmem:[#allocation5 + $0x208] sm:$0xff]
    %v170 = vld [vmem:[#allocation5 + $0x210] sm:$0xff]
    %v171 = vld [vmem:[#allocation5 + $0x218] sm:$0xff]
    %v172 = vld [vmem:[#allocation5 + $0x220] sm:$0xff]
    %v173 = vld [vmem:[#allocation5 + $0x228] sm:$0xff]
    %v174 = vld [vmem:[#allocation5 + $0x230] sm:$0xff]
    %v175 = vld [vmem:[#allocation5 + $0x238] sm:$0xff]
    %v176 = vld [vmem:[#allocation5 + $0x240] sm:$0xff]
    %v177 = vld [vmem:[#allocation5 + $0x248] sm:$0xff]
    %v178 = vld [vmem:[#allocation5 + $0x250] sm:$0xff]
    %v179 = vld [vmem:[#allocation5 + $0x258] sm:$0xff]
    %v180 = vld [vmem:[#allocation5 + $0x260] sm:$0xff]
    %v181 = vld [vmem:[#allocation5 + $0x268] sm:$0xff]
    %v182 = vld [vmem:[#allocation5 + $0x270] sm:$0xff]
    %v183 = vld [vmem:[#allocation5 + $0x278] sm:$0xff]
    %v184 = vld [vmem:[#allocation5 + $0x280] sm:$0xff]
    %v185 = vld [vmem:[#allocation5 + $0x288] sm:$0xff]
    %v186 = vld [vmem:[#allocation5 + $0x290] sm:$0xff]
    %v187 = vld [vmem:[#allocation5 + $0x298] sm:$0xff]
    %v188 = vld [vmem:[#allocation5 + $0x2a0] sm:$0xff]
    %v189 = vld [vmem:[#allocation5 + $0x2a8] sm:$0xff]
    %v190 = vld [vmem:[#allocation5 + $0x2b0] sm:$0xff]
    %v191 = vld [vmem:[#allocation5 + $0x2b8] sm:$0xff]
    %v192 = vld [vmem:[#allocation5 + $0x2c0] sm:$0xff]
    %v193 = vld [vmem:[#allocation5 + $0x2c8] sm:$0xff]
    %v194 = vld [vmem:[#allocation5 + $0x2d0] sm:$0xff]
    %v195 = vld [vmem:[#allocation5 + $0x2d8] sm:$0xff]
    %v196 = vld [vmem:[#allocation5 + $0x2e0] sm:$0xff]
    %v197 = vld [vmem:[#allocation5 + $0x2e8] sm:$0xff]
    %v198 = vld [vmem:[#allocation5 + $0x2f0] sm:$0xff]
    %v199 = vld [vmem:[#allocation5 + $0x2f8] sm:$0xff]
    %v200 = vld [vmem:[#allocation5 + $0x300] sm:$0xff]
    %v201 = vld [vmem:[#allocation5 + $0x308] sm:$0xff]
    %v202 = vld [vmem:[#allocation5 + $0x310] sm:$0xff]
    %v203 = vld [vmem:[#allocation5 + $0x318] sm:$0xff]
    %v204 = vld [vmem:[#allocation5 + $0x320] sm:$0xff]
    %v205 = vld [vmem:[#allocation5 + $0x328] sm:$0xff]
    %v206 = vld [vmem:[#allocation5 + $0x330] sm:$0xff]
    %v207 = vld [vmem:[#allocation5 + $0x338] sm:$0xff]
    %v208 = vld [vmem:[#allocation5 + $0x340] sm:$0xff]
    %v209 = vld [vmem:[#allocation5 + $0x348] sm:$0xff]
    %v210 = vld [vmem:[#allocation5 + $0x350] sm:$0xff]
    %v211 = vld [vmem:[#allocation5 + $0x358] sm:$0xff]
    %v212 = vld [vmem:[#allocation5 + $0x360] sm:$0xff]
    %v213 = vld [vmem:[#allocation5 + $0x368] sm:$0xff]
    %v214 = vld [vmem:[#allocation5 + $0x370] sm:$0xff]
    %v215 = vld [vmem:[#allocation5 + $0x378] sm:$0xff]
    %v216 = vld [vmem:[#allocation5 + $0x380] sm:$0xff]
    %v217 = vld [vmem:[#allocation5 + $0x388] sm:$0xff]
    %v218 = vld [vmem:[#allocation5 + $0x390] sm:$0xff]
    %v219 = vld [vmem:[#allocation5 + $0x398] sm:$0xff]
    %v220 = vld [vmem:[#allocation5 + $0x3a0] sm:$0xff]
    %v221 = vld [vmem:[#allocation5 + $0x3a8] sm:$0xff]
    %v222 = vld [vmem:[#allocation5 + $0x3b0] sm:$0xff]
    %v223 = vld [vmem:[#allocation5 + $0x3b8] sm:$0xff]
    %v224 = vld [vmem:[#allocation5 + $0x3c0] sm:$0xff]
    %v225 = vld [vmem:[#allocation5 + $0x3c8] sm:$0xff]
    %v226 = vld [vmem:[#allocation5 + $0x3d0] sm:$0xff]
    %v227 = vld [vmem:[#allocation5 + $0x3d8] sm:$0xff]
    %v228 = vld [vmem:[#allocation5 + $0x3e0] sm:$0xff]
    %v229 = vld [vmem:[#allocation5 + $0x3e8] sm:$0xff]
    %v230 = vld [vmem:[#allocation5 + $0x3f0] sm:$0xff]
    %v231 = vld [vmem:[#allocation5 + $0x3f8] sm:$0xff]
    %v232 = vld [vmem:[#allocation5 + $0x400] sm:$0xff]
    %v233 = vld [vmem:[#allocation5 + $0x408] sm:$0xff]
    %v234 = vld [vmem:[#allocation5 + $0x410] sm:$0xff]
    %v235 = vld [vmem:[#allocation5 + $0x418] sm:$0xff]
    %v236 = vld [vmem:[#allocation5 + $0x420] sm:$0xff]
    %v237 = vld [vmem:[#allocation5 + $0x428] sm:$0xff]
    %v238 = vld [vmem:[#allocation5 + $0x430] sm:$0xff]
    %v239 = vld [vmem:[#allocation5 + $0x438] sm:$0xff]
    %v240 = vld [vmem:[#allocation5 + $0x440] sm:$0xff]
    %v241 = vld [vmem:[#allocation5 + $0x448] sm:$0xff]
    %v242 = vld [vmem:[#allocation5 + $0x450] sm:$0xff]
    %v243 = vld [vmem:[#allocation5 + $0x458] sm:$0xff]
    %v244 = vld [vmem:[#allocation5 + $0x460] sm:$0xff]
    %v245 = vld [vmem:[#allocation5 + $0x468] sm:$0xff]
    %v246 = vld [vmem:[#allocation5 + $0x470] sm:$0xff]
    %v247 = vld [vmem:[#allocation5 + $0x478] sm:$0xff]
    %v248 = vld [vmem:[#allocation5 + $0x480] sm:$0xff]
    %v249 = vld [vmem:[#allocation5 + $0x488] sm:$0xff]
    %v250 = vld [vmem:[#allocation5 + $0x490] sm:$0xff]
    %v251 = vld [vmem:[#allocation5 + $0x498] sm:$0xff]
    %v252 = vld [vmem:[#allocation5 + $0x4a0] sm:$0xff]
    %v253 = vld [vmem:[#allocation5 + $0x4a8] sm:$0xff]
    %v254 = vld [vmem:[#allocation5 + $0x4b0] sm:$0xff]
    %v255 = vld [vmem:[#allocation5 + $0x4b8] sm:$0xff]
    %v256 = vld [vmem:[#allocation5 + $0x4c0] sm:$0xff]
    %v257 = vld [vmem:[#allocation5 + $0x4c8] sm:$0xff]
    %v258 = vld [vmem:[#allocation5 + $0x4d0] sm:$0xff]
    %v259 = vld [vmem:[#allocation5 + $0x4d8] sm:$0xff]
    %v260 = vld [vmem:[#allocation5 + $0x4e0] sm:$0xff]
    %v261 = vld [vmem:[#allocation5 + $0x4e8] sm:$0xff]
    %v262 = vld [vmem:[#allocation5 + $0x4f0] sm:$0xff]
    %v263 = vld [vmem:[#allocation5 + $0x4f8] sm:$0xff]
    %v264 = vld [vmem:[#allocation5 + $0x500] sm:$0xff]
    %v265 = vld [vmem:[#allocation5 + $0x508] sm:$0xff]
    %v266 = vld [vmem:[#allocation5 + $0x510] sm:$0xff]
    %v267 = vld [vmem:[#allocation5 + $0x518] sm:$0xff]
    %v268 = vld [vmem:[#allocation5 + $0x520] sm:$0xff]
    %v269 = vld [vmem:[#allocation5 + $0x528] sm:$0xff]
    %v270 = vld [vmem:[#allocation5 + $0x530] sm:$0xff]
    %v271 = vld [vmem:[#allocation5 + $0x538] sm:$0xff]
    %v272 = vld [vmem:[#allocation5 + $0x540] sm:$0xff]
    %v273 = vld [vmem:[#allocation5 + $0x548] sm:$0xff]
    %v274 = vld [vmem:[#allocation5 + $0x550] sm:$0xff]
    %v275 = vld [vmem:[#allocation5 + $0x558] sm:$0xff]
    %v276 = vld [vmem:[#allocation5 + $0x560] sm:$0xff]
    %v277 = vld [vmem:[#allocation5 + $0x568] sm:$0xff]
    %v278 = vld [vmem:[#allocation5 + $0x570] sm:$0xff]
    %v279 = vld [vmem:[#allocation5 + $0x578] sm:$0xff]
    %v280 = vld [vmem:[#allocation5 + $0x580] sm:$0xff]
    %v281 = vld [vmem:[#allocation5 + $0x588] sm:$0xff]
    %v282 = vld [vmem:[#allocation5 + $0x590] sm:$0xff]
    %v283 = vld [vmem:[#allocation5 + $0x598] sm:$0xff]
    %v284 = vld [vmem:[#allocation5 + $0x5a0] sm:$0xff]
    %v285 = vld [vmem:[#allocation5 + $0x5a8] sm:$0xff]
    %v286 = vld [vmem:[#allocation5 + $0x5b0] sm:$0xff]
    %v287 = vld [vmem:[#allocation5 + $0x5b8] sm:$0xff]
    %v288 = vld [vmem:[#allocation5 + $0x5c0] sm:$0xff]
    %v289 = vld [vmem:[#allocation5 + $0x5c8] sm:$0xff]
    %v290 = vld [vmem:[#allocation5 + $0x5d0] sm:$0xff]
    %v291 = vld [vmem:[#allocation5 + $0x5d8] sm:$0xff]
    %v292 = vld [vmem:[#allocation5 + $0x5e0] sm:$0xff]
    %v293 = vld [vmem:[#allocation5 + $0x5e8] sm:$0xff]
    %v294 = vld [vmem:[#allocation5 + $0x5f0] sm:$0xff]
    %v295 = vld [vmem:[#allocation5 + $0x5f8] sm:$0xff]
    %v296 = vld [vmem:[#allocation5 + $0x600] sm:$0xff]
    %v297 = vld [vmem:[#allocation5 + $0x608] sm:$0xff]
    %v298 = vld [vmem:[#allocation5 + $0x610] sm:$0xff]
    %v299 = vld [vmem:[#allocation5 + $0x618] sm:$0xff]
    %v300 = vld [vmem:[#allocation5 + $0x620] sm:$0xff]
    %v301 = vld [vmem:[#allocation5 + $0x628] sm:$0xff]
    %v302 = vld [vmem:[#allocation5 + $0x630] sm:$0xff]
    %v303 = vld [vmem:[#allocation5 + $0x638] sm:$0xff]
    %v304 = vld [vmem:[#allocation5 + $0x640] sm:$0xff]
    %v305 = vld [vmem:[#allocation5 + $0x648] sm:$0xff]
    %v306 = vld [vmem:[#allocation5 + $0x650] sm:$0xff]
    %v307 = vld [vmem:[#allocation5 + $0x658] sm:$0xff]
    %v308 = vld [vmem:[#allocation5 + $0x660] sm:$0xff]
    %v309 = vld [vmem:[#allocation5 + $0x668] sm:$0xff]
    %v310 = vld [vmem:[#allocation5 + $0x670] sm:$0xff]
    %v311 = vld [vmem:[#allocation5 + $0x678] sm:$0xff]
    %v312 = vld [vmem:[#allocation5 + $0x680] sm:$0xff]
    %v313 = vld [vmem:[#allocation5 + $0x688] sm:$0xff]
    %v314 = vld [vmem:[#allocation5 + $0x690] sm:$0xff]
    %v315 = vld [vmem:[#allocation5 + $0x698] sm:$0xff]
    %v316 = vld [vmem:[#allocation5 + $0x6a0] sm:$0xff]
    %v317 = vld [vmem:[#allocation5 + $0x6a8] sm:$0xff]
    %v318 = vld [vmem:[#allocation5 + $0x6b0] sm:$0xff]
    %v319 = vld [vmem:[#allocation5 + $0x6b8] sm:$0xff]
    %v320 = vld [vmem:[#allocation5 + $0x6c0] sm:$0xff]
    %v321 = vld [vmem:[#allocation5 + $0x6c8] sm:$0xff]
    %v322 = vld [vmem:[#allocation5 + $0x6d0] sm:$0xff]
    %v323 = vld [vmem:[#allocation5 + $0x6d8] sm:$0xff]
    %v324 = vld [vmem:[#allocation5 + $0x6e0] sm:$0xff]
    %v325 = vld [vmem:[#allocation5 + $0x6e8] sm:$0xff]
    %v326 = vld [vmem:[#allocation5 + $0x6f0] sm:$0xff]
    %v327 = vld [vmem:[#allocation5 + $0x6f8] sm:$0xff]
    %v328 = vld [vmem:[#allocation5 + $0x700] sm:$0xff]
    %v329 = vld [vmem:[#allocation5 + $0x708] sm:$0xff]
    %v330 = vld [vmem:[#allocation5 + $0x710] sm:$0xff]
    %v331 = vld [vmem:[#allocation5 + $0x718] sm:$0xff]
    %v332 = vld [vmem:[#allocation5 + $0x720] sm:$0xff]
    %v333 = vld [vmem:[#allocation5 + $0x728] sm:$0xff]
    %v334 = vld [vmem:[#allocation5 + $0x730] sm:$0xff]
    %v335 = vld [vmem:[#allocation5 + $0x738] sm:$0xff]
    %v336 = vld [vmem:[#allocation5 + $0x740] sm:$0xff]
    %v337 = vld [vmem:[#allocation5 + $0x748] sm:$0xff]
    %v338 = vld [vmem:[#allocation5 + $0x750] sm:$0xff]
    %v339 = vld [vmem:[#allocation5 + $0x758] sm:$0xff]
    %v340 = vld [vmem:[#allocation5 + $0x760] sm:$0xff]
    %v341 = vld [vmem:[#allocation5 + $0x768] sm:$0xff]
    %v342 = vld [vmem:[#allocation5 + $0x770] sm:$0xff]
    %v343 = vld [vmem:[#allocation5 + $0x778] sm:$0xff]
    %v344 = vld [vmem:[#allocation5 + $0x780] sm:$0xff]
    %v345 = vld [vmem:[#allocation5 + $0x788] sm:$0xff]
    %v346 = vld [vmem:[#allocation5 + $0x790] sm:$0xff]
    %v347 = vld [vmem:[#allocation5 + $0x798] sm:$0xff]
    %v348 = vld [vmem:[#allocation5 + $0x7a0] sm:$0xff]
    %v349 = vld [vmem:[#allocation5 + $0x7a8] sm:$0xff]
    %v350 = vld [vmem:[#allocation5 + $0x7b0] sm:$0xff]
    %v351 = vld [vmem:[#allocation5 + $0x7b8] sm:$0xff]
    %v352 = vld [vmem:[#allocation5 + $0x7c0] sm:$0xff]
    %v353 = vld [vmem:[#allocation5 + $0x7c8] sm:$0xff]
    %v354 = vld [vmem:[#allocation5 + $0x7d0] sm:$0xff]
    %v355 = vld [vmem:[#allocation5 + $0x7d8] sm:$0xff]
    %v356 = vld [vmem:[#allocation5 + $0x7e0] sm:$0xff]
    %v357 = vld [vmem:[#allocation5 + $0x7e8] sm:$0xff]
    %v358 = vld [vmem:[#allocation5 + $0x7f0] sm:$0xff]
    %v359 = vld [vmem:[#allocation5 + $0x7f8] sm:$0xff]
    %v360 = vld [vmem:[#allocation5 + $0x800] sm:$0xff]
    %v361 = vld [vmem:[#allocation5 + $0x808] sm:$0xff]
    %v362 = vld [vmem:[#allocation5 + $0x810] sm:$0xff]
    %v363 = vld [vmem:[#allocation5 + $0x818] sm:$0xff]
    %v364 = vld [vmem:[#allocation5 + $0x820] sm:$0xff]
    %v365 = vld [vmem:[#allocation5 + $0x828] sm:$0xff]
    %v366 = vld [vmem:[#allocation5 + $0x830] sm:$0xff]
    %v367 = vld [vmem:[#allocation5 + $0x838] sm:$0xff]
    %v368 = vld [vmem:[#allocation5 + $0x840] sm:$0xff]
    %v369 = vld [vmem:[#allocation5 + $0x848] sm:$0xff]
    %v370 = vld [vmem:[#allocation5 + $0x850] sm:$0xff]
    %v371 = vld [vmem:[#allocation5 + $0x858] sm:$0xff]
    %v372 = vld [vmem:[#allocation5 + $0x860] sm:$0xff]
    %v373 = vld [vmem:[#allocation5 + $0x868] sm:$0xff]
    %v374 = vld [vmem:[#allocation5 + $0x870] sm:$0xff]
    %v375 = vld [vmem:[#allocation5 + $0x878] sm:$0xff]
    %v376 = vld [vmem:[#allocation5 + $0x880] sm:$0xff]
    %v377 = vld [vmem:[#allocation5 + $0x888] sm:$0xff]
    %v378 = vld [vmem:[#allocation5 + $0x890] sm:$0xff]
    %v379 = vld [vmem:[#allocation5 + $0x898] sm:$0xff]
    %v380 = vld [vmem:[#allocation5 + $0x8a0] sm:$0xff]
    %v381 = vld [vmem:[#allocation5 + $0x8a8] sm:$0xff]
    %v382 = vld [vmem:[#allocation5 + $0x8b0] sm:$0xff]
    %v383 = vld [vmem:[#allocation5 + $0x8b8] sm:$0xff]
    %v384 = vld [vmem:[#allocation5 + $0x8c0] sm:$0xff]
    %v385 = vld [vmem:[#allocation5 + $0x8c8] sm:$0xff]
    %v386 = vld [vmem:[#allocation5 + $0x8d0] sm:$0xff]
    %v387 = vld [vmem:[#allocation5 + $0x8d8] sm:$0xff]
    %v388 = vld [vmem:[#allocation5 + $0x8e0] sm:$0xff]
    %v389 = vld [vmem:[#allocation5 + $0x8e8] sm:$0xff]
    %v390 = vld [vmem:[#allocation5 + $0x8f0] sm:$0xff]
    %v391 = vld [vmem:[#allocation5 + $0x8f8] sm:$0xff]
    %v392 = vld [vmem:[#allocation5 + $0x900] sm:$0xff]
    %v393 = vld [vmem:[#allocation5 + $0x908] sm:$0xff]
    %v394 = vld [vmem:[#allocation5 + $0x910] sm:$0xff]
    %v395 = vld [vmem:[#allocation5 + $0x918] sm:$0xff]
    %v396 = vld [vmem:[#allocation5 + $0x920] sm:$0xff]
    %v397 = vld [vmem:[#allocation5 + $0x928] sm:$0xff]
    %v398 = vld [vmem:[#allocation5 + $0x930] sm:$0xff]
    %v399 = vld [vmem:[#allocation5 + $0x938] sm:$0xff]
    %v400 = vld [vmem:[#allocation5 + $0x940] sm:$0xff]
    %v401 = vld [vmem:[#allocation5 + $0x948] sm:$0xff]
    %v402 = vld [vmem:[#allocation5 + $0x950] sm:$0xff]
    %v403 = vld [vmem:[#allocation5 + $0x958] sm:$0xff]
    %v404 = vld [vmem:[#allocation5 + $0x960] sm:$0xff]
    %v405 = vld [vmem:[#allocation5 + $0x968] sm:$0xff]
    %v406 = vld [vmem:[#allocation5 + $0x970] sm:$0xff]
    %v407 = vld [vmem:[#allocation5 + $0x978] sm:$0xff]
    %v408 = vld [vmem:[#allocation5 + $0x980] sm:$0xff]
    %v409 = vld [vmem:[#allocation5 + $0x988] sm:$0xff]
    %v410 = vld [vmem:[#allocation5 + $0x990] sm:$0xff]
    %v411 = vld [vmem:[#allocation5 + $0x998] sm:$0xff]
    %v412 = vld [vmem:[#allocation5 + $0x9a0] sm:$0xff]
    %v413 = vld [vmem:[#allocation5 + $0x9a8] sm:$0xff]
    %v414 = vld [vmem:[#allocation5 + $0x9b0] sm:$0xff]
    %v415 = vld [vmem:[#allocation5 + $0x9b8] sm:$0xff]
    %v416 = vld [vmem:[#allocation5 + $0x9c0] sm:$0xff]
    %v417 = vld [vmem:[#allocation5 + $0x9c8] sm:$0xff]
    %v418 = vld [vmem:[#allocation5 + $0x9d0] sm:$0xff]
    %v419 = vld [vmem:[#allocation5 + $0x9d8] sm:$0xff]
    %v420 = vld [vmem:[#allocation5 + $0x9e0] sm:$0xff]
    %v421 = vld [vmem:[#allocation5 + $0x9e8] sm:$0xff]
    %v422 = vld [vmem:[#allocation5 + $0x9f0] sm:$0xff]
    %v423 = vld [vmem:[#allocation5 + $0x9f8] sm:$0xff]
    %v424 = vld [vmem:[#allocation5 + $0xa00] sm:$0xff]
    %v425 = vld [vmem:[#allocation5 + $0xa08] sm:$0xff]
    %v426 = vld [vmem:[#allocation5 + $0xa10] sm:$0xff]
    %v427 = vld [vmem:[#allocation5 + $0xa18] sm:$0xff]
    %v428 = vld [vmem:[#allocation5 + $0xa20] sm:$0xff]
    %v429 = vld [vmem:[#allocation5 + $0xa28] sm:$0xff]
    %v430 = vld [vmem:[#allocation5 + $0xa30] sm:$0xff]
    %v431 = vld [vmem:[#allocation5 + $0xa38] sm:$0xff]
    %v432 = vld [vmem:[#allocation5 + $0xa40] sm:$0xff]
    %v433 = vld [vmem:[#allocation5 + $0xa48] sm:$0xff]
    %v434 = vld [vmem:[#allocation5 + $0xa50] sm:$0xff]
    %v435 = vld [vmem:[#allocation5 + $0xa58] sm:$0xff]
    %v436 = vld [vmem:[#allocation5 + $0xa60] sm:$0xff]
    %v437 = vld [vmem:[#allocation5 + $0xa68] sm:$0xff]
    %v438 = vld [vmem:[#allocation5 + $0xa70] sm:$0xff]
    %v439 = vld [vmem:[#allocation5 + $0xa78] sm:$0xff]
    %v440 = vld [vmem:[#allocation5 + $0xa80] sm:$0xff]
    %v441 = vld [vmem:[#allocation5 + $0xa88] sm:$0xff]
    %v442 = vld [vmem:[#allocation5 + $0xa90] sm:$0xff]
    %v443 = vld [vmem:[#allocation5 + $0xa98] sm:$0xff]
    %v444 = vld [vmem:[#allocation5 + $0xaa0] sm:$0xff]
    %v445 = vld [vmem:[#allocation5 + $0xaa8] sm:$0xff]
    %v446 = vld [vmem:[#allocation5 + $0xab0] sm:$0xff]
    %v447 = vld [vmem:[#allocation5 + $0xab8] sm:$0xff]
    %v448 = vld [vmem:[#allocation5 + $0xac0] sm:$0xff]
    %v449 = vld [vmem:[#allocation5 + $0xac8] sm:$0xff]
    %v450 = vld [vmem:[#allocation5 + $0xad0] sm:$0xff]
    %v451 = vld [vmem:[#allocation5 + $0xad8] sm:$0xff]
    %v452 = vld [vmem:[#allocation5 + $0xae0] sm:$0xff]
    %v453 = vld [vmem:[#allocation5 + $0xae8] sm:$0xff]
    %v454 = vld [vmem:[#allocation5 + $0xaf0] sm:$0xff]
    %v455 = vld [vmem:[#allocation5 + $0xaf8] sm:$0xff]
    %v456 = vld [vmem:[#allocation5 + $0xb00] sm:$0xff]
    %v457 = vld [vmem:[#allocation5 + $0xb08] sm:$0xff]
    %v458 = vld [vmem:[#allocation5 + $0xb10] sm:$0xff]
    %v459 = vld [vmem:[#allocation5 + $0xb18] sm:$0xff]
    %v460 = vld [vmem:[#allocation5 + $0xb20] sm:$0xff]
    %v461 = vld [vmem:[#allocation5 + $0xb28] sm:$0xff]
    %v462 = vld [vmem:[#allocation5 + $0xb30] sm:$0xff]
    %v463 = vld [vmem:[#allocation5 + $0xb38] sm:$0xff]
    %v464 = vld [vmem:[#allocation5 + $0xb40] sm:$0xff]
    %v465 = vld [vmem:[#allocation5 + $0xb48] sm:$0xff]
    %v466 = vld [vmem:[#allocation5 + $0xb50] sm:$0xff]
    %v467 = vld [vmem:[#allocation5 + $0xb58] sm:$0xff]
    %v468 = vld [vmem:[#allocation5 + $0xb60] sm:$0xff]
    %v469 = vld [vmem:[#allocation5 + $0xb68] sm:$0xff]
    %v470 = vld [vmem:[#allocation5 + $0xb70] sm:$0xff]
    %v471 = vld [vmem:[#allocation5 + $0xb78] sm:$0xff]
    %v472 = vld [vmem:[#allocation5 + $0xb80] sm:$0xff]
    %v473 = vld [vmem:[#allocation5 + $0xb88] sm:$0xff]
    %v474 = vld [vmem:[#allocation5 + $0xb90] sm:$0xff]
    %v475 = vld [vmem:[#allocation5 + $0xb98] sm:$0xff]
    %v476 = vld [vmem:[#allocation5 + $0xba0] sm:$0xff]
    %v477 = vld [vmem:[#allocation5 + $0xba8] sm:$0xff]
    %v478 = vld [vmem:[#allocation5 + $0xbb0] sm:$0xff]
    %v479 = vld [vmem:[#allocation5 + $0xbb8] sm:$0xff]
    %v480 = vld [vmem:[#allocation5 + $0xbc0] sm:$0xff]
    %v481 = vld [vmem:[#allocation5 + $0xbc8] sm:$0xff]
    %v482 = vld [vmem:[#allocation5 + $0xbd0] sm:$0xff]
    %v483 = vld [vmem:[#allocation5 + $0xbd8] sm:$0xff]
    %v484 = vld [vmem:[#allocation5 + $0xbe0] sm:$0xff]
    %v485 = vld [vmem:[#allocation5 + $0xbe8] sm:$0xff]
    %v486 = vld [vmem:[#allocation5 + $0xbf0] sm:$0xff]
    %v487 = vld [vmem:[#allocation5 + $0xbf8] sm:$0xff]
    %v488 = vld [vmem:[#allocation5 + $0xc00] sm:$0xff]
    %v489 = vld [vmem:[#allocation5 + $0xc08] sm:$0xff]
    %v490 = vld [vmem:[#allocation5 + $0xc10] sm:$0xff]
    %v491 = vld [vmem:[#allocation5 + $0xc18] sm:$0xff]
    %v492 = vld [vmem:[#allocation5 + $0xc20] sm:$0xff]
    %v493 = vld [vmem:[#allocation5 + $0xc28] sm:$0xff]
    %v494 = vld [vmem:[#allocation5 + $0xc30] sm:$0xff]
    %v495 = vld [vmem:[#allocation5 + $0xc38] sm:$0xff]
    %v496 = vld [vmem:[#allocation5 + $0xc40] sm:$0xff]
    %v497 = vld [vmem:[#allocation5 + $0xc48] sm:$0xff]
    %v498 = vld [vmem:[#allocation5 + $0xc50] sm:$0xff]
    %v499 = vld [vmem:[#allocation5 + $0xc58] sm:$0xff]
    %v500 = vld [vmem:[#allocation5 + $0xc60] sm:$0xff]
    %v501 = vld [vmem:[#allocation5 + $0xc68] sm:$0xff]
    %v502 = vld [vmem:[#allocation5 + $0xc70] sm:$0xff]
    %v503 = vld [vmem:[#allocation5 + $0xc78] sm:$0xff]
    %v504 = vld [vmem:[#allocation5 + $0xc80] sm:$0xff]
    %v505 = vld [vmem:[#allocation5 + $0xc88] sm:$0xff]
    %v506 = vld [vmem:[#allocation5 + $0xc90] sm:$0xff]
    %v507 = vld [vmem:[#allocation5 + $0xc98] sm:$0xff]
    %v508 = vld [vmem:[#allocation5 + $0xca0] sm:$0xff]
    %v509 = vld [vmem:[#allocation5 + $0xca8] sm:$0xff]
    %v510 = vld [vmem:[#allocation5 + $0xcb0] sm:$0xff]
    %v511 = vld [vmem:[#allocation5 + $0xcb8] sm:$0xff]
    %v512 = vld [vmem:[#allocation5 + $0xcc0] sm:$0xff]
    %v513 = vld [vmem:[#allocation5 + $0xcc8] sm:$0xff]
    %v514 = vld [vmem:[#allocation5 + $0xcd0] sm:$0xff]
    %v515 = vld [vmem:[#allocation5 + $0xcd8] sm:$0xff]
    %v516 = vld [vmem:[#allocation5 + $0xce0] sm:$0xff]
    %v517 = vld [vmem:[#allocation5 + $0xce8] sm:$0xff]
    %v518 = vld [vmem:[#allocation5 + $0xcf0] sm:$0xff]
    %v519 = vld [vmem:[#allocation5 + $0xcf8] sm:$0xff]
    %v520 = vld [vmem:[#allocation5 + $0xd00] sm:$0xff]
    %v521 = vld [vmem:[#allocation5 + $0xd08] sm:$0xff]
    %v522 = vld [vmem:[#allocation5 + $0xd10] sm:$0xff]
    %v523 = vld [vmem:[#allocation5 + $0xd18] sm:$0xff]
    %v524 = vld [vmem:[#allocation5 + $0xd20] sm:$0xff]
    %v525 = vld [vmem:[#allocation5 + $0xd28] sm:$0xff]
    %v526 = vld [vmem:[#allocation5 + $0xd30] sm:$0xff]
    %v527 = vld [vmem:[#allocation5 + $0xd38] sm:$0xff]
    %v528 = vld [vmem:[#allocation5 + $0xd40] sm:$0xff]
    %v529 = vld [vmem:[#allocation5 + $0xd48] sm:$0xff]
    %v530 = vld [vmem:[#allocation5 + $0xd50] sm:$0xff]
    %v531 = vld [vmem:[#allocation5 + $0xd58] sm:$0xff]
    %v532 = vld [vmem:[#allocation5 + $0xd60] sm:$0xff]
    %v533 = vld [vmem:[#allocation5 + $0xd68] sm:$0xff]
    %v534 = vld [vmem:[#allocation5 + $0xd70] sm:$0xff]
    %v535 = vld [vmem:[#allocation5 + $0xd78] sm:$0xff]
    %v536 = vld [vmem:[#allocation5 + $0xd80] sm:$0xff]
    %v537 = vld [vmem:[#allocation5 + $0xd88] sm:$0xff]
    %v538 = vld [vmem:[#allocation5 + $0xd90] sm:$0xff]
    %v539 = vld [vmem:[#allocation5 + $0xd98] sm:$0xff]
    %v540 = vld [vmem:[#allocation5 + $0xda0] sm:$0xff]
    %v541 = vld [vmem:[#allocation5 + $0xda8] sm:$0xff]
    %v542 = vld [vmem:[#allocation5 + $0xdb0] sm:$0xff]
    %v543 = vld [vmem:[#allocation5 + $0xdb8] sm:$0xff]
    %v544 = vld [vmem:[#allocation5 + $0xdc0] sm:$0xff]
    %v545 = vld [vmem:[#allocation5 + $0xdc8] sm:$0xff]
    %v546 = vld [vmem:[#allocation5 + $0xdd0] sm:$0xff]
    %v547 = vld [vmem:[#allocation5 + $0xdd8] sm:$0xff]
    %v548 = vld [vmem:[#allocation5 + $0xde0] sm:$0xff]
    %v549 = vld [vmem:[#allocation5 + $0xde8] sm:$0xff]
    %v550 = vld [vmem:[#allocation5 + $0xdf0] sm:$0xff]
    %v551 = vld [vmem:[#allocation5 + $0xdf8] sm:$0xff]
    %v552 = vld [vmem:[#allocation5 + $0xe00] sm:$0xff]
    %v553 = vld [vmem:[#allocation5 + $0xe08] sm:$0xff]
    %v554 = vld [vmem:[#allocation5 + $0xe10] sm:$0xff]
    %v555 = vld [vmem:[#allocation5 + $0xe18] sm:$0xff]
    %v556 = vld [vmem:[#allocation5 + $0xe20] sm:$0xff]
    %v557 = vld [vmem:[#allocation5 + $0xe28] sm:$0xff]
    %v558 = vld [vmem:[#allocation5 + $0xe30] sm:$0xff]
    %v559 = vld [vmem:[#allocation5 + $0xe38] sm:$0xff]
    %v560 = vld [vmem:[#allocation5 + $0xe40] sm:$0xff]
    %v561 = vld [vmem:[#allocation5 + $0xe48] sm:$0xff]
    %v562 = vld [vmem:[#allocation5 + $0xe50] sm:$0xff]
    %v563 = vld [vmem:[#allocation5 + $0xe58] sm:$0xff]
    %v564 = vld [vmem:[#allocation5 + $0xe60] sm:$0xff]
    %v565 = vld [vmem:[#allocation5 + $0xe68] sm:$0xff]
    %v566 = vld [vmem:[#allocation5 + $0xe70] sm:$0xff]
    %v567 = vld [vmem:[#allocation5 + $0xe78] sm:$0xff]
    %v568 = vld [vmem:[#allocation5 + $0xe80] sm:$0xff]
    %v569 = vld [vmem:[#allocation5 + $0xe88] sm:$0xff]
    %v570 = vld [vmem:[#allocation5 + $0xe90] sm:$0xff]
    %v571 = vld [vmem:[#allocation5 + $0xe98] sm:$0xff]
    %v572 = vld [vmem:[#allocation5 + $0xea0] sm:$0xff]
    %v573 = vld [vmem:[#allocation5 + $0xea8] sm:$0xff]
    %v574 = vld [vmem:[#allocation5 + $0xeb0] sm:$0xff]
    %v575 = vld [vmem:[#allocation5 + $0xeb8] sm:$0xff]
    %v576 = vld [vmem:[#allocation5 + $0xec0] sm:$0xff]
    %v577 = vld [vmem:[#allocation5 + $0xec8] sm:$0xff]
    %v578 = vld [vmem:[#allocation5 + $0xed0] sm:$0xff]
    %v579 = vld [vmem:[#allocation5 + $0xed8] sm:$0xff]
    %v580 = vld [vmem:[#allocation5 + $0xee0] sm:$0xff]
    %v581 = vld [vmem:[#allocation5 + $0xee8] sm:$0xff]
    %v582 = vld [vmem:[#allocation5 + $0xef0] sm:$0xff]
    %v583 = vld [vmem:[#allocation5 + $0xef8] sm:$0xff]
    %v584 = vld [vmem:[#allocation5 + $0xf00] sm:$0xff]
    %v585 = vld [vmem:[#allocation5 + $0xf08] sm:$0xff]
    %v586 = vld [vmem:[#allocation5 + $0xf10] sm:$0xff]
    %v587 = vld [vmem:[#allocation5 + $0xf18] sm:$0xff]
    %v588 = vld [vmem:[#allocation5 + $0xf20] sm:$0xff]
    %v589 = vld [vmem:[#allocation5 + $0xf28] sm:$0xff]
    %v590 = vld [vmem:[#allocation5 + $0xf30] sm:$0xff]
    %v591 = vld [vmem:[#allocation5 + $0xf38] sm:$0xff]
    %v592 = vld [vmem:[#allocation5 + $0xf40] sm:$0xff]
    %v593 = vld [vmem:[#allocation5 + $0xf48] sm:$0xff]
    %v594 = vld [vmem:[#allocation5 + $0xf50] sm:$0xff]
    %v595 = vld [vmem:[#allocation5 + $0xf58] sm:$0xff]
    %v596 = vld [vmem:[#allocation5 + $0xf60] sm:$0xff]
    %v597 = vld [vmem:[#allocation5 + $0xf68] sm:$0xff]
    %v598 = vld [vmem:[#allocation5 + $0xf70] sm:$0xff]
    %v599 = vld [vmem:[#allocation5 + $0xf78] sm:$0xff]
    %v600 = vld [vmem:[#allocation5 + $0xf80] sm:$0xff]
    %v601 = vld [vmem:[#allocation5 + $0xf88] sm:$0xff]
    %v602 = vld [vmem:[#allocation5 + $0xf90] sm:$0xff]
    %v603 = vld [vmem:[#allocation5 + $0xf98] sm:$0xff]
    %v604 = vld [vmem:[#allocation5 + $0xfa0] sm:$0xff]
    %v605 = vld [vmem:[#allocation5 + $0xfa8] sm:$0xff]
    %v606 = vld [vmem:[#allocation5 + $0xfb0] sm:$0xff]
    %v607 = vld [vmem:[#allocation5 + $0xfb8] sm:$0xff]
    %v608 = vld [vmem:[#allocation5 + $0xfc0] sm:$0xff]
    %v609 = vld [vmem:[#allocation5 + $0xfc8] sm:$0xff]
    %v610 = vld [vmem:[#allocation5 + $0xfd0] sm:$0xff]
    %v611 = vld [vmem:[#allocation5 + $0xfd8] sm:$0xff]
    %v612 = vld [vmem:[#allocation5 + $0xfe0] sm:$0xff]
    %v613 = vld [vmem:[#allocation5 + $0xfe8] sm:$0xff]
    %v614 = vld [vmem:[#allocation5 + $0xff0] sm:$0xff]
    %v615 = vld [vmem:[#allocation5 + $0xff8] sm:$0xff]
    %v616 = vld [vmem:[#allocation5 + $0x1000] sm:$0xff]
    %v617 = vld [vmem:[#allocation5 + $0x1008] sm:$0xff]
    %v618 = vld [vmem:[#allocation5 + $0x1010] sm:$0xff]
    %v619 = vld [vmem:[#allocation5 + $0x1018] sm:$0xff]
    %v620 = vld [vmem:[#allocation5 + $0x1020] sm:$0xff]
    %v621 = vld [vmem:[#allocation5 + $0x1028] sm:$0xff]
    %v622 = vld [vmem:[#allocation5 + $0x1030] sm:$0xff]
    %v623 = vld [vmem:[#allocation5 + $0x1038] sm:$0xff]
    %v624 = vld [vmem:[#allocation5 + $0x1040] sm:$0xff]
    %v625 = vld [vmem:[#allocation5 + $0x1048] sm:$0xff]
    %v626 = vld [vmem:[#allocation5 + $0x1050] sm:$0xff]
    %v627 = vld [vmem:[#allocation5 + $0x1058] sm:$0xff]
    %v628 = vld [vmem:[#allocation5 + $0x1060] sm:$0xff]
    %v629 = vld [vmem:[#allocation5 + $0x1068] sm:$0xff]
    %v630 = vld [vmem:[#allocation5 + $0x1070] sm:$0xff]
    %v631 = vld [vmem:[#allocation5 + $0x1078] sm:$0xff]
    %v632 = vld [vmem:[#allocation5 + $0x1080] sm:$0xff]
    %v633 = vld [vmem:[#allocation5 + $0x1088] sm:$0xff]
    %v634 = vld [vmem:[#allocation5 + $0x1090] sm:$0xff]
    %v635 = vld [vmem:[#allocation5 + $0x1098] sm:$0xff]
    %v636 = vld [vmem:[#allocation5 + $0x10a0] sm:$0xff]
    %v637 = vld [vmem:[#allocation5 + $0x10a8] sm:$0xff]
    %v638 = vld [vmem:[#allocation5 + $0x10b0] sm:$0xff]
    %v639 = vld [vmem:[#allocation5 + $0x10b8] sm:$0xff]
    %v640 = vld [vmem:[#allocation5 + $0x10c0] sm:$0xff]
    %v641 = vld [vmem:[#allocation5 + $0x10c8] sm:$0xff]
    %v642 = vld [vmem:[#allocation5 + $0x10d0] sm:$0xff]
    %v643 = vld [vmem:[#allocation5 + $0x10d8] sm:$0xff]
    %v644 = vld [vmem:[#allocation5 + $0x10e0] sm:$0xff]
    %v645 = vld [vmem:[#allocation5 + $0x10e8] sm:$0xff]
    %v646 = vld [vmem:[#allocation5 + $0x10f0] sm:$0xff]
    %v647 = vld [vmem:[#allocation5 + $0x10f8] sm:$0xff]
    %v648 = vld [vmem:[#allocation5 + $0x1100] sm:$0xff]
    %v649 = vld [vmem:[#allocation5 + $0x1108] sm:$0xff]
    %v650 = vld [vmem:[#allocation5 + $0x1110] sm:$0xff]
    %v651 = vld [vmem:[#allocation5 + $0x1118] sm:$0xff]
    %v652 = vld [vmem:[#allocation5 + $0x1120] sm:$0xff]
    %v653 = vld [vmem:[#allocation5 + $0x1128] sm:$0xff]
    %v654 = vld [vmem:[#allocation5 + $0x1130] sm:$0xff]
    %v655 = vld [vmem:[#allocation5 + $0x1138] sm:$0xff]
    %v656 = vld [vmem:[#allocation5 + $0x1140] sm:$0xff]
    %v657 = vld [vmem:[#allocation5 + $0x1148] sm:$0xff]
    %v658 = vld [vmem:[#allocation5 + $0x1150] sm:$0xff]
    %v659 = vld [vmem:[#allocation5 + $0x1158] sm:$0xff]
    %v660 = vld [vmem:[#allocation5 + $0x1160] sm:$0xff]
    %v661 = vld [vmem:[#allocation5 + $0x1168] sm:$0xff]
    %v662 = vld [vmem:[#allocation5 + $0x1170] sm:$0xff]
    %v663 = vld [vmem:[#allocation5 + $0x1178] sm:$0xff]
    %v664 = vld [vmem:[#allocation5 + $0x1180] sm:$0xff]
    %v665 = vld [vmem:[#allocation5 + $0x1188] sm:$0xff]
    %v666 = vld [vmem:[#allocation5 + $0x1190] sm:$0xff]
    %v667 = vld [vmem:[#allocation5 + $0x1198] sm:$0xff]
    %v668 = vld [vmem:[#allocation5 + $0x11a0] sm:$0xff]
    %v669 = vld [vmem:[#allocation5 + $0x11a8] sm:$0xff]
    %v670 = vld [vmem:[#allocation5 + $0x11b0] sm:$0xff]
    %v671 = vld [vmem:[#allocation5 + $0x11b8] sm:$0xff]
    %v672 = vld [vmem:[#allocation5 + $0x11c0] sm:$0xff]
    %v673 = vld [vmem:[#allocation5 + $0x11c8] sm:$0xff]
    %v674 = vld [vmem:[#allocation5 + $0x11d0] sm:$0xff]
    %v675 = vld [vmem:[#allocation5 + $0x11d8] sm:$0xff]
    %v676 = vld [vmem:[#allocation5 + $0x11e0] sm:$0xff]
    %v677 = vld [vmem:[#allocation5 + $0x11e8] sm:$0xff]
    %v678 = vld [vmem:[#allocation5 + $0x11f0] sm:$0xff]
    %v679 = vld [vmem:[#allocation5 + $0x11f8] sm:$0xff]
    %v680 = vld [vmem:[#allocation5 + $0x1200] sm:$0xff]
    %v681 = vld [vmem:[#allocation5 + $0x1208] sm:$0xff]
    %v682 = vld [vmem:[#allocation5 + $0x1210] sm:$0xff]
    %v683 = vld [vmem:[#allocation5 + $0x1218] sm:$0xff]
    %v684 = vld [vmem:[#allocation5 + $0x1220] sm:$0xff]
    %v685 = vld [vmem:[#allocation5 + $0x1228] sm:$0xff]
    %v686 = vld [vmem:[#allocation5 + $0x1230] sm:$0xff]
    %v687 = vld [vmem:[#allocation5 + $0x1238] sm:$0xff]
    %v688 = vld [vmem:[#allocation5 + $0x1240] sm:$0xff]
    %v689 = vld [vmem:[#allocation5 + $0x1248] sm:$0xff]
    %v690 = vld [vmem:[#allocation5 + $0x1250] sm:$0xff]
    %v691 = vld [vmem:[#allocation5 + $0x1258] sm:$0xff]
    %v692 = vld [vmem:[#allocation5 + $0x1260] sm:$0xff]
    %v693 = vld [vmem:[#allocation5 + $0x1268] sm:$0xff]
    %v694 = vld [vmem:[#allocation5 + $0x1270] sm:$0xff]
    %v695 = vld [vmem:[#allocation5 + $0x1278] sm:$0xff]
    %v696 = vld [vmem:[#allocation5 + $0x1280] sm:$0xff]
    %v697 = vld [vmem:[#allocation5 + $0x1288] sm:$0xff]
    %v698 = vld [vmem:[#allocation5 + $0x1290] sm:$0xff]
    %v699 = vld [vmem:[#allocation5 + $0x1298] sm:$0xff]
    %v700 = vld [vmem:[#allocation5 + $0x12a0] sm:$0xff]
    %v701 = vld [vmem:[#allocation5 + $0x12a8] sm:$0xff]
    %v702 = vld [vmem:[#allocation5 + $0x12b0] sm:$0xff]
    %v703 = vld [vmem:[#allocation5 + $0x12b8] sm:$0xff]
    %v704 = vld [vmem:[#allocation5 + $0x12c0] sm:$0xff]
    %v705 = vld [vmem:[#allocation5 + $0x12c8] sm:$0xff]
    %v706 = vld [vmem:[#allocation5 + $0x12d0] sm:$0xff]
    %v707 = vld [vmem:[#allocation5 + $0x12d8] sm:$0xff]
    %v708 = vld [vmem:[#allocation5 + $0x12e0] sm:$0xff]
    %v709 = vld [vmem:[#allocation5 + $0x12e8] sm:$0xff]
    %v710 = vld [vmem:[#allocation5 + $0x12f0] sm:$0xff]
    %v711 = vld [vmem:[#allocation5 + $0x12f8] sm:$0xff]
    %v712 = vld [vmem:[#allocation5 + $0x1300] sm:$0xff]
    %v713 = vld [vmem:[#allocation5 + $0x1308] sm:$0xff]
    %v714 = vld [vmem:[#allocation5 + $0x1310] sm:$0xff]
    %v715 = vld [vmem:[#allocation5 + $0x1318] sm:$0xff]
    %v716 = vld [vmem:[#allocation5 + $0x1320] sm:$0xff]
    %v717 = vld [vmem:[#allocation5 + $0x1328] sm:$0xff]
    %v718 = vld [vmem:[#allocation5 + $0x1330] sm:$0xff]
    %v719 = vld [vmem:[#allocation5 + $0x1338] sm:$0xff]
    %v720 = vld [vmem:[#allocation5 + $0x1340] sm:$0xff]
    %v721 = vld [vmem:[#allocation5 + $0x1348] sm:$0xff]
    %v722 = vld [vmem:[#allocation5 + $0x1350] sm:$0xff]
    %v723 = vld [vmem:[#allocation5 + $0x1358] sm:$0xff]
    %v724 = vld [vmem:[#allocation5 + $0x1360] sm:$0xff]
    %v725 = vld [vmem:[#allocation5 + $0x1368] sm:$0xff]
    %v726 = vld [vmem:[#allocation5 + $0x1370] sm:$0xff]
    %v727 = vld [vmem:[#allocation5 + $0x1378] sm:$0xff]
    %v728 = vld [vmem:[#allocation5 + $0x1380] sm:$0xff]
    %v729 = vld [vmem:[#allocation5 + $0x1388] sm:$0xff]
    %v730 = vld [vmem:[#allocation5 + $0x1390] sm:$0xff]
    %v731 = vld [vmem:[#allocation5 + $0x1398] sm:$0xff]
    %v732 = vld [vmem:[#allocation5 + $0x13a0] sm:$0xff]
    %v733 = vld [vmem:[#allocation5 + $0x13a8] sm:$0xff]
    %v734 = vld [vmem:[#allocation5 + $0x13b0] sm:$0xff]
    %v735 = vld [vmem:[#allocation5 + $0x13b8] sm:$0xff]
    %v736 = vld [vmem:[#allocation5 + $0x13c0] sm:$0xff]
    %v737 = vld [vmem:[#allocation5 + $0x13c8] sm:$0xff]
    %v738 = vld [vmem:[#allocation5 + $0x13d0] sm:$0xff]
    %v739 = vld [vmem:[#allocation5 + $0x13d8] sm:$0xff]
    %v740 = vld [vmem:[#allocation5 + $0x13e0] sm:$0xff]
    %v741 = vld [vmem:[#allocation5 + $0x13e8] sm:$0xff]
    %v742 = vld [vmem:[#allocation5 + $0x13f0] sm:$0xff]
    %v743 = vld [vmem:[#allocation5 + $0x13f8] sm:$0xff]
    %v744 = vld [vmem:[#allocation5 + $0x1400] sm:$0xff]
    %v745 = vld [vmem:[#allocation5 + $0x1408] sm:$0xff]
    %v746 = vld [vmem:[#allocation5 + $0x1410] sm:$0xff]
    %v747 = vld [vmem:[#allocation5 + $0x1418] sm:$0xff]
    %v748 = vld [vmem:[#allocation5 + $0x1420] sm:$0xff]
    %v749 = vld [vmem:[#allocation5 + $0x1428] sm:$0xff]
    %v750 = vld [vmem:[#allocation5 + $0x1430] sm:$0xff]
    %v751 = vld [vmem:[#allocation5 + $0x1438] sm:$0xff]
    %v752 = vld [vmem:[#allocation5 + $0x1440] sm:$0xff]
    %v753 = vld [vmem:[#allocation5 + $0x1448] sm:$0xff]
    %v754 = vld [vmem:[#allocation5 + $0x1450] sm:$0xff]
    %v755 = vld [vmem:[#allocation5 + $0x1458] sm:$0xff]
    %v756 = vld [vmem:[#allocation5 + $0x1460] sm:$0xff]
    %v757 = vld [vmem:[#allocation5 + $0x1468] sm:$0xff]
    %v758 = vld [vmem:[#allocation5 + $0x1470] sm:$0xff]
    %v759 = vld [vmem:[#allocation5 + $0x1478] sm:$0xff]
    %v760 = vld [vmem:[#allocation5 + $0x1480] sm:$0xff]
    %v761 = vld [vmem:[#allocation5 + $0x1488] sm:$0xff]
    %v762 = vld [vmem:[#allocation5 + $0x1490] sm:$0xff]
    %v763 = vld [vmem:[#allocation5 + $0x1498] sm:$0xff]
    %v764 = vld [vmem:[#allocation5 + $0x14a0] sm:$0xff]
    %v765 = vld [vmem:[#allocation5 + $0x14a8] sm:$0xff]
    %v766 = vld [vmem:[#allocation5 + $0x14b0] sm:$0xff]
    %v767 = vld [vmem:[#allocation5 + $0x14b8] sm:$0xff]
    %v768 = vld [vmem:[#allocation5 + $0x14c0] sm:$0xff]
    %v769 = vld [vmem:[#allocation5 + $0x14c8] sm:$0xff]
    %v770 = vld [vmem:[#allocation5 + $0x14d0] sm:$0xff]
    %v771 = vld [vmem:[#allocation5 + $0x14d8] sm:$0xff]
    %v772 = vld [vmem:[#allocation5 + $0x14e0] sm:$0xff]
    %v773 = vld [vmem:[#allocation5 + $0x14e8] sm:$0xff]
    %v774 = vld [vmem:[#allocation5 + $0x14f0] sm:$0xff]
    %v775 = vld [vmem:[#allocation5 + $0x14f8] sm:$0xff]
    %v776 = vld [vmem:[#allocation5 + $0x1500] sm:$0xff]
    %v777 = vld [vmem:[#allocation5 + $0x1508] sm:$0xff]
    %v778 = vld [vmem:[#allocation5 + $0x1510] sm:$0xff]
    %v779 = vld [vmem:[#allocation5 + $0x1518] sm:$0xff]
    %v780 = vld [vmem:[#allocation5 + $0x1520] sm:$0xff]
    %v781 = vld [vmem:[#allocation5 + $0x1528] sm:$0xff]
    %v782 = vld [vmem:[#allocation5 + $0x1530] sm:$0xff]
    %v783 = vld [vmem:[#allocation5 + $0x1538] sm:$0xff]
    %v784 = vld [vmem:[#allocation5 + $0x1540] sm:$0xff]
    %v785 = vld [vmem:[#allocation5 + $0x1548] sm:$0xff]
    %v786 = vld [vmem:[#allocation5 + $0x1550] sm:$0xff]
    %v787 = vld [vmem:[#allocation5 + $0x1558] sm:$0xff]
    %v788 = vld [vmem:[#allocation5 + $0x1560] sm:$0xff]
    %v789 = vld [vmem:[#allocation5 + $0x1568] sm:$0xff]
    %v790 = vld [vmem:[#allocation5 + $0x1570] sm:$0xff]
    %v791 = vld [vmem:[#allocation5 + $0x1578] sm:$0xff]
    %v792 = vld [vmem:[#allocation5 + $0x1580] sm:$0xff]
    %v793 = vld [vmem:[#allocation5 + $0x1588] sm:$0xff]
    %v794 = vld [vmem:[#allocation5 + $0x1590] sm:$0xff]
    %v795 = vld [vmem:[#allocation5 + $0x1598] sm:$0xff]
    %v796 = vld [vmem:[#allocation5 + $0x15a0] sm:$0xff]
    %v797 = vld [vmem:[#allocation5 + $0x15a8] sm:$0xff]
    %v798 = vld [vmem:[#allocation5 + $0x15b0] sm:$0xff]
    %v799 = vld [vmem:[#allocation5 + $0x15b8] sm:$0xff]
    %v800 = vld [vmem:[#allocation5 + $0x15c0] sm:$0xff]
    %v801 = vld [vmem:[#allocation5 + $0x15c8] sm:$0xff]
    %v802 = vld [vmem:[#allocation5 + $0x15d0] sm:$0xff]
    %v803 = vld [vmem:[#allocation5 + $0x15d8] sm:$0xff]
    %v804 = vld [vmem:[#allocation5 + $0x15e0] sm:$0xff]
    %v805 = vld [vmem:[#allocation5 + $0x15e8] sm:$0xff]
    %v806 = vld [vmem:[#allocation5 + $0x15f0] sm:$0xff]
    %v807 = vld [vmem:[#allocation5 + $0x15f8] sm:$0xff]
    %v808 = vld [vmem:[#allocation5 + $0x1600] sm:$0xff]
    %v809 = vld [vmem:[#allocation5 + $0x1608] sm:$0xff]
    %v810 = vld [vmem:[#allocation5 + $0x1610] sm:$0xff]
    %v811 = vld [vmem:[#allocation5 + $0x1618] sm:$0xff]
    %v812 = vld [vmem:[#allocation5 + $0x1620] sm:$0xff]
    %v813 = vld [vmem:[#allocation5 + $0x1628] sm:$0xff]
    %v814 = vld [vmem:[#allocation5 + $0x1630] sm:$0xff]
    %v815 = vld [vmem:[#allocation5 + $0x1638] sm:$0xff]
    %v816 = vld [vmem:[#allocation5 + $0x1640] sm:$0xff]
    %v817 = vld [vmem:[#allocation5 + $0x1648] sm:$0xff]
    %v818 = vld [vmem:[#allocation5 + $0x1650] sm:$0xff]
    %v819 = vld [vmem:[#allocation5 + $0x1658] sm:$0xff]
    %v820 = vld [vmem:[#allocation5 + $0x1660] sm:$0xff]
    %v821 = vld [vmem:[#allocation5 + $0x1668] sm:$0xff]
    %v822 = vld [vmem:[#allocation5 + $0x1670] sm:$0xff]
    %v823 = vld [vmem:[#allocation5 + $0x1678] sm:$0xff]
    %v824 = vld [vmem:[#allocation5 + $0x1680] sm:$0xff]
    %v825 = vld [vmem:[#allocation5 + $0x1688] sm:$0xff]
    %v826 = vld [vmem:[#allocation5 + $0x1690] sm:$0xff]
    %v827 = vld [vmem:[#allocation5 + $0x1698] sm:$0xff]
    %v828 = vld [vmem:[#allocation5 + $0x16a0] sm:$0xff]
    %v829 = vld [vmem:[#allocation5 + $0x16a8] sm:$0xff]
    %v830 = vld [vmem:[#allocation5 + $0x16b0] sm:$0xff]
    %v831 = vld [vmem:[#allocation5 + $0x16b8] sm:$0xff]
    %v832 = vld [vmem:[#allocation5 + $0x16c0] sm:$0xff]
    %v833 = vld [vmem:[#allocation5 + $0x16c8] sm:$0xff]
    %v834 = vld [vmem:[#allocation5 + $0x16d0] sm:$0xff]
    %v835 = vld [vmem:[#allocation5 + $0x16d8] sm:$0xff]
    %v836 = vld [vmem:[#allocation5 + $0x16e0] sm:$0xff]
    %v837 = vld [vmem:[#allocation5 + $0x16e8] sm:$0xff]
    %v838 = vld [vmem:[#allocation5 + $0x16f0] sm:$0xff]
    %v839 = vld [vmem:[#allocation5 + $0x16f8] sm:$0xff]
    %v840 = vld [vmem:[#allocation5 + $0x1700] sm:$0xff]
    %v841 = vld [vmem:[#allocation5 + $0x1708] sm:$0xff]
    %v842 = vld [vmem:[#allocation5 + $0x1710] sm:$0xff]
    %v843 = vld [vmem:[#allocation5 + $0x1718] sm:$0xff]
    %v844 = vld [vmem:[#allocation5 + $0x1720] sm:$0xff]
    %v845 = vld [vmem:[#allocation5 + $0x1728] sm:$0xff]
    %v846 = vld [vmem:[#allocation5 + $0x1730] sm:$0xff]
    %v847 = vld [vmem:[#allocation5 + $0x1738] sm:$0xff]
    %v848 = vld [vmem:[#allocation5 + $0x1740] sm:$0xff]
    %v849 = vld [vmem:[#allocation5 + $0x1748] sm:$0xff]
    %v850 = vld [vmem:[#allocation5 + $0x1750] sm:$0xff]
    %v851 = vld [vmem:[#allocation5 + $0x1758] sm:$0xff]
    %v852 = vld [vmem:[#allocation5 + $0x1760] sm:$0xff]
    %v853 = vld [vmem:[#allocation5 + $0x1768] sm:$0xff]
    %v854 = vld [vmem:[#allocation5 + $0x1770] sm:$0xff]
    %v855 = vld [vmem:[#allocation5 + $0x1778] sm:$0xff]
    %v856 = vld [vmem:[#allocation5 + $0x1780] sm:$0xff]
    %v857 = vld [vmem:[#allocation5 + $0x1788] sm:$0xff]
    %v858 = vld [vmem:[#allocation5 + $0x1790] sm:$0xff]
    %v859 = vld [vmem:[#allocation5 + $0x1798] sm:$0xff]
    %v860 = vld [vmem:[#allocation5 + $0x17a0] sm:$0xff]
    %v861 = vld [vmem:[#allocation5 + $0x17a8] sm:$0xff]
    %v862 = vld [vmem:[#allocation5 + $0x17b0] sm:$0xff]
    %v863 = vld [vmem:[#allocation5 + $0x17b8] sm:$0xff]
    %v864 = vld [vmem:[#allocation5 + $0x17c0] sm:$0xff]
    %v865 = vld [vmem:[#allocation5 + $0x17c8] sm:$0xff]
    %v866 = vld [vmem:[#allocation5 + $0x17d0] sm:$0xff]
    %v867 = vld [vmem:[#allocation5 + $0x17d8] sm:$0xff]
    %v868 = vld [vmem:[#allocation5 + $0x17e0] sm:$0xff]
    %v869 = vld [vmem:[#allocation5 + $0x17e8] sm:$0xff]
    %v870 = vld [vmem:[#allocation5 + $0x17f0] sm:$0xff]
    %v871 = vld [vmem:[#allocation5 + $0x17f8] sm:$0xff]
    %v872 = vld [vmem:[#allocation5 + $0x1800] sm:$0xff]
    %v873 = vld [vmem:[#allocation5 + $0x1808] sm:$0xff]
    %v874 = vld [vmem:[#allocation5 + $0x1810] sm:$0xff]
    %v875 = vld [vmem:[#allocation5 + $0x1818] sm:$0xff]
    %v876 = vld [vmem:[#allocation5 + $0x1820] sm:$0xff]
    %v877 = vld [vmem:[#allocation5 + $0x1828] sm:$0xff]
    %v878 = vld [vmem:[#allocation5 + $0x1830] sm:$0xff]
    %v879 = vld [vmem:[#allocation5 + $0x1838] sm:$0xff]
    %v880 = vld [vmem:[#allocation5 + $0x1840] sm:$0xff]
    %v881 = vld [vmem:[#allocation5 + $0x1848] sm:$0xff]
    %v882 = vld [vmem:[#allocation5 + $0x1850] sm:$0xff]
    %v883 = vld [vmem:[#allocation5 + $0x1858] sm:$0xff]
    %v884 = vld [vmem:[#allocation5 + $0x1860] sm:$0xff]
    %v885 = vld [vmem:[#allocation5 + $0x1868] sm:$0xff]
    %v886 = vld [vmem:[#allocation5 + $0x1870] sm:$0xff]
    %v887 = vld [vmem:[#allocation5 + $0x1878] sm:$0xff]
    %v888 = vld [vmem:[#allocation7] sm:$0xff]
    %v889 = vld [vmem:[#allocation7 + $0x8] sm:$0xff]
    %v892 = vperm.slane %v888, 0
    %v893 = vperm.slane %v888, 1
    %v894 = vperm.slane %v888, 2
    %v895 = vperm.slane %v888, 3
    %v896 = vperm.slane %v888, 4
    %v897 = vperm.slane %v888, 5
    %v898 = vperm.slane %v888, 6
    %v899 = vperm.slane %v888, 7
    %v900 = vperm.slane %v889, 0
    %v901 = vperm.slane %v889, 1
    %v902 = vperm.slane %v889, 2
    %v903 = vperm.slane %v889, 3
    %v904 = vperm.slane %v889, 4
    %v905 = vperm.slane %v889, 5
    %v906 = vperm.slane %v889, 6
    %v907 = vperm.slane %v889, 7
    %v932 = vunpack.c.l.b16 %v96
    %v933 = vunpack.c.h.b16 %v96
    %v934 = vunpack.c.l.b16 %v97
    %v935 = vunpack.c.h.b16 %v97
    %v936 = vunpack.c.l.b16 %v98
    %v937 = vunpack.c.h.b16 %v98
    %v938 = vunpack.c.l.b16 %v99
    %v939 = vunpack.c.l.b16 %v100
    %v940 = vunpack.c.h.b16 %v100
    %v941 = vunpack.c.l.b16 %v101
    %v942 = vunpack.c.h.b16 %v101
    %v943 = vunpack.c.l.b16 %v102
    %v944 = vunpack.c.h.b16 %v102
    %v945 = vunpack.c.l.b16 %v103
    %v946 = vpack.c.b16 %v939, %v932
    %v947 = vpack.c.b16 %v940, %v933
    %v948 = vpack.c.b16 %v941, %v934
    %v949 = vpack.c.b16 %v942, %v935
    %v950 = vpack.c.b16 %v943, %v936
    %v951 = vpack.c.b16 %v944, %v937
    %v952 = vpack.c.b16 %v945, %v938
    %v1743 = vunpack.c.l.b16 %v104
    %v1744 = vunpack.c.h.b16 %v104
    %v1745 = vunpack.c.l.b16 %v105
    %v1746 = vunpack.c.h.b16 %v105
    %v1747 = vunpack.c.l.b16 %v106
    %v1748 = vunpack.c.h.b16 %v106
    %v1749 = vunpack.c.l.b16 %v107
    %v1750 = vunpack.c.h.b16 %v107
    %v1751 = vunpack.c.l.b16 %v108
    %v1752 = vunpack.c.h.b16 %v108
    %v1753 = vunpack.c.l.b16 %v109
    %v1754 = vunpack.c.h.b16 %v109
    %v1755 = vunpack.c.l.b16 %v110
    %v1756 = vunpack.c.h.b16 %v110
    %v1757 = vunpack.c.l.b16 %v111
    %v1758 = vunpack.c.h.b16 %v111
    %v1759 = vunpack.c.l.b16 %v112
    %v1760 = vunpack.c.h.b16 %v112
    %v1761 = vunpack.c.l.b16 %v113
    %v1762 = vunpack.c.h.b16 %v113
    %v1763 = vunpack.c.l.b16 %v114
    %v1764 = vunpack.c.h.b16 %v114
    %v1765 = vunpack.c.l.b16 %v115
    %v1766 = vunpack.c.h.b16 %v115
    %v1767 = vunpack.c.l.b16 %v116
    %v1768 = vunpack.c.h.b16 %v116
    %v1769 = vunpack.c.l.b16 %v117
    %v1770 = vunpack.c.h.b16 %v117
    %v1771 = vunpack.c.l.b16 %v118
    %v1772 = vunpack.c.h.b16 %v118
    %v1773 = vunpack.c.l.b16 %v119
    %v1774 = vunpack.c.h.b16 %v119
    %v1775 = vunpack.c.l.b16 %v120
    %v1776 = vunpack.c.h.b16 %v120
    %v1777 = vunpack.c.l.b16 %v121
    %v1778 = vunpack.c.h.b16 %v121
    %v1779 = vunpack.c.l.b16 %v122
    %v1780 = vunpack.c.h.b16 %v122
    %v1781 = vunpack.c.l.b16 %v123
    %v1782 = vunpack.c.h.b16 %v123
    %v1783 = vunpack.c.l.b16 %v124
    %v1784 = vunpack.c.h.b16 %v124
    %v1785 = vunpack.c.l.b16 %v125
    %v1786 = vunpack.c.h.b16 %v125
    %v1787 = vunpack.c.l.b16 %v126
    %v1788 = vunpack.c.h.b16 %v126
    %v1789 = vunpack.c.l.b16 %v127
    %v1790 = vunpack.c.h.b16 %v127
    %v1791 = vunpack.c.l.b16 %v128
    %v1792 = vunpack.c.h.b16 %v128
    %v1793 = vunpack.c.l.b16 %v129
    %v1794 = vunpack.c.h.b16 %v129
    %v1795 = vunpack.c.l.b16 %v130
    %v1796 = vunpack.c.h.b16 %v130
    %v1797 = vunpack.c.l.b16 %v131
    %v1798 = vunpack.c.h.b16 %v131
    %v1799 = vunpack.c.l.b16 %v132
    %v1800 = vunpack.c.h.b16 %v132
    %v1801 = vunpack.c.l.b16 %v133
    %v1802 = vunpack.c.h.b16 %v133
    %v1803 = vunpack.c.l.b16 %v134
    %v1804 = vunpack.c.h.b16 %v134
    %v1805 = vunpack.c.l.b16 %v135
    %v1806 = vunpack.c.h.b16 %v135
    %v1807 = vunpack.c.l.b16 %v136
    %v1808 = vunpack.c.h.b16 %v136
    %v1809 = vunpack.c.l.b16 %v137
    %v1810 = vunpack.c.h.b16 %v137
    %v1811 = vunpack.c.l.b16 %v138
    %v1812 = vunpack.c.h.b16 %v138
    %v1813 = vunpack.c.l.b16 %v139
    %v1814 = vunpack.c.h.b16 %v139
    %v1815 = vunpack.c.l.b16 %v140
    %v1816 = vunpack.c.h.b16 %v140
    %v1817 = vunpack.c.l.b16 %v141
    %v1818 = vunpack.c.h.b16 %v141
    %v1819 = vunpack.c.l.b16 %v142
    %v1820 = vunpack.c.h.b16 %v142
    %v1821 = vunpack.c.l.b16 %v143
    %v1822 = vunpack.c.h.b16 %v143
    %v1823 = vunpack.c.l.b16 %v144
    %v1824 = vunpack.c.h.b16 %v144
    %v1825 = vunpack.c.l.b16 %v145
    %v1826 = vunpack.c.h.b16 %v145
    %v1827 = vunpack.c.l.b16 %v146
    %v1828 = vunpack.c.h.b16 %v146
    %v1829 = vunpack.c.l.b16 %v147
    %v1830 = vunpack.c.h.b16 %v147
    %v1831 = vunpack.c.l.b16 %v148
    %v1832 = vunpack.c.h.b16 %v148
    %v1833 = vunpack.c.l.b16 %v149
    %v1834 = vunpack.c.h.b16 %v149
    %v1835 = vunpack.c.l.b16 %v150
    %v1836 = vunpack.c.h.b16 %v150
    %v1837 = vunpack.c.l.b16 %v151
    %v1838 = vunpack.c.h.b16 %v151
    %v1839 = vunpack.c.l.b16 %v152
    %v1840 = vunpack.c.h.b16 %v152
    %v1841 = vunpack.c.l.b16 %v153
    %v1842 = vunpack.c.h.b16 %v153
    %v1843 = vunpack.c.l.b16 %v154
    %v1844 = vunpack.c.h.b16 %v154
    %v1845 = vunpack.c.l.b16 %v155
    %v1846 = vunpack.c.h.b16 %v155
    %v1847 = vunpack.c.l.b16 %v156
    %v1848 = vunpack.c.h.b16 %v156
    %v1849 = vunpack.c.l.b16 %v157
    %v1850 = vunpack.c.h.b16 %v157
    %v1851 = vunpack.c.l.b16 %v158
    %v1852 = vunpack.c.h.b16 %v158
    %v1853 = vunpack.c.l.b16 %v159
    %v1854 = vunpack.c.h.b16 %v159
    %v1855 = vunpack.c.l.b16 %v160
    %v1856 = vunpack.c.h.b16 %v160
    %v1857 = vunpack.c.l.b16 %v161
    %v1858 = vunpack.c.h.b16 %v161
    %v1859 = vunpack.c.l.b16 %v162
    %v1860 = vunpack.c.h.b16 %v162
    %v1861 = vunpack.c.l.b16 %v163
    %v1862 = vunpack.c.h.b16 %v163
    %v1863 = vunpack.c.l.b16 %v164
    %v1864 = vunpack.c.h.b16 %v164
    %v1865 = vunpack.c.l.b16 %v165
    %v1866 = vunpack.c.h.b16 %v165
    %v1867 = vunpack.c.l.b16 %v166
    %v1868 = vunpack.c.h.b16 %v166
    %v1869 = vunpack.c.l.b16 %v167
    %v1870 = vunpack.c.h.b16 %v167
    %v1871 = vunpack.c.l.b16 %v168
    %v1872 = vunpack.c.h.b16 %v168
    %v1873 = vunpack.c.l.b16 %v169
    %v1874 = vunpack.c.h.b16 %v169
    %v1875 = vunpack.c.l.b16 %v170
    %v1876 = vunpack.c.h.b16 %v170
    %v1877 = vunpack.c.l.b16 %v171
    %v1878 = vunpack.c.h.b16 %v171
    %v1879 = vunpack.c.l.b16 %v172
    %v1880 = vunpack.c.h.b16 %v172
    %v1881 = vunpack.c.l.b16 %v173
    %v1882 = vunpack.c.h.b16 %v173
    %v1883 = vunpack.c.l.b16 %v174
    %v1884 = vunpack.c.h.b16 %v174
    %v1885 = vunpack.c.l.b16 %v175
    %v1886 = vunpack.c.h.b16 %v175
    %v1887 = vunpack.c.l.b16 %v176
    %v1888 = vunpack.c.h.b16 %v176
    %v1889 = vunpack.c.l.b16 %v177
    %v1890 = vunpack.c.h.b16 %v177
    %v1891 = vunpack.c.l.b16 %v178
    %v1892 = vunpack.c.h.b16 %v178
    %v1893 = vunpack.c.l.b16 %v179
    %v1894 = vunpack.c.h.b16 %v179
    %v1895 = vunpack.c.l.b16 %v180
    %v1896 = vunpack.c.h.b16 %v180
    %v1897 = vunpack.c.l.b16 %v181
    %v1898 = vunpack.c.h.b16 %v181
    %v1899 = vunpack.c.l.b16 %v182
    %v1900 = vunpack.c.h.b16 %v182
    %v1901 = vunpack.c.l.b16 %v183
    %v1902 = vunpack.c.h.b16 %v183
    %v1903 = vunpack.c.l.b16 %v184
    %v1904 = vunpack.c.h.b16 %v184
    %v1905 = vunpack.c.l.b16 %v185
    %v1906 = vunpack.c.h.b16 %v185
    %v1907 = vunpack.c.l.b16 %v186
    %v1908 = vunpack.c.h.b16 %v186
    %v1909 = vunpack.c.l.b16 %v187
    %v1910 = vunpack.c.h.b16 %v187
    %v1911 = vunpack.c.l.b16 %v188
    %v1912 = vunpack.c.h.b16 %v188
    %v1913 = vunpack.c.l.b16 %v189
    %v1914 = vunpack.c.h.b16 %v189
    %v1915 = vunpack.c.l.b16 %v190
    %v1916 = vunpack.c.h.b16 %v190
    %v1917 = vunpack.c.l.b16 %v191
    %v1918 = vunpack.c.h.b16 %v191
    %v1919 = vunpack.c.l.b16 %v192
    %v1920 = vunpack.c.h.b16 %v192
    %v1921 = vunpack.c.l.b16 %v193
    %v1922 = vunpack.c.h.b16 %v193
    %v1923 = vunpack.c.l.b16 %v194
    %v1924 = vunpack.c.h.b16 %v194
    %v1925 = vunpack.c.l.b16 %v195
    %v1926 = vunpack.c.h.b16 %v195
    %v1927 = vunpack.c.l.b16 %v196
    %v1928 = vunpack.c.h.b16 %v196
    %v1929 = vunpack.c.l.b16 %v197
    %v1930 = vunpack.c.h.b16 %v197
    %v1931 = vunpack.c.l.b16 %v198
    %v1932 = vunpack.c.h.b16 %v198
    %v1933 = vunpack.c.l.b16 %v199
    %v1934 = vunpack.c.h.b16 %v199
    %v1935 = vunpack.c.l.b16 %v200
    %v1936 = vunpack.c.h.b16 %v200
    %v1937 = vunpack.c.l.b16 %v201
    %v1938 = vunpack.c.h.b16 %v201
    %v1939 = vunpack.c.l.b16 %v202
    %v1940 = vunpack.c.h.b16 %v202
    %v1941 = vunpack.c.l.b16 %v203
    %v1942 = vunpack.c.h.b16 %v203
    %v1943 = vunpack.c.l.b16 %v204
    %v1944 = vunpack.c.h.b16 %v204
    %v1945 = vunpack.c.l.b16 %v205
    %v1946 = vunpack.c.h.b16 %v205
    %v1947 = vunpack.c.l.b16 %v206
    %v1948 = vunpack.c.h.b16 %v206
    %v1949 = vunpack.c.l.b16 %v207
    %v1950 = vunpack.c.h.b16 %v207
    %v1951 = vunpack.c.l.b16 %v208
    %v1952 = vunpack.c.h.b16 %v208
    %v1953 = vunpack.c.l.b16 %v209
    %v1954 = vunpack.c.h.b16 %v209
    %v1955 = vunpack.c.l.b16 %v210
    %v1956 = vunpack.c.h.b16 %v210
    %v1957 = vunpack.c.l.b16 %v211
    %v1958 = vunpack.c.h.b16 %v211
    %v1959 = vunpack.c.l.b16 %v212
    %v1960 = vunpack.c.h.b16 %v212
    %v1961 = vunpack.c.l.b16 %v213
    %v1962 = vunpack.c.h.b16 %v213
    %v1963 = vunpack.c.l.b16 %v214
    %v1964 = vunpack.c.h.b16 %v214
    %v1965 = vunpack.c.l.b16 %v215
    %v1966 = vunpack.c.h.b16 %v215
    %v1967 = vunpack.c.l.b16 %v216
    %v1968 = vunpack.c.h.b16 %v216
    %v1969 = vunpack.c.l.b16 %v217
    %v1970 = vunpack.c.h.b16 %v217
    %v1971 = vunpack.c.l.b16 %v218
    %v1972 = vunpack.c.h.b16 %v218
    %v1973 = vunpack.c.l.b16 %v219
    %v1974 = vunpack.c.h.b16 %v219
    %v1975 = vunpack.c.l.b16 %v220
    %v1976 = vunpack.c.h.b16 %v220
    %v1977 = vunpack.c.l.b16 %v221
    %v1978 = vunpack.c.h.b16 %v221
    %v1979 = vunpack.c.l.b16 %v222
    %v1980 = vunpack.c.h.b16 %v222
    %v1981 = vunpack.c.l.b16 %v223
    %v1982 = vunpack.c.h.b16 %v223
    %v1983 = vunpack.c.l.b16 %v224
    %v1984 = vunpack.c.h.b16 %v224
    %v1985 = vunpack.c.l.b16 %v225
    %v1986 = vunpack.c.h.b16 %v225
    %v1987 = vunpack.c.l.b16 %v226
    %v1988 = vunpack.c.h.b16 %v226
    %v1989 = vunpack.c.l.b16 %v227
    %v1990 = vunpack.c.h.b16 %v227
    %v1991 = vunpack.c.l.b16 %v228
    %v1992 = vunpack.c.h.b16 %v228
    %v1993 = vunpack.c.l.b16 %v229
    %v1994 = vunpack.c.h.b16 %v229
    %v1995 = vunpack.c.l.b16 %v230
    %v1996 = vunpack.c.h.b16 %v230
    %v1997 = vunpack.c.l.b16 %v231
    %v1998 = vunpack.c.h.b16 %v231
    %v1999 = vunpack.c.l.b16 %v232
    %v2000 = vunpack.c.h.b16 %v232
    %v2001 = vunpack.c.l.b16 %v233
    %v2002 = vunpack.c.h.b16 %v233
    %v2003 = vunpack.c.l.b16 %v234
    %v2004 = vunpack.c.h.b16 %v234
    %v2005 = vunpack.c.l.b16 %v235
    %v2006 = vunpack.c.h.b16 %v235
    %v2007 = vunpack.c.l.b16 %v236
    %v2008 = vunpack.c.h.b16 %v236
    %v2009 = vunpack.c.l.b16 %v237
    %v2010 = vunpack.c.h.b16 %v237
    %v2011 = vunpack.c.l.b16 %v238
    %v2012 = vunpack.c.h.b16 %v238
    %v2013 = vunpack.c.l.b16 %v239
    %v2014 = vunpack.c.h.b16 %v239
    %v2015 = vunpack.c.l.b16 %v240
    %v2016 = vunpack.c.h.b16 %v240
    %v2017 = vunpack.c.l.b16 %v241
    %v2018 = vunpack.c.h.b16 %v241
    %v2019 = vunpack.c.l.b16 %v242
    %v2020 = vunpack.c.h.b16 %v242
    %v2021 = vunpack.c.l.b16 %v243
    %v2022 = vunpack.c.h.b16 %v243
    %v2023 = vunpack.c.l.b16 %v244
    %v2024 = vunpack.c.h.b16 %v244
    %v2025 = vunpack.c.l.b16 %v245
    %v2026 = vunpack.c.h.b16 %v245
    %v2027 = vunpack.c.l.b16 %v246
    %v2028 = vunpack.c.h.b16 %v246
    %v2029 = vunpack.c.l.b16 %v247
    %v2030 = vunpack.c.h.b16 %v247
    %v2031 = vunpack.c.l.b16 %v248
    %v2032 = vunpack.c.h.b16 %v248
    %v2033 = vunpack.c.l.b16 %v249
    %v2034 = vunpack.c.h.b16 %v249
    %v2035 = vunpack.c.l.b16 %v250
    %v2036 = vunpack.c.h.b16 %v250
    %v2037 = vunpack.c.l.b16 %v251
    %v2038 = vunpack.c.h.b16 %v251
    %v2039 = vunpack.c.l.b16 %v252
    %v2040 = vunpack.c.h.b16 %v252
    %v2041 = vunpack.c.l.b16 %v253
    %v2042 = vunpack.c.h.b16 %v253
    %v2043 = vunpack.c.l.b16 %v254
    %v2044 = vunpack.c.h.b16 %v254
    %v2045 = vunpack.c.l.b16 %v255
    %v2046 = vunpack.c.h.b16 %v255
    %v2047 = vunpack.c.l.b16 %v256
    %v2048 = vunpack.c.h.b16 %v256
    %v2049 = vunpack.c.l.b16 %v257
    %v2050 = vunpack.c.h.b16 %v257
    %v2051 = vunpack.c.l.b16 %v258
    %v2052 = vunpack.c.h.b16 %v258
    %v2053 = vunpack.c.l.b16 %v259
    %v2054 = vunpack.c.h.b16 %v259
    %v2055 = vunpack.c.l.b16 %v260
    %v2056 = vunpack.c.h.b16 %v260
    %v2057 = vunpack.c.l.b16 %v261
    %v2058 = vunpack.c.h.b16 %v261
    %v2059 = vunpack.c.l.b16 %v262
    %v2060 = vunpack.c.h.b16 %v262
    %v2061 = vunpack.c.l.b16 %v263
    %v2062 = vunpack.c.h.b16 %v263
    %v2063 = vunpack.c.l.b16 %v264
    %v2064 = vunpack.c.h.b16 %v264
    %v2065 = vunpack.c.l.b16 %v265
    %v2066 = vunpack.c.h.b16 %v265
    %v2067 = vunpack.c.l.b16 %v266
    %v2068 = vunpack.c.h.b16 %v266
    %v2069 = vunpack.c.l.b16 %v267
    %v2070 = vunpack.c.h.b16 %v267
    %v2071 = vunpack.c.l.b16 %v268
    %v2072 = vunpack.c.h.b16 %v268
    %v2073 = vunpack.c.l.b16 %v269
    %v2074 = vunpack.c.h.b16 %v269
    %v2075 = vunpack.c.l.b16 %v270
    %v2076 = vunpack.c.h.b16 %v270
    %v2077 = vunpack.c.l.b16 %v271
    %v2078 = vunpack.c.h.b16 %v271
    %v2079 = vunpack.c.l.b16 %v272
    %v2080 = vunpack.c.h.b16 %v272
    %v2081 = vunpack.c.l.b16 %v273
    %v2082 = vunpack.c.h.b16 %v273
    %v2083 = vunpack.c.l.b16 %v274
    %v2084 = vunpack.c.h.b16 %v274
    %v2085 = vunpack.c.l.b16 %v275
    %v2086 = vunpack.c.h.b16 %v275
    %v2087 = vunpack.c.l.b16 %v276
    %v2088 = vunpack.c.h.b16 %v276
    %v2089 = vunpack.c.l.b16 %v277
    %v2090 = vunpack.c.h.b16 %v277
    %v2091 = vunpack.c.l.b16 %v278
    %v2092 = vunpack.c.h.b16 %v278
    %v2093 = vunpack.c.l.b16 %v279
    %v2094 = vunpack.c.h.b16 %v279
    %v2095 = vunpack.c.l.b16 %v280
    %v2096 = vunpack.c.h.b16 %v280
    %v2097 = vunpack.c.l.b16 %v281
    %v2098 = vunpack.c.h.b16 %v281
    %v2099 = vunpack.c.l.b16 %v282
    %v2100 = vunpack.c.h.b16 %v282
    %v2101 = vunpack.c.l.b16 %v283
    %v2102 = vunpack.c.h.b16 %v283
    %v2103 = vunpack.c.l.b16 %v284
    %v2104 = vunpack.c.h.b16 %v284
    %v2105 = vunpack.c.l.b16 %v285
    %v2106 = vunpack.c.h.b16 %v285
    %v2107 = vunpack.c.l.b16 %v286
    %v2108 = vunpack.c.h.b16 %v286
    %v2109 = vunpack.c.l.b16 %v287
    %v2110 = vunpack.c.h.b16 %v287
    %v2111 = vunpack.c.l.b16 %v288
    %v2112 = vunpack.c.h.b16 %v288
    %v2113 = vunpack.c.l.b16 %v289
    %v2114 = vunpack.c.h.b16 %v289
    %v2115 = vunpack.c.l.b16 %v290
    %v2116 = vunpack.c.h.b16 %v290
    %v2117 = vunpack.c.l.b16 %v291
    %v2118 = vunpack.c.h.b16 %v291
    %v2119 = vunpack.c.l.b16 %v292
    %v2120 = vunpack.c.h.b16 %v292
    %v2121 = vunpack.c.l.b16 %v293
    %v2122 = vunpack.c.h.b16 %v293
    %v2123 = vunpack.c.l.b16 %v294
    %v2124 = vunpack.c.h.b16 %v294
    %v2125 = vunpack.c.l.b16 %v295
    %v2126 = vunpack.c.h.b16 %v295
    %v2127 = vunpack.c.l.b16 %v296
    %v2128 = vunpack.c.h.b16 %v296
    %v2129 = vunpack.c.l.b16 %v297
    %v2130 = vunpack.c.h.b16 %v297
    %v2131 = vunpack.c.l.b16 %v298
    %v2132 = vunpack.c.h.b16 %v298
    %v2133 = vunpack.c.l.b16 %v299
    %v2134 = vunpack.c.h.b16 %v299
    %v2135 = vunpack.c.l.b16 %v300
    %v2136 = vunpack.c.h.b16 %v300
    %v2137 = vunpack.c.l.b16 %v301
    %v2138 = vunpack.c.h.b16 %v301
    %v2139 = vunpack.c.l.b16 %v302
    %v2140 = vunpack.c.h.b16 %v302
    %v2141 = vunpack.c.l.b16 %v303
    %v2142 = vunpack.c.h.b16 %v303
    %v2143 = vunpack.c.l.b16 %v304
    %v2144 = vunpack.c.h.b16 %v304
    %v2145 = vunpack.c.l.b16 %v305
    %v2146 = vunpack.c.h.b16 %v305
    %v2147 = vunpack.c.l.b16 %v306
    %v2148 = vunpack.c.h.b16 %v306
    %v2149 = vunpack.c.l.b16 %v307
    %v2150 = vunpack.c.h.b16 %v307
    %v2151 = vunpack.c.l.b16 %v308
    %v2152 = vunpack.c.h.b16 %v308
    %v2153 = vunpack.c.l.b16 %v309
    %v2154 = vunpack.c.h.b16 %v309
    %v2155 = vunpack.c.l.b16 %v310
    %v2156 = vunpack.c.h.b16 %v310
    %v2157 = vunpack.c.l.b16 %v311
    %v2158 = vunpack.c.h.b16 %v311
    %v2159 = vunpack.c.l.b16 %v312
    %v2160 = vunpack.c.h.b16 %v312
    %v2161 = vunpack.c.l.b16 %v313
    %v2162 = vunpack.c.h.b16 %v313
    %v2163 = vunpack.c.l.b16 %v314
    %v2164 = vunpack.c.h.b16 %v314
    %v2165 = vunpack.c.l.b16 %v315
    %v2166 = vunpack.c.h.b16 %v315
    %v2167 = vunpack.c.l.b16 %v316
    %v2168 = vunpack.c.h.b16 %v316
    %v2169 = vunpack.c.l.b16 %v317
    %v2170 = vunpack.c.h.b16 %v317
    %v2171 = vunpack.c.l.b16 %v318
    %v2172 = vunpack.c.h.b16 %v318
    %v2173 = vunpack.c.l.b16 %v319
    %v2174 = vunpack.c.h.b16 %v319
    %v2175 = vunpack.c.l.b16 %v320
    %v2176 = vunpack.c.h.b16 %v320
    %v2177 = vunpack.c.l.b16 %v321
    %v2178 = vunpack.c.h.b16 %v321
    %v2179 = vunpack.c.l.b16 %v322
    %v2180 = vunpack.c.h.b16 %v322
    %v2181 = vunpack.c.l.b16 %v323
    %v2182 = vunpack.c.h.b16 %v323
    %v2183 = vunpack.c.l.b16 %v324
    %v2184 = vunpack.c.h.b16 %v324
    %v2185 = vunpack.c.l.b16 %v325
    %v2186 = vunpack.c.h.b16 %v325
    %v2187 = vunpack.c.l.b16 %v326
    %v2188 = vunpack.c.h.b16 %v326
    %v2189 = vunpack.c.l.b16 %v327
    %v2190 = vunpack.c.h.b16 %v327
    %v2191 = vunpack.c.l.b16 %v328
    %v2192 = vunpack.c.h.b16 %v328
    %v2193 = vunpack.c.l.b16 %v329
    %v2194 = vunpack.c.h.b16 %v329
    %v2195 = vunpack.c.l.b16 %v330
    %v2196 = vunpack.c.h.b16 %v330
    %v2197 = vunpack.c.l.b16 %v331
    %v2198 = vunpack.c.h.b16 %v331
    %v2199 = vunpack.c.l.b16 %v332
    %v2200 = vunpack.c.h.b16 %v332
    %v2201 = vunpack.c.l.b16 %v333
    %v2202 = vunpack.c.h.b16 %v333
    %v2203 = vunpack.c.l.b16 %v334
    %v2204 = vunpack.c.h.b16 %v334
    %v2205 = vunpack.c.l.b16 %v335
    %v2206 = vunpack.c.h.b16 %v335
    %v2207 = vunpack.c.l.b16 %v336
    %v2208 = vunpack.c.h.b16 %v336
    %v2209 = vunpack.c.l.b16 %v337
    %v2210 = vunpack.c.h.b16 %v337
    %v2211 = vunpack.c.l.b16 %v338
    %v2212 = vunpack.c.h.b16 %v338
    %v2213 = vunpack.c.l.b16 %v339
    %v2214 = vunpack.c.h.b16 %v339
    %v2215 = vunpack.c.l.b16 %v340
    %v2216 = vunpack.c.h.b16 %v340
    %v2217 = vunpack.c.l.b16 %v341
    %v2218 = vunpack.c.h.b16 %v341
    %v2219 = vunpack.c.l.b16 %v342
    %v2220 = vunpack.c.h.b16 %v342
    %v2221 = vunpack.c.l.b16 %v343
    %v2222 = vunpack.c.h.b16 %v343
    %v2223 = vunpack.c.l.b16 %v344
    %v2224 = vunpack.c.h.b16 %v344
    %v2225 = vunpack.c.l.b16 %v345
    %v2226 = vunpack.c.h.b16 %v345
    %v2227 = vunpack.c.l.b16 %v346
    %v2228 = vunpack.c.h.b16 %v346
    %v2229 = vunpack.c.l.b16 %v347
    %v2230 = vunpack.c.h.b16 %v347
    %v2231 = vunpack.c.l.b16 %v348
    %v2232 = vunpack.c.h.b16 %v348
    %v2233 = vunpack.c.l.b16 %v349
    %v2234 = vunpack.c.h.b16 %v349
    %v2235 = vunpack.c.l.b16 %v350
    %v2236 = vunpack.c.h.b16 %v350
    %v2237 = vunpack.c.l.b16 %v351
    %v2238 = vunpack.c.h.b16 %v351
    %v2239 = vunpack.c.l.b16 %v352
    %v2240 = vunpack.c.h.b16 %v352
    %v2241 = vunpack.c.l.b16 %v353
    %v2242 = vunpack.c.h.b16 %v353
    %v2243 = vunpack.c.l.b16 %v354
    %v2244 = vunpack.c.h.b16 %v354
    %v2245 = vunpack.c.l.b16 %v355
    %v2246 = vunpack.c.h.b16 %v355
    %v2247 = vunpack.c.l.b16 %v356
    %v2248 = vunpack.c.h.b16 %v356
    %v2249 = vunpack.c.l.b16 %v357
    %v2250 = vunpack.c.h.b16 %v357
    %v2251 = vunpack.c.l.b16 %v358
    %v2252 = vunpack.c.h.b16 %v358
    %v2253 = vunpack.c.l.b16 %v359
    %v2254 = vunpack.c.h.b16 %v359
    %v2255 = vunpack.c.l.b16 %v360
    %v2256 = vunpack.c.h.b16 %v360
    %v2257 = vunpack.c.l.b16 %v361
    %v2258 = vunpack.c.h.b16 %v361
    %v2259 = vunpack.c.l.b16 %v362
    %v2260 = vunpack.c.h.b16 %v362
    %v2261 = vunpack.c.l.b16 %v363
    %v2262 = vunpack.c.h.b16 %v363
    %v2263 = vunpack.c.l.b16 %v364
    %v2264 = vunpack.c.h.b16 %v364
    %v2265 = vunpack.c.l.b16 %v365
    %v2266 = vunpack.c.h.b16 %v365
    %v2267 = vunpack.c.l.b16 %v366
    %v2268 = vunpack.c.h.b16 %v366
    %v2269 = vunpack.c.l.b16 %v367
    %v2270 = vunpack.c.h.b16 %v367
    %v2271 = vunpack.c.l.b16 %v368
    %v2272 = vunpack.c.h.b16 %v368
    %v2273 = vunpack.c.l.b16 %v369
    %v2274 = vunpack.c.h.b16 %v369
    %v2275 = vunpack.c.l.b16 %v370
    %v2276 = vunpack.c.h.b16 %v370
    %v2277 = vunpack.c.l.b16 %v371
    %v2278 = vunpack.c.h.b16 %v371
    %v2279 = vunpack.c.l.b16 %v372
    %v2280 = vunpack.c.h.b16 %v372
    %v2281 = vunpack.c.l.b16 %v373
    %v2282 = vunpack.c.h.b16 %v373
    %v2283 = vunpack.c.l.b16 %v374
    %v2284 = vunpack.c.h.b16 %v374
    %v2285 = vunpack.c.l.b16 %v375
    %v2286 = vunpack.c.h.b16 %v375
    %v2287 = vunpack.c.l.b16 %v376
    %v2288 = vunpack.c.h.b16 %v376
    %v2289 = vunpack.c.l.b16 %v377
    %v2290 = vunpack.c.h.b16 %v377
    %v2291 = vunpack.c.l.b16 %v378
    %v2292 = vunpack.c.h.b16 %v378
    %v2293 = vunpack.c.l.b16 %v379
    %v2294 = vunpack.c.h.b16 %v379
    %v2295 = vunpack.c.l.b16 %v380
    %v2296 = vunpack.c.h.b16 %v380
    %v2297 = vunpack.c.l.b16 %v381
    %v2298 = vunpack.c.h.b16 %v381
    %v2299 = vunpack.c.l.b16 %v382
    %v2300 = vunpack.c.h.b16 %v382
    %v2301 = vunpack.c.l.b16 %v383
    %v2302 = vunpack.c.h.b16 %v383
    %v2303 = vunpack.c.l.b16 %v384
    %v2304 = vunpack.c.h.b16 %v384
    %v2305 = vunpack.c.l.b16 %v385
    %v2306 = vunpack.c.h.b16 %v385
    %v2307 = vunpack.c.l.b16 %v386
    %v2308 = vunpack.c.h.b16 %v386
    %v2309 = vunpack.c.l.b16 %v387
    %v2310 = vunpack.c.h.b16 %v387
    %v2311 = vunpack.c.l.b16 %v388
    %v2312 = vunpack.c.h.b16 %v388
    %v2313 = vunpack.c.l.b16 %v389
    %v2314 = vunpack.c.h.b16 %v389
    %v2315 = vunpack.c.l.b16 %v390
    %v2316 = vunpack.c.h.b16 %v390
    %v2317 = vunpack.c.l.b16 %v391
    %v2318 = vunpack.c.h.b16 %v391
    %v2319 = vunpack.c.l.b16 %v392
    %v2320 = vunpack.c.h.b16 %v392
    %v2321 = vunpack.c.l.b16 %v393
    %v2322 = vunpack.c.h.b16 %v393
    %v2323 = vunpack.c.l.b16 %v394
    %v2324 = vunpack.c.h.b16 %v394
    %v2325 = vunpack.c.l.b16 %v395
    %v2326 = vunpack.c.h.b16 %v395
    %v2327 = vunpack.c.l.b16 %v396
    %v2328 = vunpack.c.h.b16 %v396
    %v2329 = vunpack.c.l.b16 %v397
    %v2330 = vunpack.c.h.b16 %v397
    %v2331 = vunpack.c.l.b16 %v398
    %v2332 = vunpack.c.h.b16 %v398
    %v2333 = vunpack.c.l.b16 %v399
    %v2334 = vunpack.c.h.b16 %v399
    %v2335 = vunpack.c.l.b16 %v400
    %v2336 = vunpack.c.h.b16 %v400
    %v2337 = vunpack.c.l.b16 %v401
    %v2338 = vunpack.c.h.b16 %v401
    %v2339 = vunpack.c.l.b16 %v402
    %v2340 = vunpack.c.h.b16 %v402
    %v2341 = vunpack.c.l.b16 %v403
    %v2342 = vunpack.c.h.b16 %v403
    %v2343 = vunpack.c.l.b16 %v404
    %v2344 = vunpack.c.h.b16 %v404
    %v2345 = vunpack.c.l.b16 %v405
    %v2346 = vunpack.c.h.b16 %v405
    %v2347 = vunpack.c.l.b16 %v406
    %v2348 = vunpack.c.h.b16 %v406
    %v2349 = vunpack.c.l.b16 %v407
    %v2350 = vunpack.c.h.b16 %v407
    %v2351 = vunpack.c.l.b16 %v408
    %v2352 = vunpack.c.h.b16 %v408
    %v2353 = vunpack.c.l.b16 %v409
    %v2354 = vunpack.c.h.b16 %v409
    %v2355 = vunpack.c.l.b16 %v410
    %v2356 = vunpack.c.h.b16 %v410
    %v2357 = vunpack.c.l.b16 %v411
    %v2358 = vunpack.c.h.b16 %v411
    %v2359 = vunpack.c.l.b16 %v412
    %v2360 = vunpack.c.h.b16 %v412
    %v2361 = vunpack.c.l.b16 %v413
    %v2362 = vunpack.c.h.b16 %v413
    %v2363 = vunpack.c.l.b16 %v414
    %v2364 = vunpack.c.h.b16 %v414
    %v2365 = vunpack.c.l.b16 %v415
    %v2366 = vunpack.c.h.b16 %v415
    %v2367 = vunpack.c.l.b16 %v416
    %v2368 = vunpack.c.h.b16 %v416
    %v2369 = vunpack.c.l.b16 %v417
    %v2370 = vunpack.c.h.b16 %v417
    %v2371 = vunpack.c.l.b16 %v418
    %v2372 = vunpack.c.h.b16 %v418
    %v2373 = vunpack.c.l.b16 %v419
    %v2374 = vunpack.c.h.b16 %v419
    %v2375 = vunpack.c.l.b16 %v420
    %v2376 = vunpack.c.h.b16 %v420
    %v2377 = vunpack.c.l.b16 %v421
    %v2378 = vunpack.c.h.b16 %v421
    %v2379 = vunpack.c.l.b16 %v422
    %v2380 = vunpack.c.h.b16 %v422
    %v2381 = vunpack.c.l.b16 %v423
    %v2382 = vunpack.c.h.b16 %v423
    %v2383 = vunpack.c.l.b16 %v424
    %v2384 = vunpack.c.h.b16 %v424
    %v2385 = vunpack.c.l.b16 %v425
    %v2386 = vunpack.c.h.b16 %v425
    %v2387 = vunpack.c.l.b16 %v426
    %v2388 = vunpack.c.h.b16 %v426
    %v2389 = vunpack.c.l.b16 %v427
    %v2390 = vunpack.c.h.b16 %v427
    %v2391 = vunpack.c.l.b16 %v428
    %v2392 = vunpack.c.h.b16 %v428
    %v2393 = vunpack.c.l.b16 %v429
    %v2394 = vunpack.c.h.b16 %v429
    %v2395 = vunpack.c.l.b16 %v430
    %v2396 = vunpack.c.h.b16 %v430
    %v2397 = vunpack.c.l.b16 %v431
    %v2398 = vunpack.c.h.b16 %v431
    %v2399 = vunpack.c.l.b16 %v432
    %v2400 = vunpack.c.h.b16 %v432
    %v2401 = vunpack.c.l.b16 %v433
    %v2402 = vunpack.c.h.b16 %v433
    %v2403 = vunpack.c.l.b16 %v434
    %v2404 = vunpack.c.h.b16 %v434
    %v2405 = vunpack.c.l.b16 %v435
    %v2406 = vunpack.c.h.b16 %v435
    %v2407 = vunpack.c.l.b16 %v436
    %v2408 = vunpack.c.h.b16 %v436
    %v2409 = vunpack.c.l.b16 %v437
    %v2410 = vunpack.c.h.b16 %v437
    %v2411 = vunpack.c.l.b16 %v438
    %v2412 = vunpack.c.h.b16 %v438
    %v2413 = vunpack.c.l.b16 %v439
    %v2414 = vunpack.c.h.b16 %v439
    %v2415 = vunpack.c.l.b16 %v440
    %v2416 = vunpack.c.h.b16 %v440
    %v2417 = vunpack.c.l.b16 %v441
    %v2418 = vunpack.c.h.b16 %v441
    %v2419 = vunpack.c.l.b16 %v442
    %v2420 = vunpack.c.h.b16 %v442
    %v2421 = vunpack.c.l.b16 %v443
    %v2422 = vunpack.c.h.b16 %v443
    %v2423 = vunpack.c.l.b16 %v444
    %v2424 = vunpack.c.h.b16 %v444
    %v2425 = vunpack.c.l.b16 %v445
    %v2426 = vunpack.c.h.b16 %v445
    %v2427 = vunpack.c.l.b16 %v446
    %v2428 = vunpack.c.h.b16 %v446
    %v2429 = vunpack.c.l.b16 %v447
    %v2430 = vunpack.c.h.b16 %v447
    %v2431 = vunpack.c.l.b16 %v448
    %v2432 = vunpack.c.h.b16 %v448
    %v2433 = vunpack.c.l.b16 %v449
    %v2434 = vunpack.c.h.b16 %v449
    %v2435 = vunpack.c.l.b16 %v450
    %v2436 = vunpack.c.h.b16 %v450
    %v2437 = vunpack.c.l.b16 %v451
    %v2438 = vunpack.c.h.b16 %v451
    %v2439 = vunpack.c.l.b16 %v452
    %v2440 = vunpack.c.h.b16 %v452
    %v2441 = vunpack.c.l.b16 %v453
    %v2442 = vunpack.c.h.b16 %v453
    %v2443 = vunpack.c.l.b16 %v454
    %v2444 = vunpack.c.h.b16 %v454
    %v2445 = vunpack.c.l.b16 %v455
    %v2446 = vunpack.c.h.b16 %v455
    %v2447 = vunpack.c.l.b16 %v456
    %v2448 = vunpack.c.h.b16 %v456
    %v2449 = vunpack.c.l.b16 %v457
    %v2450 = vunpack.c.h.b16 %v457
    %v2451 = vunpack.c.l.b16 %v458
    %v2452 = vunpack.c.h.b16 %v458
    %v2453 = vunpack.c.l.b16 %v459
    %v2454 = vunpack.c.h.b16 %v459
    %v2455 = vunpack.c.l.b16 %v460
    %v2456 = vunpack.c.h.b16 %v460
    %v2457 = vunpack.c.l.b16 %v461
    %v2458 = vunpack.c.h.b16 %v461
    %v2459 = vunpack.c.l.b16 %v462
    %v2460 = vunpack.c.h.b16 %v462
    %v2461 = vunpack.c.l.b16 %v463
    %v2462 = vunpack.c.h.b16 %v463
    %v2463 = vunpack.c.l.b16 %v464
    %v2464 = vunpack.c.h.b16 %v464
    %v2465 = vunpack.c.l.b16 %v465
    %v2466 = vunpack.c.h.b16 %v465
    %v2467 = vunpack.c.l.b16 %v466
    %v2468 = vunpack.c.h.b16 %v466
    %v2469 = vunpack.c.l.b16 %v467
    %v2470 = vunpack.c.h.b16 %v467
    %v2471 = vunpack.c.l.b16 %v468
    %v2472 = vunpack.c.h.b16 %v468
    %v2473 = vunpack.c.l.b16 %v469
    %v2474 = vunpack.c.h.b16 %v469
    %v2475 = vunpack.c.l.b16 %v470
    %v2476 = vunpack.c.h.b16 %v470
    %v2477 = vunpack.c.l.b16 %v471
    %v2478 = vunpack.c.h.b16 %v471
    %v2479 = vunpack.c.l.b16 %v472
    %v2480 = vunpack.c.h.b16 %v472
    %v2481 = vunpack.c.l.b16 %v473
    %v2482 = vunpack.c.h.b16 %v473
    %v2483 = vunpack.c.l.b16 %v474
    %v2484 = vunpack.c.h.b16 %v474
    %v2485 = vunpack.c.l.b16 %v475
    %v2486 = vunpack.c.h.b16 %v475
    %v2487 = vunpack.c.l.b16 %v476
    %v2488 = vunpack.c.h.b16 %v476
    %v2489 = vunpack.c.l.b16 %v477
    %v2490 = vunpack.c.h.b16 %v477
    %v2491 = vunpack.c.l.b16 %v478
    %v2492 = vunpack.c.h.b16 %v478
    %v2493 = vunpack.c.l.b16 %v479
    %v2494 = vunpack.c.h.b16 %v479
    %v2495 = vunpack.c.l.b16 %v480
    %v2496 = vunpack.c.h.b16 %v480
    %v2497 = vunpack.c.l.b16 %v481
    %v2498 = vunpack.c.h.b16 %v481
    %v2499 = vunpack.c.l.b16 %v482
    %v2500 = vunpack.c.h.b16 %v482
    %v2501 = vunpack.c.l.b16 %v483
    %v2502 = vunpack.c.h.b16 %v483
    %v2503 = vunpack.c.l.b16 %v484
    %v2504 = vunpack.c.h.b16 %v484
    %v2505 = vunpack.c.l.b16 %v485
    %v2506 = vunpack.c.h.b16 %v485
    %v2507 = vunpack.c.l.b16 %v486
    %v2508 = vunpack.c.h.b16 %v486
    %v2509 = vunpack.c.l.b16 %v487
    %v2510 = vunpack.c.h.b16 %v487
    %v2511 = vunpack.c.l.b16 %v488
    %v2512 = vunpack.c.h.b16 %v488
    %v2513 = vunpack.c.l.b16 %v489
    %v2514 = vunpack.c.h.b16 %v489
    %v2515 = vunpack.c.l.b16 %v490
    %v2516 = vunpack.c.h.b16 %v490
    %v2517 = vunpack.c.l.b16 %v491
    %v2518 = vunpack.c.h.b16 %v491
    %v2519 = vunpack.c.l.b16 %v492
    %v2520 = vunpack.c.h.b16 %v492
    %v2521 = vunpack.c.l.b16 %v493
    %v2522 = vunpack.c.h.b16 %v493
    %v2523 = vunpack.c.l.b16 %v494
    %v2524 = vunpack.c.h.b16 %v494
    %v2525 = vunpack.c.l.b16 %v495
    %v2526 = vunpack.c.h.b16 %v495
    %v2527 = vunpack.c.l.b16 %v496
    %v2528 = vunpack.c.h.b16 %v496
    %v2529 = vunpack.c.l.b16 %v497
    %v2530 = vunpack.c.h.b16 %v497
    %v2531 = vunpack.c.l.b16 %v498
    %v2532 = vunpack.c.h.b16 %v498
    %v2533 = vunpack.c.l.b16 %v499
    %v2534 = vunpack.c.h.b16 %v499
    %v2535 = vunpack.c.l.b16 %v500
    %v2536 = vunpack.c.h.b16 %v500
    %v2537 = vunpack.c.l.b16 %v501
    %v2538 = vunpack.c.h.b16 %v501
    %v2539 = vunpack.c.l.b16 %v502
    %v2540 = vunpack.c.h.b16 %v502
    %v2541 = vunpack.c.l.b16 %v503
    %v2542 = vunpack.c.h.b16 %v503
    %v2543 = vunpack.c.l.b16 %v504
    %v2544 = vunpack.c.h.b16 %v504
    %v2545 = vunpack.c.l.b16 %v505
    %v2546 = vunpack.c.h.b16 %v505
    %v2547 = vunpack.c.l.b16 %v506
    %v2548 = vunpack.c.h.b16 %v506
    %v2549 = vunpack.c.l.b16 %v507
    %v2550 = vunpack.c.h.b16 %v507
    %v2551 = vunpack.c.l.b16 %v508
    %v2552 = vunpack.c.h.b16 %v508
    %v2553 = vunpack.c.l.b16 %v509
    %v2554 = vunpack.c.h.b16 %v509
    %v2555 = vunpack.c.l.b16 %v510
    %v2556 = vunpack.c.h.b16 %v510
    %v2557 = vunpack.c.l.b16 %v511
    %v2558 = vunpack.c.h.b16 %v511
    %v2559 = vunpack.c.l.b16 %v512
    %v2560 = vunpack.c.h.b16 %v512
    %v2561 = vunpack.c.l.b16 %v513
    %v2562 = vunpack.c.h.b16 %v513
    %v2563 = vunpack.c.l.b16 %v514
    %v2564 = vunpack.c.h.b16 %v514
    %v2565 = vunpack.c.l.b16 %v515
    %v2566 = vunpack.c.h.b16 %v515
    %v2567 = vunpack.c.l.b16 %v516
    %v2568 = vunpack.c.h.b16 %v516
    %v2569 = vunpack.c.l.b16 %v517
    %v2570 = vunpack.c.h.b16 %v517
    %v2571 = vunpack.c.l.b16 %v518
    %v2572 = vunpack.c.h.b16 %v518
    %v2573 = vunpack.c.l.b16 %v519
    %v2574 = vunpack.c.h.b16 %v519
    %v2575 = vunpack.c.l.b16 %v520
    %v2576 = vunpack.c.h.b16 %v520
    %v2577 = vunpack.c.l.b16 %v521
    %v2578 = vunpack.c.h.b16 %v521
    %v2579 = vunpack.c.l.b16 %v522
    %v2580 = vunpack.c.h.b16 %v522
    %v2581 = vunpack.c.l.b16 %v523
    %v2582 = vunpack.c.h.b16 %v523
    %v2583 = vunpack.c.l.b16 %v524
    %v2584 = vunpack.c.h.b16 %v524
    %v2585 = vunpack.c.l.b16 %v525
    %v2586 = vunpack.c.h.b16 %v525
    %v2587 = vunpack.c.l.b16 %v526
    %v2588 = vunpack.c.h.b16 %v526
    %v2589 = vunpack.c.l.b16 %v527
    %v2590 = vunpack.c.h.b16 %v527
    %v2591 = vunpack.c.l.b16 %v528
    %v2592 = vunpack.c.h.b16 %v528
    %v2593 = vunpack.c.l.b16 %v529
    %v2594 = vunpack.c.h.b16 %v529
    %v2595 = vunpack.c.l.b16 %v530
    %v2596 = vunpack.c.h.b16 %v530
    %v2597 = vunpack.c.l.b16 %v531
    %v2598 = vunpack.c.h.b16 %v531
    %v2599 = vunpack.c.l.b16 %v532
    %v2600 = vunpack.c.h.b16 %v532
    %v2601 = vunpack.c.l.b16 %v533
    %v2602 = vunpack.c.h.b16 %v533
    %v2603 = vunpack.c.l.b16 %v534
    %v2604 = vunpack.c.h.b16 %v534
    %v2605 = vunpack.c.l.b16 %v535
    %v2606 = vunpack.c.h.b16 %v535
    %v2607 = vunpack.c.l.b16 %v536
    %v2608 = vunpack.c.h.b16 %v536
    %v2609 = vunpack.c.l.b16 %v537
    %v2610 = vunpack.c.h.b16 %v537
    %v2611 = vunpack.c.l.b16 %v538
    %v2612 = vunpack.c.h.b16 %v538
    %v2613 = vunpack.c.l.b16 %v539
    %v2614 = vunpack.c.h.b16 %v539
    %v2615 = vunpack.c.l.b16 %v540
    %v2616 = vunpack.c.h.b16 %v540
    %v2617 = vunpack.c.l.b16 %v541
    %v2618 = vunpack.c.h.b16 %v541
    %v2619 = vunpack.c.l.b16 %v542
    %v2620 = vunpack.c.h.b16 %v542
    %v2621 = vunpack.c.l.b16 %v543
    %v2622 = vunpack.c.h.b16 %v543
    %v2623 = vunpack.c.l.b16 %v544
    %v2624 = vunpack.c.h.b16 %v544
    %v2625 = vunpack.c.l.b16 %v545
    %v2626 = vunpack.c.h.b16 %v545
    %v2627 = vunpack.c.l.b16 %v546
    %v2628 = vunpack.c.h.b16 %v546
    %v2629 = vunpack.c.l.b16 %v547
    %v2630 = vunpack.c.h.b16 %v547
    %v2631 = vunpack.c.l.b16 %v548
    %v2632 = vunpack.c.h.b16 %v548
    %v2633 = vunpack.c.l.b16 %v549
    %v2634 = vunpack.c.h.b16 %v549
    %v2635 = vunpack.c.l.b16 %v550
    %v2636 = vunpack.c.h.b16 %v550
    %v2637 = vunpack.c.l.b16 %v551
    %v2638 = vunpack.c.h.b16 %v551
    %v2639 = vunpack.c.l.b16 %v552
    %v2640 = vunpack.c.h.b16 %v552
    %v2641 = vunpack.c.l.b16 %v553
    %v2642 = vunpack.c.h.b16 %v553
    %v2643 = vunpack.c.l.b16 %v554
    %v2644 = vunpack.c.h.b16 %v554
    %v2645 = vunpack.c.l.b16 %v555
    %v2646 = vunpack.c.h.b16 %v555
    %v2647 = vunpack.c.l.b16 %v556
    %v2648 = vunpack.c.h.b16 %v556
    %v2649 = vunpack.c.l.b16 %v557
    %v2650 = vunpack.c.h.b16 %v557
    %v2651 = vunpack.c.l.b16 %v558
    %v2652 = vunpack.c.h.b16 %v558
    %v2653 = vunpack.c.l.b16 %v559
    %v2654 = vunpack.c.h.b16 %v559
    %v2655 = vunpack.c.l.b16 %v560
    %v2656 = vunpack.c.h.b16 %v560
    %v2657 = vunpack.c.l.b16 %v561
    %v2658 = vunpack.c.h.b16 %v561
    %v2659 = vunpack.c.l.b16 %v562
    %v2660 = vunpack.c.h.b16 %v562
    %v2661 = vunpack.c.l.b16 %v563
    %v2662 = vunpack.c.h.b16 %v563
    %v2663 = vunpack.c.l.b16 %v564
    %v2664 = vunpack.c.h.b16 %v564
    %v2665 = vunpack.c.l.b16 %v565
    %v2666 = vunpack.c.h.b16 %v565
    %v2667 = vunpack.c.l.b16 %v566
    %v2668 = vunpack.c.h.b16 %v566
    %v2669 = vunpack.c.l.b16 %v567
    %v2670 = vunpack.c.h.b16 %v567
    %v2671 = vunpack.c.l.b16 %v568
    %v2672 = vunpack.c.h.b16 %v568
    %v2673 = vunpack.c.l.b16 %v569
    %v2674 = vunpack.c.h.b16 %v569
    %v2675 = vunpack.c.l.b16 %v570
    %v2676 = vunpack.c.h.b16 %v570
    %v2677 = vunpack.c.l.b16 %v571
    %v2678 = vunpack.c.h.b16 %v571
    %v2679 = vunpack.c.l.b16 %v572
    %v2680 = vunpack.c.h.b16 %v572
    %v2681 = vunpack.c.l.b16 %v573
    %v2682 = vunpack.c.h.b16 %v573
    %v2683 = vunpack.c.l.b16 %v574
    %v2684 = vunpack.c.h.b16 %v574
    %v2685 = vunpack.c.l.b16 %v575
    %v2686 = vunpack.c.h.b16 %v575
    %v2687 = vunpack.c.l.b16 %v576
    %v2688 = vunpack.c.h.b16 %v576
    %v2689 = vunpack.c.l.b16 %v577
    %v2690 = vunpack.c.h.b16 %v577
    %v2691 = vunpack.c.l.b16 %v578
    %v2692 = vunpack.c.h.b16 %v578
    %v2693 = vunpack.c.l.b16 %v579
    %v2694 = vunpack.c.h.b16 %v579
    %v2695 = vunpack.c.l.b16 %v580
    %v2696 = vunpack.c.h.b16 %v580
    %v2697 = vunpack.c.l.b16 %v581
    %v2698 = vunpack.c.h.b16 %v581
    %v2699 = vunpack.c.l.b16 %v582
    %v2700 = vunpack.c.h.b16 %v582
    %v2701 = vunpack.c.l.b16 %v583
    %v2702 = vunpack.c.h.b16 %v583
    %v2703 = vunpack.c.l.b16 %v584
    %v2704 = vunpack.c.h.b16 %v584
    %v2705 = vunpack.c.l.b16 %v585
    %v2706 = vunpack.c.h.b16 %v585
    %v2707 = vunpack.c.l.b16 %v586
    %v2708 = vunpack.c.h.b16 %v586
    %v2709 = vunpack.c.l.b16 %v587
    %v2710 = vunpack.c.h.b16 %v587
    %v2711 = vunpack.c.l.b16 %v588
    %v2712 = vunpack.c.h.b16 %v588
    %v2713 = vunpack.c.l.b16 %v589
    %v2714 = vunpack.c.h.b16 %v589
    %v2715 = vunpack.c.l.b16 %v590
    %v2716 = vunpack.c.h.b16 %v590
    %v2717 = vunpack.c.l.b16 %v591
    %v2718 = vunpack.c.h.b16 %v591
    %v2719 = vunpack.c.l.b16 %v592
    %v2720 = vunpack.c.h.b16 %v592
    %v2721 = vunpack.c.l.b16 %v593
    %v2722 = vunpack.c.h.b16 %v593
    %v2723 = vunpack.c.l.b16 %v594
    %v2724 = vunpack.c.h.b16 %v594
    %v2725 = vunpack.c.l.b16 %v595
    %v2726 = vunpack.c.h.b16 %v595
    %v2727 = vunpack.c.l.b16 %v596
    %v2728 = vunpack.c.h.b16 %v596
    %v2729 = vunpack.c.l.b16 %v597
    %v2730 = vunpack.c.h.b16 %v597
    %v2731 = vunpack.c.l.b16 %v598
    %v2732 = vunpack.c.h.b16 %v598
    %v2733 = vunpack.c.l.b16 %v599
    %v2734 = vunpack.c.h.b16 %v599
    %v2735 = vunpack.c.l.b16 %v600
    %v2736 = vunpack.c.h.b16 %v600
    %v2737 = vunpack.c.l.b16 %v601
    %v2738 = vunpack.c.h.b16 %v601
    %v2739 = vunpack.c.l.b16 %v602
    %v2740 = vunpack.c.h.b16 %v602
    %v2741 = vunpack.c.l.b16 %v603
    %v2742 = vunpack.c.h.b16 %v603
    %v2743 = vunpack.c.l.b16 %v604
    %v2744 = vunpack.c.h.b16 %v604
    %v2745 = vunpack.c.l.b16 %v605
    %v2746 = vunpack.c.h.b16 %v605
    %v2747 = vunpack.c.l.b16 %v606
    %v2748 = vunpack.c.h.b16 %v606
    %v2749 = vunpack.c.l.b16 %v607
    %v2750 = vunpack.c.h.b16 %v607
    %v2751 = vunpack.c.l.b16 %v608
    %v2752 = vunpack.c.h.b16 %v608
    %v2753 = vunpack.c.l.b16 %v609
    %v2754 = vunpack.c.h.b16 %v609
    %v2755 = vunpack.c.l.b16 %v610
    %v2756 = vunpack.c.h.b16 %v610
    %v2757 = vunpack.c.l.b16 %v611
    %v2758 = vunpack.c.h.b16 %v611
    %v2759 = vunpack.c.l.b16 %v612
    %v2760 = vunpack.c.h.b16 %v612
    %v2761 = vunpack.c.l.b16 %v613
    %v2762 = vunpack.c.h.b16 %v613
    %v2763 = vunpack.c.l.b16 %v614
    %v2764 = vunpack.c.h.b16 %v614
    %v2765 = vunpack.c.l.b16 %v615
    %v2766 = vunpack.c.h.b16 %v615
    %v2767 = vunpack.c.l.b16 %v616
    %v2768 = vunpack.c.h.b16 %v616
    %v2769 = vunpack.c.l.b16 %v617
    %v2770 = vunpack.c.h.b16 %v617
    %v2771 = vunpack.c.l.b16 %v618
    %v2772 = vunpack.c.h.b16 %v618
    %v2773 = vunpack.c.l.b16 %v619
    %v2774 = vunpack.c.h.b16 %v619
    %v2775 = vunpack.c.l.b16 %v620
    %v2776 = vunpack.c.h.b16 %v620
    %v2777 = vunpack.c.l.b16 %v621
    %v2778 = vunpack.c.h.b16 %v621
    %v2779 = vunpack.c.l.b16 %v622
    %v2780 = vunpack.c.h.b16 %v622
    %v2781 = vunpack.c.l.b16 %v623
    %v2782 = vunpack.c.h.b16 %v623
    %v2783 = vunpack.c.l.b16 %v624
    %v2784 = vunpack.c.h.b16 %v624
    %v2785 = vunpack.c.l.b16 %v625
    %v2786 = vunpack.c.h.b16 %v625
    %v2787 = vunpack.c.l.b16 %v626
    %v2788 = vunpack.c.h.b16 %v626
    %v2789 = vunpack.c.l.b16 %v627
    %v2790 = vunpack.c.h.b16 %v627
    %v2791 = vunpack.c.l.b16 %v628
    %v2792 = vunpack.c.h.b16 %v628
    %v2793 = vunpack.c.l.b16 %v629
    %v2794 = vunpack.c.h.b16 %v629
    %v2795 = vunpack.c.l.b16 %v630
    %v2796 = vunpack.c.h.b16 %v630
    %v2797 = vunpack.c.l.b16 %v631
    %v2798 = vunpack.c.h.b16 %v631
    %v2799 = vunpack.c.l.b16 %v632
    %v2800 = vunpack.c.h.b16 %v632
    %v2801 = vunpack.c.l.b16 %v633
    %v2802 = vunpack.c.h.b16 %v633
    %v2803 = vunpack.c.l.b16 %v634
    %v2804 = vunpack.c.h.b16 %v634
    %v2805 = vunpack.c.l.b16 %v635
    %v2806 = vunpack.c.h.b16 %v635
    %v2807 = vunpack.c.l.b16 %v636
    %v2808 = vunpack.c.h.b16 %v636
    %v2809 = vunpack.c.l.b16 %v637
    %v2810 = vunpack.c.h.b16 %v637
    %v2811 = vunpack.c.l.b16 %v638
    %v2812 = vunpack.c.h.b16 %v638
    %v2813 = vunpack.c.l.b16 %v639
    %v2814 = vunpack.c.h.b16 %v639
    %v2815 = vunpack.c.l.b16 %v640
    %v2816 = vunpack.c.h.b16 %v640
    %v2817 = vunpack.c.l.b16 %v641
    %v2818 = vunpack.c.h.b16 %v641
    %v2819 = vunpack.c.l.b16 %v642
    %v2820 = vunpack.c.h.b16 %v642
    %v2821 = vunpack.c.l.b16 %v643
    %v2822 = vunpack.c.h.b16 %v643
    %v2823 = vunpack.c.l.b16 %v644
    %v2824 = vunpack.c.h.b16 %v644
    %v2825 = vunpack.c.l.b16 %v645
    %v2826 = vunpack.c.h.b16 %v645
    %v2827 = vunpack.c.l.b16 %v646
    %v2828 = vunpack.c.h.b16 %v646
    %v2829 = vunpack.c.l.b16 %v647
    %v2830 = vunpack.c.h.b16 %v647
    %v2831 = vunpack.c.l.b16 %v648
    %v2832 = vunpack.c.h.b16 %v648
    %v2833 = vunpack.c.l.b16 %v649
    %v2834 = vunpack.c.h.b16 %v649
    %v2835 = vunpack.c.l.b16 %v650
    %v2836 = vunpack.c.h.b16 %v650
    %v2837 = vunpack.c.l.b16 %v651
    %v2838 = vunpack.c.h.b16 %v651
    %v2839 = vunpack.c.l.b16 %v652
    %v2840 = vunpack.c.h.b16 %v652
    %v2841 = vunpack.c.l.b16 %v653
    %v2842 = vunpack.c.h.b16 %v653
    %v2843 = vunpack.c.l.b16 %v654
    %v2844 = vunpack.c.h.b16 %v654
    %v2845 = vunpack.c.l.b16 %v655
    %v2846 = vunpack.c.h.b16 %v655
    %v2847 = vunpack.c.l.b16 %v656
    %v2848 = vunpack.c.h.b16 %v656
    %v2849 = vunpack.c.l.b16 %v657
    %v2850 = vunpack.c.h.b16 %v657
    %v2851 = vunpack.c.l.b16 %v658
    %v2852 = vunpack.c.h.b16 %v658
    %v2853 = vunpack.c.l.b16 %v659
    %v2854 = vunpack.c.h.b16 %v659
    %v2855 = vunpack.c.l.b16 %v660
    %v2856 = vunpack.c.h.b16 %v660
    %v2857 = vunpack.c.l.b16 %v661
    %v2858 = vunpack.c.h.b16 %v661
    %v2859 = vunpack.c.l.b16 %v662
    %v2860 = vunpack.c.h.b16 %v662
    %v2861 = vunpack.c.l.b16 %v663
    %v2862 = vunpack.c.h.b16 %v663
    %v2863 = vunpack.c.l.b16 %v664
    %v2864 = vunpack.c.h.b16 %v664
    %v2865 = vunpack.c.l.b16 %v665
    %v2866 = vunpack.c.h.b16 %v665
    %v2867 = vunpack.c.l.b16 %v666
    %v2868 = vunpack.c.h.b16 %v666
    %v2869 = vunpack.c.l.b16 %v667
    %v2870 = vunpack.c.h.b16 %v667
    %v2871 = vunpack.c.l.b16 %v668
    %v2872 = vunpack.c.h.b16 %v668
    %v2873 = vunpack.c.l.b16 %v669
    %v2874 = vunpack.c.h.b16 %v669
    %v2875 = vunpack.c.l.b16 %v670
    %v2876 = vunpack.c.h.b16 %v670
    %v2877 = vunpack.c.l.b16 %v671
    %v2878 = vunpack.c.h.b16 %v671
    %v2879 = vunpack.c.l.b16 %v672
    %v2880 = vunpack.c.h.b16 %v672
    %v2881 = vunpack.c.l.b16 %v673
    %v2882 = vunpack.c.h.b16 %v673
    %v2883 = vunpack.c.l.b16 %v674
    %v2884 = vunpack.c.h.b16 %v674
    %v2885 = vunpack.c.l.b16 %v675
    %v2886 = vunpack.c.h.b16 %v675
    %v2887 = vunpack.c.l.b16 %v676
    %v2888 = vunpack.c.h.b16 %v676
    %v2889 = vunpack.c.l.b16 %v677
    %v2890 = vunpack.c.h.b16 %v677
    %v2891 = vunpack.c.l.b16 %v678
    %v2892 = vunpack.c.h.b16 %v678
    %v2893 = vunpack.c.l.b16 %v679
    %v2894 = vunpack.c.h.b16 %v679
    %v2895 = vunpack.c.l.b16 %v680
    %v2896 = vunpack.c.h.b16 %v680
    %v2897 = vunpack.c.l.b16 %v681
    %v2898 = vunpack.c.h.b16 %v681
    %v2899 = vunpack.c.l.b16 %v682
    %v2900 = vunpack.c.h.b16 %v682
    %v2901 = vunpack.c.l.b16 %v683
    %v2902 = vunpack.c.h.b16 %v683
    %v2903 = vunpack.c.l.b16 %v684
    %v2904 = vunpack.c.h.b16 %v684
    %v2905 = vunpack.c.l.b16 %v685
    %v2906 = vunpack.c.h.b16 %v685
    %v2907 = vunpack.c.l.b16 %v686
    %v2908 = vunpack.c.h.b16 %v686
    %v2909 = vunpack.c.l.b16 %v687
    %v2910 = vunpack.c.h.b16 %v687
    %v2911 = vunpack.c.l.b16 %v688
    %v2912 = vunpack.c.h.b16 %v688
    %v2913 = vunpack.c.l.b16 %v689
    %v2914 = vunpack.c.h.b16 %v689
    %v2915 = vunpack.c.l.b16 %v690
    %v2916 = vunpack.c.h.b16 %v690
    %v2917 = vunpack.c.l.b16 %v691
    %v2918 = vunpack.c.h.b16 %v691
    %v2919 = vunpack.c.l.b16 %v692
    %v2920 = vunpack.c.h.b16 %v692
    %v2921 = vunpack.c.l.b16 %v693
    %v2922 = vunpack.c.h.b16 %v693
    %v2923 = vunpack.c.l.b16 %v694
    %v2924 = vunpack.c.h.b16 %v694
    %v2925 = vunpack.c.l.b16 %v695
    %v2926 = vunpack.c.h.b16 %v695
    %v2927 = vunpack.c.l.b16 %v696
    %v2928 = vunpack.c.h.b16 %v696
    %v2929 = vunpack.c.l.b16 %v697
    %v2930 = vunpack.c.h.b16 %v697
    %v2931 = vunpack.c.l.b16 %v698
    %v2932 = vunpack.c.h.b16 %v698
    %v2933 = vunpack.c.l.b16 %v699
    %v2934 = vunpack.c.h.b16 %v699
    %v2935 = vunpack.c.l.b16 %v700
    %v2936 = vunpack.c.h.b16 %v700
    %v2937 = vunpack.c.l.b16 %v701
    %v2938 = vunpack.c.h.b16 %v701
    %v2939 = vunpack.c.l.b16 %v702
    %v2940 = vunpack.c.h.b16 %v702
    %v2941 = vunpack.c.l.b16 %v703
    %v2942 = vunpack.c.h.b16 %v703
    %v2943 = vunpack.c.l.b16 %v704
    %v2944 = vunpack.c.h.b16 %v704
    %v2945 = vunpack.c.l.b16 %v705
    %v2946 = vunpack.c.h.b16 %v705
    %v2947 = vunpack.c.l.b16 %v706
    %v2948 = vunpack.c.h.b16 %v706
    %v2949 = vunpack.c.l.b16 %v707
    %v2950 = vunpack.c.h.b16 %v707
    %v2951 = vunpack.c.l.b16 %v708
    %v2952 = vunpack.c.h.b16 %v708
    %v2953 = vunpack.c.l.b16 %v709
    %v2954 = vunpack.c.h.b16 %v709
    %v2955 = vunpack.c.l.b16 %v710
    %v2956 = vunpack.c.h.b16 %v710
    %v2957 = vunpack.c.l.b16 %v711
    %v2958 = vunpack.c.h.b16 %v711
    %v2959 = vunpack.c.l.b16 %v712
    %v2960 = vunpack.c.h.b16 %v712
    %v2961 = vunpack.c.l.b16 %v713
    %v2962 = vunpack.c.h.b16 %v713
    %v2963 = vunpack.c.l.b16 %v714
    %v2964 = vunpack.c.h.b16 %v714
    %v2965 = vunpack.c.l.b16 %v715
    %v2966 = vunpack.c.h.b16 %v715
    %v2967 = vunpack.c.l.b16 %v716
    %v2968 = vunpack.c.h.b16 %v716
    %v2969 = vunpack.c.l.b16 %v717
    %v2970 = vunpack.c.h.b16 %v717
    %v2971 = vunpack.c.l.b16 %v718
    %v2972 = vunpack.c.h.b16 %v718
    %v2973 = vunpack.c.l.b16 %v719
    %v2974 = vunpack.c.h.b16 %v719
    %v2975 = vunpack.c.l.b16 %v720
    %v2976 = vunpack.c.h.b16 %v720
    %v2977 = vunpack.c.l.b16 %v721
    %v2978 = vunpack.c.h.b16 %v721
    %v2979 = vunpack.c.l.b16 %v722
    %v2980 = vunpack.c.h.b16 %v722
    %v2981 = vunpack.c.l.b16 %v723
    %v2982 = vunpack.c.h.b16 %v723
    %v2983 = vunpack.c.l.b16 %v724
    %v2984 = vunpack.c.h.b16 %v724
    %v2985 = vunpack.c.l.b16 %v725
    %v2986 = vunpack.c.h.b16 %v725
    %v2987 = vunpack.c.l.b16 %v726
    %v2988 = vunpack.c.h.b16 %v726
    %v2989 = vunpack.c.l.b16 %v727
    %v2990 = vunpack.c.h.b16 %v727
    %v2991 = vunpack.c.l.b16 %v728
    %v2992 = vunpack.c.h.b16 %v728
    %v2993 = vunpack.c.l.b16 %v729
    %v2994 = vunpack.c.h.b16 %v729
    %v2995 = vunpack.c.l.b16 %v730
    %v2996 = vunpack.c.h.b16 %v730
    %v2997 = vunpack.c.l.b16 %v731
    %v2998 = vunpack.c.h.b16 %v731
    %v2999 = vunpack.c.l.b16 %v732
    %v3000 = vunpack.c.h.b16 %v732
    %v3001 = vunpack.c.l.b16 %v733
    %v3002 = vunpack.c.h.b16 %v733
    %v3003 = vunpack.c.l.b16 %v734
    %v3004 = vunpack.c.h.b16 %v734
    %v3005 = vunpack.c.l.b16 %v735
    %v3006 = vunpack.c.h.b16 %v735
    %v3007 = vunpack.c.l.b16 %v736
    %v3008 = vunpack.c.h.b16 %v736
    %v3009 = vunpack.c.l.b16 %v737
    %v3010 = vunpack.c.h.b16 %v737
    %v3011 = vunpack.c.l.b16 %v738
    %v3012 = vunpack.c.h.b16 %v738
    %v3013 = vunpack.c.l.b16 %v739
    %v3014 = vunpack.c.h.b16 %v739
    %v3015 = vunpack.c.l.b16 %v740
    %v3016 = vunpack.c.h.b16 %v740
    %v3017 = vunpack.c.l.b16 %v741
    %v3018 = vunpack.c.h.b16 %v741
    %v3019 = vunpack.c.l.b16 %v742
    %v3020 = vunpack.c.h.b16 %v742
    %v3021 = vunpack.c.l.b16 %v743
    %v3022 = vunpack.c.h.b16 %v743
    %v3023 = vunpack.c.l.b16 %v744
    %v3024 = vunpack.c.h.b16 %v744
    %v3025 = vunpack.c.l.b16 %v745
    %v3026 = vunpack.c.h.b16 %v745
    %v3027 = vunpack.c.l.b16 %v746
    %v3028 = vunpack.c.h.b16 %v746
    %v3029 = vunpack.c.l.b16 %v747
    %v3030 = vunpack.c.h.b16 %v747
    %v3031 = vunpack.c.l.b16 %v748
    %v3032 = vunpack.c.h.b16 %v748
    %v3033 = vunpack.c.l.b16 %v749
    %v3034 = vunpack.c.h.b16 %v749
    %v3035 = vunpack.c.l.b16 %v750
    %v3036 = vunpack.c.h.b16 %v750
    %v3037 = vunpack.c.l.b16 %v751
    %v3038 = vunpack.c.h.b16 %v751
    %v3039 = vunpack.c.l.b16 %v752
    %v3040 = vunpack.c.h.b16 %v752
    %v3041 = vunpack.c.l.b16 %v753
    %v3042 = vunpack.c.h.b16 %v753
    %v3043 = vunpack.c.l.b16 %v754
    %v3044 = vunpack.c.h.b16 %v754
    %v3045 = vunpack.c.l.b16 %v755
    %v3046 = vunpack.c.h.b16 %v755
    %v3047 = vunpack.c.l.b16 %v756
    %v3048 = vunpack.c.h.b16 %v756
    %v3049 = vunpack.c.l.b16 %v757
    %v3050 = vunpack.c.h.b16 %v757
    %v3051 = vunpack.c.l.b16 %v758
    %v3052 = vunpack.c.h.b16 %v758
    %v3053 = vunpack.c.l.b16 %v759
    %v3054 = vunpack.c.h.b16 %v759
    %v3055 = vunpack.c.l.b16 %v760
    %v3056 = vunpack.c.h.b16 %v760
    %v3057 = vunpack.c.l.b16 %v761
    %v3058 = vunpack.c.h.b16 %v761
    %v3059 = vunpack.c.l.b16 %v762
    %v3060 = vunpack.c.h.b16 %v762
    %v3061 = vunpack.c.l.b16 %v763
    %v3062 = vunpack.c.h.b16 %v763
    %v3063 = vunpack.c.l.b16 %v764
    %v3064 = vunpack.c.h.b16 %v764
    %v3065 = vunpack.c.l.b16 %v765
    %v3066 = vunpack.c.h.b16 %v765
    %v3067 = vunpack.c.l.b16 %v766
    %v3068 = vunpack.c.h.b16 %v766
    %v3069 = vunpack.c.l.b16 %v767
    %v3070 = vunpack.c.h.b16 %v767
    %v3071 = vunpack.c.l.b16 %v768
    %v3072 = vunpack.c.h.b16 %v768
    %v3073 = vunpack.c.l.b16 %v769
    %v3074 = vunpack.c.h.b16 %v769
    %v3075 = vunpack.c.l.b16 %v770
    %v3076 = vunpack.c.h.b16 %v770
    %v3077 = vunpack.c.l.b16 %v771
    %v3078 = vunpack.c.h.b16 %v771
    %v3079 = vunpack.c.l.b16 %v772
    %v3080 = vunpack.c.h.b16 %v772
    %v3081 = vunpack.c.l.b16 %v773
    %v3082 = vunpack.c.h.b16 %v773
    %v3083 = vunpack.c.l.b16 %v774
    %v3084 = vunpack.c.h.b16 %v774
    %v3085 = vunpack.c.l.b16 %v775
    %v3086 = vunpack.c.h.b16 %v775
    %v3087 = vunpack.c.l.b16 %v776
    %v3088 = vunpack.c.h.b16 %v776
    %v3089 = vunpack.c.l.b16 %v777
    %v3090 = vunpack.c.h.b16 %v777
    %v3091 = vunpack.c.l.b16 %v778
    %v3092 = vunpack.c.h.b16 %v778
    %v3093 = vunpack.c.l.b16 %v779
    %v3094 = vunpack.c.h.b16 %v779
    %v3095 = vunpack.c.l.b16 %v780
    %v3096 = vunpack.c.h.b16 %v780
    %v3097 = vunpack.c.l.b16 %v781
    %v3098 = vunpack.c.h.b16 %v781
    %v3099 = vunpack.c.l.b16 %v782
    %v3100 = vunpack.c.h.b16 %v782
    %v3101 = vunpack.c.l.b16 %v783
    %v3102 = vunpack.c.h.b16 %v783
    %v3103 = vunpack.c.l.b16 %v784
    %v3104 = vunpack.c.h.b16 %v784
    %v3105 = vunpack.c.l.b16 %v785
    %v3106 = vunpack.c.h.b16 %v785
    %v3107 = vunpack.c.l.b16 %v786
    %v3108 = vunpack.c.h.b16 %v786
    %v3109 = vunpack.c.l.b16 %v787
    %v3110 = vunpack.c.h.b16 %v787
    %v3111 = vunpack.c.l.b16 %v788
    %v3112 = vunpack.c.h.b16 %v788
    %v3113 = vunpack.c.l.b16 %v789
    %v3114 = vunpack.c.h.b16 %v789
    %v3115 = vunpack.c.l.b16 %v790
    %v3116 = vunpack.c.h.b16 %v790
    %v3117 = vunpack.c.l.b16 %v791
    %v3118 = vunpack.c.h.b16 %v791
    %v3119 = vunpack.c.l.b16 %v792
    %v3120 = vunpack.c.h.b16 %v792
    %v3121 = vunpack.c.l.b16 %v793
    %v3122 = vunpack.c.h.b16 %v793
    %v3123 = vunpack.c.l.b16 %v794
    %v3124 = vunpack.c.h.b16 %v794
    %v3125 = vunpack.c.l.b16 %v795
    %v3126 = vunpack.c.h.b16 %v795
    %v3127 = vunpack.c.l.b16 %v796
    %v3128 = vunpack.c.h.b16 %v796
    %v3129 = vunpack.c.l.b16 %v797
    %v3130 = vunpack.c.h.b16 %v797
    %v3131 = vunpack.c.l.b16 %v798
    %v3132 = vunpack.c.h.b16 %v798
    %v3133 = vunpack.c.l.b16 %v799
    %v3134 = vunpack.c.h.b16 %v799
    %v3135 = vunpack.c.l.b16 %v800
    %v3136 = vunpack.c.h.b16 %v800
    %v3137 = vunpack.c.l.b16 %v801
    %v3138 = vunpack.c.h.b16 %v801
    %v3139 = vunpack.c.l.b16 %v802
    %v3140 = vunpack.c.h.b16 %v802
    %v3141 = vunpack.c.l.b16 %v803
    %v3142 = vunpack.c.h.b16 %v803
    %v3143 = vunpack.c.l.b16 %v804
    %v3144 = vunpack.c.h.b16 %v804
    %v3145 = vunpack.c.l.b16 %v805
    %v3146 = vunpack.c.h.b16 %v805
    %v3147 = vunpack.c.l.b16 %v806
    %v3148 = vunpack.c.h.b16 %v806
    %v3149 = vunpack.c.l.b16 %v807
    %v3150 = vunpack.c.h.b16 %v807
    %v3151 = vunpack.c.l.b16 %v808
    %v3152 = vunpack.c.h.b16 %v808
    %v3153 = vunpack.c.l.b16 %v809
    %v3154 = vunpack.c.h.b16 %v809
    %v3155 = vunpack.c.l.b16 %v810
    %v3156 = vunpack.c.h.b16 %v810
    %v3157 = vunpack.c.l.b16 %v811
    %v3158 = vunpack.c.h.b16 %v811
    %v3159 = vunpack.c.l.b16 %v812
    %v3160 = vunpack.c.h.b16 %v812
    %v3161 = vunpack.c.l.b16 %v813
    %v3162 = vunpack.c.h.b16 %v813
    %v3163 = vunpack.c.l.b16 %v814
    %v3164 = vunpack.c.h.b16 %v814
    %v3165 = vunpack.c.l.b16 %v815
    %v3166 = vunpack.c.h.b16 %v815
    %v3167 = vunpack.c.l.b16 %v816
    %v3168 = vunpack.c.h.b16 %v816
    %v3169 = vunpack.c.l.b16 %v817
    %v3170 = vunpack.c.h.b16 %v817
    %v3171 = vunpack.c.l.b16 %v818
    %v3172 = vunpack.c.h.b16 %v818
    %v3173 = vunpack.c.l.b16 %v819
    %v3174 = vunpack.c.h.b16 %v819
    %v3175 = vunpack.c.l.b16 %v820
    %v3176 = vunpack.c.h.b16 %v820
    %v3177 = vunpack.c.l.b16 %v821
    %v3178 = vunpack.c.h.b16 %v821
    %v3179 = vunpack.c.l.b16 %v822
    %v3180 = vunpack.c.h.b16 %v822
    %v3181 = vunpack.c.l.b16 %v823
    %v3182 = vunpack.c.h.b16 %v823
    %v3183 = vunpack.c.l.b16 %v824
    %v3184 = vunpack.c.h.b16 %v824
    %v3185 = vunpack.c.l.b16 %v825
    %v3186 = vunpack.c.h.b16 %v825
    %v3187 = vunpack.c.l.b16 %v826
    %v3188 = vunpack.c.h.b16 %v826
    %v3189 = vunpack.c.l.b16 %v827
    %v3190 = vunpack.c.h.b16 %v827
    %v3191 = vunpack.c.l.b16 %v828
    %v3192 = vunpack.c.h.b16 %v828
    %v3193 = vunpack.c.l.b16 %v829
    %v3194 = vunpack.c.h.b16 %v829
    %v3195 = vunpack.c.l.b16 %v830
    %v3196 = vunpack.c.h.b16 %v830
    %v3197 = vunpack.c.l.b16 %v831
    %v3198 = vunpack.c.h.b16 %v831
    %v3199 = vunpack.c.l.b16 %v832
    %v3200 = vunpack.c.h.b16 %v832
    %v3201 = vunpack.c.l.b16 %v833
    %v3202 = vunpack.c.h.b16 %v833
    %v3203 = vunpack.c.l.b16 %v834
    %v3204 = vunpack.c.h.b16 %v834
    %v3205 = vunpack.c.l.b16 %v835
    %v3206 = vunpack.c.h.b16 %v835
    %v3207 = vunpack.c.l.b16 %v836
    %v3208 = vunpack.c.h.b16 %v836
    %v3209 = vunpack.c.l.b16 %v837
    %v3210 = vunpack.c.h.b16 %v837
    %v3211 = vunpack.c.l.b16 %v838
    %v3212 = vunpack.c.h.b16 %v838
    %v3213 = vunpack.c.l.b16 %v839
    %v3214 = vunpack.c.h.b16 %v839
    %v3215 = vunpack.c.l.b16 %v840
    %v3216 = vunpack.c.h.b16 %v840
    %v3217 = vunpack.c.l.b16 %v841
    %v3218 = vunpack.c.h.b16 %v841
    %v3219 = vunpack.c.l.b16 %v842
    %v3220 = vunpack.c.h.b16 %v842
    %v3221 = vunpack.c.l.b16 %v843
    %v3222 = vunpack.c.h.b16 %v843
    %v3223 = vunpack.c.l.b16 %v844
    %v3224 = vunpack.c.h.b16 %v844
    %v3225 = vunpack.c.l.b16 %v845
    %v3226 = vunpack.c.h.b16 %v845
    %v3227 = vunpack.c.l.b16 %v846
    %v3228 = vunpack.c.h.b16 %v846
    %v3229 = vunpack.c.l.b16 %v847
    %v3230 = vunpack.c.h.b16 %v847
    %v3231 = vunpack.c.l.b16 %v848
    %v3232 = vunpack.c.h.b16 %v848
    %v3233 = vunpack.c.l.b16 %v849
    %v3234 = vunpack.c.h.b16 %v849
    %v3235 = vunpack.c.l.b16 %v850
    %v3236 = vunpack.c.h.b16 %v850
    %v3237 = vunpack.c.l.b16 %v851
    %v3238 = vunpack.c.h.b16 %v851
    %v3239 = vunpack.c.l.b16 %v852
    %v3240 = vunpack.c.h.b16 %v852
    %v3241 = vunpack.c.l.b16 %v853
    %v3242 = vunpack.c.h.b16 %v853
    %v3243 = vunpack.c.l.b16 %v854
    %v3244 = vunpack.c.h.b16 %v854
    %v3245 = vunpack.c.l.b16 %v855
    %v3246 = vunpack.c.h.b16 %v855
    %v3247 = vunpack.c.l.b16 %v856
    %v3248 = vunpack.c.h.b16 %v856
    %v3249 = vunpack.c.l.b16 %v857
    %v3250 = vunpack.c.h.b16 %v857
    %v3251 = vunpack.c.l.b16 %v858
    %v3252 = vunpack.c.h.b16 %v858
    %v3253 = vunpack.c.l.b16 %v859
    %v3254 = vunpack.c.h.b16 %v859
    %v3255 = vunpack.c.l.b16 %v860
    %v3256 = vunpack.c.h.b16 %v860
    %v3257 = vunpack.c.l.b16 %v861
    %v3258 = vunpack.c.h.b16 %v861
    %v3259 = vunpack.c.l.b16 %v862
    %v3260 = vunpack.c.h.b16 %v862
    %v3261 = vunpack.c.l.b16 %v863
    %v3262 = vunpack.c.h.b16 %v863
    %v3263 = vunpack.c.l.b16 %v864
    %v3264 = vunpack.c.h.b16 %v864
    %v3265 = vunpack.c.l.b16 %v865
    %v3266 = vunpack.c.h.b16 %v865
    %v3267 = vunpack.c.l.b16 %v866
    %v3268 = vunpack.c.h.b16 %v866
    %v3269 = vunpack.c.l.b16 %v867
    %v3270 = vunpack.c.h.b16 %v867
    %v3271 = vunpack.c.l.b16 %v868
    %v3272 = vunpack.c.h.b16 %v868
    %v3273 = vunpack.c.l.b16 %v869
    %v3274 = vunpack.c.h.b16 %v869
    %v3275 = vunpack.c.l.b16 %v870
    %v3276 = vunpack.c.h.b16 %v870
    %v3277 = vunpack.c.l.b16 %v871
    %v3278 = vunpack.c.h.b16 %v871
    %v3279 = vunpack.c.l.b16 %v872
    %v3280 = vunpack.c.h.b16 %v872
    %v3281 = vunpack.c.l.b16 %v873
    %v3282 = vunpack.c.h.b16 %v873
    %v3283 = vunpack.c.l.b16 %v874
    %v3284 = vunpack.c.h.b16 %v874
    %v3285 = vunpack.c.l.b16 %v875
    %v3286 = vunpack.c.h.b16 %v875
    %v3287 = vunpack.c.l.b16 %v876
    %v3288 = vunpack.c.h.b16 %v876
    %v3289 = vunpack.c.l.b16 %v877
    %v3290 = vunpack.c.h.b16 %v877
    %v3291 = vunpack.c.l.b16 %v878
    %v3292 = vunpack.c.h.b16 %v878
    %v3293 = vunpack.c.l.b16 %v879
    %v3294 = vunpack.c.h.b16 %v879
    %v3295 = vunpack.c.l.b16 %v880
    %v3296 = vunpack.c.h.b16 %v880
    %v3297 = vunpack.c.l.b16 %v881
    %v3298 = vunpack.c.h.b16 %v881
    %v3299 = vunpack.c.l.b16 %v882
    %v3300 = vunpack.c.h.b16 %v882
    %v3301 = vunpack.c.l.b16 %v883
    %v3302 = vunpack.c.h.b16 %v883
    %v3303 = vunpack.c.l.b16 %v884
    %v3304 = vunpack.c.h.b16 %v884
    %v3305 = vunpack.c.l.b16 %v885
    %v3306 = vunpack.c.h.b16 %v885
    %v3307 = vunpack.c.l.b16 %v886
    %v3308 = vunpack.c.h.b16 %v886
    %v3309 = vunpack.c.l.b16 %v887
    %v3310 = vunpack.c.h.b16 %v887
    %v3311 = vpack.c.b16 %v1759, %v1743
    %v3312 = vpack.c.b16 %v1760, %v1744
    %v3313 = vpack.c.b16 %v1761, %v1745
    %v3314 = vpack.c.b16 %v1762, %v1746
    %v3315 = vpack.c.b16 %v1763, %v1747
    %v3316 = vpack.c.b16 %v1764, %v1748
    %v3317 = vpack.c.b16 %v1765, %v1749
    %v3318 = vpack.c.b16 %v1766, %v1750
    %v3319 = vpack.c.b16 %v1767, %v1751
    %v3320 = vpack.c.b16 %v1768, %v1752
    %v3321 = vpack.c.b16 %v1769, %v1753
    %v3322 = vpack.c.b16 %v1770, %v1754
    %v3323 = vpack.c.b16 %v1771, %v1755
    %v3324 = vpack.c.b16 %v1772, %v1756
    %v3325 = vpack.c.b16 %v1773, %v1757
    %v3326 = vpack.c.b16 %v1774, %v1758
    %v3327 = vpack.c.b16 %v1791, %v1775
    %v3328 = vpack.c.b16 %v1792, %v1776
    %v3329 = vpack.c.b16 %v1793, %v1777
    %v3330 = vpack.c.b16 %v1794, %v1778
    %v3331 = vpack.c.b16 %v1795, %v1779
    %v3332 = vpack.c.b16 %v1796, %v1780
    %v3333 = vpack.c.b16 %v1797, %v1781
    %v3334 = vpack.c.b16 %v1798, %v1782
    %v3335 = vpack.c.b16 %v1799, %v1783
    %v3336 = vpack.c.b16 %v1800, %v1784
    %v3337 = vpack.c.b16 %v1801, %v1785
    %v3338 = vpack.c.b16 %v1802, %v1786
    %v3339 = vpack.c.b16 %v1803, %v1787
    %v3340 = vpack.c.b16 %v1804, %v1788
    %v3341 = vpack.c.b16 %v1805, %v1789
    %v3342 = vpack.c.b16 %v1806, %v1790
    %v3343 = vpack.c.b16 %v1823, %v1807
    %v3344 = vpack.c.b16 %v1824, %v1808
    %v3345 = vpack.c.b16 %v1825, %v1809
    %v3346 = vpack.c.b16 %v1826, %v1810
    %v3347 = vpack.c.b16 %v1827, %v1811
    %v3348 = vpack.c.b16 %v1828, %v1812
    %v3349 = vpack.c.b16 %v1829, %v1813
    %v3350 = vpack.c.b16 %v1830, %v1814
    %v3351 = vpack.c.b16 %v1831, %v1815
    %v3352 = vpack.c.b16 %v1832, %v1816
    %v3353 = vpack.c.b16 %v1833, %v1817
    %v3354 = vpack.c.b16 %v1834, %v1818
    %v3355 = vpack.c.b16 %v1835, %v1819
    %v3356 = vpack.c.b16 %v1836, %v1820
    %v3357 = vpack.c.b16 %v1837, %v1821
    %v3358 = vpack.c.b16 %v1838, %v1822
    %v3359 = vpack.c.b16 %v1855, %v1839
    %v3360 = vpack.c.b16 %v1856, %v1840
    %v3361 = vpack.c.b16 %v1857, %v1841
    %v3362 = vpack.c.b16 %v1858, %v1842
    %v3363 = vpack.c.b16 %v1859, %v1843
    %v3364 = vpack.c.b16 %v1860, %v1844
    %v3365 = vpack.c.b16 %v1861, %v1845
    %v3366 = vpack.c.b16 %v1862, %v1846
    %v3367 = vpack.c.b16 %v1863, %v1847
    %v3368 = vpack.c.b16 %v1864, %v1848
    %v3369 = vpack.c.b16 %v1865, %v1849
    %v3370 = vpack.c.b16 %v1866, %v1850
    %v3371 = vpack.c.b16 %v1867, %v1851
    %v3372 = vpack.c.b16 %v1868, %v1852
    %v3373 = vpack.c.b16 %v1869, %v1853
    %v3374 = vpack.c.b16 %v1870, %v1854
    %v3375 = vpack.c.b16 %v1887, %v1871
    %v3376 = vpack.c.b16 %v1888, %v1872
    %v3377 = vpack.c.b16 %v1889, %v1873
    %v3378 = vpack.c.b16 %v1890, %v1874
    %v3379 = vpack.c.b16 %v1891, %v1875
    %v3380 = vpack.c.b16 %v1892, %v1876
    %v3381 = vpack.c.b16 %v1893, %v1877
    %v3382 = vpack.c.b16 %v1894, %v1878
    %v3383 = vpack.c.b16 %v1895, %v1879
    %v3384 = vpack.c.b16 %v1896, %v1880
    %v3385 = vpack.c.b16 %v1897, %v1881
    %v3386 = vpack.c.b16 %v1898, %v1882
    %v3387 = vpack.c.b16 %v1899, %v1883
    %v3388 = vpack.c.b16 %v1900, %v1884
    %v3389 = vpack.c.b16 %v1901, %v1885
    %v3390 = vpack.c.b16 %v1902, %v1886
    %v3391 = vpack.c.b16 %v1919, %v1903
    %v3392 = vpack.c.b16 %v1920, %v1904
    %v3393 = vpack.c.b16 %v1921, %v1905
    %v3394 = vpack.c.b16 %v1922, %v1906
    %v3395 = vpack.c.b16 %v1923, %v1907
    %v3396 = vpack.c.b16 %v1924, %v1908
    %v3397 = vpack.c.b16 %v1925, %v1909
    %v3398 = vpack.c.b16 %v1926, %v1910
    %v3399 = vpack.c.b16 %v1927, %v1911
    %v3400 = vpack.c.b16 %v1928, %v1912
    %v3401 = vpack.c.b16 %v1929, %v1913
    %v3402 = vpack.c.b16 %v1930, %v1914
    %v3403 = vpack.c.b16 %v1931, %v1915
    %v3404 = vpack.c.b16 %v1932, %v1916
    %v3405 = vpack.c.b16 %v1933, %v1917
    %v3406 = vpack.c.b16 %v1934, %v1918
    %v3407 = vpack.c.b16 %v1951, %v1935
    %v3408 = vpack.c.b16 %v1952, %v1936
    %v3409 = vpack.c.b16 %v1953, %v1937
    %v3410 = vpack.c.b16 %v1954, %v1938
    %v3411 = vpack.c.b16 %v1955, %v1939
    %v3412 = vpack.c.b16 %v1956, %v1940
    %v3413 = vpack.c.b16 %v1957, %v1941
    %v3414 = vpack.c.b16 %v1958, %v1942
    %v3415 = vpack.c.b16 %v1959, %v1943
    %v3416 = vpack.c.b16 %v1960, %v1944
    %v3417 = vpack.c.b16 %v1961, %v1945
    %v3418 = vpack.c.b16 %v1962, %v1946
    %v3419 = vpack.c.b16 %v1963, %v1947
    %v3420 = vpack.c.b16 %v1964, %v1948
    %v3421 = vpack.c.b16 %v1965, %v1949
    %v3422 = vpack.c.b16 %v1966, %v1950
    %v3423 = vpack.c.b16 %v1983, %v1967
    %v3424 = vpack.c.b16 %v1984, %v1968
    %v3425 = vpack.c.b16 %v1985, %v1969
    %v3426 = vpack.c.b16 %v1986, %v1970
    %v3427 = vpack.c.b16 %v1987, %v1971
    %v3428 = vpack.c.b16 %v1988, %v1972
    %v3429 = vpack.c.b16 %v1989, %v1973
    %v3430 = vpack.c.b16 %v1990, %v1974
    %v3431 = vpack.c.b16 %v1991, %v1975
    %v3432 = vpack.c.b16 %v1992, %v1976
    %v3433 = vpack.c.b16 %v1993, %v1977
    %v3434 = vpack.c.b16 %v1994, %v1978
    %v3435 = vpack.c.b16 %v1995, %v1979
    %v3436 = vpack.c.b16 %v1996, %v1980
    %v3437 = vpack.c.b16 %v1997, %v1981
    %v3438 = vpack.c.b16 %v1998, %v1982
    %v3439 = vpack.c.b16 %v2015, %v1999
    %v3440 = vpack.c.b16 %v2016, %v2000
    %v3441 = vpack.c.b16 %v2017, %v2001
    %v3442 = vpack.c.b16 %v2018, %v2002
    %v3443 = vpack.c.b16 %v2019, %v2003
    %v3444 = vpack.c.b16 %v2020, %v2004
    %v3445 = vpack.c.b16 %v2021, %v2005
    %v3446 = vpack.c.b16 %v2022, %v2006
    %v3447 = vpack.c.b16 %v2023, %v2007
    %v3448 = vpack.c.b16 %v2024, %v2008
    %v3449 = vpack.c.b16 %v2025, %v2009
    %v3450 = vpack.c.b16 %v2026, %v2010
    %v3451 = vpack.c.b16 %v2027, %v2011
    %v3452 = vpack.c.b16 %v2028, %v2012
    %v3453 = vpack.c.b16 %v2029, %v2013
    %v3454 = vpack.c.b16 %v2030, %v2014
    %v3455 = vpack.c.b16 %v2047, %v2031
    %v3456 = vpack.c.b16 %v2048, %v2032
    %v3457 = vpack.c.b16 %v2049, %v2033
    %v3458 = vpack.c.b16 %v2050, %v2034
    %v3459 = vpack.c.b16 %v2051, %v2035
    %v3460 = vpack.c.b16 %v2052, %v2036
    %v3461 = vpack.c.b16 %v2053, %v2037
    %v3462 = vpack.c.b16 %v2054, %v2038
    %v3463 = vpack.c.b16 %v2055, %v2039
    %v3464 = vpack.c.b16 %v2056, %v2040
    %v3465 = vpack.c.b16 %v2057, %v2041
    %v3466 = vpack.c.b16 %v2058, %v2042
    %v3467 = vpack.c.b16 %v2059, %v2043
    %v3468 = vpack.c.b16 %v2060, %v2044
    %v3469 = vpack.c.b16 %v2061, %v2045
    %v3470 = vpack.c.b16 %v2062, %v2046
    %v3471 = vpack.c.b16 %v2079, %v2063
    %v3472 = vpack.c.b16 %v2080, %v2064
    %v3473 = vpack.c.b16 %v2081, %v2065
    %v3474 = vpack.c.b16 %v2082, %v2066
    %v3475 = vpack.c.b16 %v2083, %v2067
    %v3476 = vpack.c.b16 %v2084, %v2068
    %v3477 = vpack.c.b16 %v2085, %v2069
    %v3478 = vpack.c.b16 %v2086, %v2070
    %v3479 = vpack.c.b16 %v2087, %v2071
    %v3480 = vpack.c.b16 %v2088, %v2072
    %v3481 = vpack.c.b16 %v2089, %v2073
    %v3482 = vpack.c.b16 %v2090, %v2074
    %v3483 = vpack.c.b16 %v2091, %v2075
    %v3484 = vpack.c.b16 %v2092, %v2076
    %v3485 = vpack.c.b16 %v2093, %v2077
    %v3486 = vpack.c.b16 %v2094, %v2078
    %v3487 = vpack.c.b16 %v2111, %v2095
    %v3488 = vpack.c.b16 %v2112, %v2096
    %v3489 = vpack.c.b16 %v2113, %v2097
    %v3490 = vpack.c.b16 %v2114, %v2098
    %v3491 = vpack.c.b16 %v2115, %v2099
    %v3492 = vpack.c.b16 %v2116, %v2100
    %v3493 = vpack.c.b16 %v2117, %v2101
    %v3494 = vpack.c.b16 %v2118, %v2102
    %v3495 = vpack.c.b16 %v2119, %v2103
    %v3496 = vpack.c.b16 %v2120, %v2104
    %v3497 = vpack.c.b16 %v2121, %v2105
    %v3498 = vpack.c.b16 %v2122, %v2106
    %v3499 = vpack.c.b16 %v2123, %v2107
    %v3500 = vpack.c.b16 %v2124, %v2108
    %v3501 = vpack.c.b16 %v2125, %v2109
    %v3502 = vpack.c.b16 %v2126, %v2110
    %v3503 = vpack.c.b16 %v2143, %v2127
    %v3504 = vpack.c.b16 %v2144, %v2128
    %v3505 = vpack.c.b16 %v2145, %v2129
    %v3506 = vpack.c.b16 %v2146, %v2130
    %v3507 = vpack.c.b16 %v2147, %v2131
    %v3508 = vpack.c.b16 %v2148, %v2132
    %v3509 = vpack.c.b16 %v2149, %v2133
    %v3510 = vpack.c.b16 %v2150, %v2134
    %v3511 = vpack.c.b16 %v2151, %v2135
    %v3512 = vpack.c.b16 %v2152, %v2136
    %v3513 = vpack.c.b16 %v2153, %v2137
    %v3514 = vpack.c.b16 %v2154, %v2138
    %v3515 = vpack.c.b16 %v2155, %v2139
    %v3516 = vpack.c.b16 %v2156, %v2140
    %v3517 = vpack.c.b16 %v2157, %v2141
    %v3518 = vpack.c.b16 %v2158, %v2142
    %v3519 = vpack.c.b16 %v2175, %v2159
    %v3520 = vpack.c.b16 %v2176, %v2160
    %v3521 = vpack.c.b16 %v2177, %v2161
    %v3522 = vpack.c.b16 %v2178, %v2162
    %v3523 = vpack.c.b16 %v2179, %v2163
    %v3524 = vpack.c.b16 %v2180, %v2164
    %v3525 = vpack.c.b16 %v2181, %v2165
    %v3526 = vpack.c.b16 %v2182, %v2166
    %v3527 = vpack.c.b16 %v2183, %v2167
    %v3528 = vpack.c.b16 %v2184, %v2168
    %v3529 = vpack.c.b16 %v2185, %v2169
    %v3530 = vpack.c.b16 %v2186, %v2170
    %v3531 = vpack.c.b16 %v2187, %v2171
    %v3532 = vpack.c.b16 %v2188, %v2172
    %v3533 = vpack.c.b16 %v2189, %v2173
    %v3534 = vpack.c.b16 %v2190, %v2174
    %v3535 = vpack.c.b16 %v2207, %v2191
    %v3536 = vpack.c.b16 %v2208, %v2192
    %v3537 = vpack.c.b16 %v2209, %v2193
    %v3538 = vpack.c.b16 %v2210, %v2194
    %v3539 = vpack.c.b16 %v2211, %v2195
    %v3540 = vpack.c.b16 %v2212, %v2196
    %v3541 = vpack.c.b16 %v2213, %v2197
    %v3542 = vpack.c.b16 %v2214, %v2198
    %v3543 = vpack.c.b16 %v2215, %v2199
    %v3544 = vpack.c.b16 %v2216, %v2200
    %v3545 = vpack.c.b16 %v2217, %v2201
    %v3546 = vpack.c.b16 %v2218, %v2202
    %v3547 = vpack.c.b16 %v2219, %v2203
    %v3548 = vpack.c.b16 %v2220, %v2204
    %v3549 = vpack.c.b16 %v2221, %v2205
    %v3550 = vpack.c.b16 %v2222, %v2206
    %v3551 = vpack.c.b16 %v2239, %v2223
    %v3552 = vpack.c.b16 %v2240, %v2224
    %v3553 = vpack.c.b16 %v2241, %v2225
    %v3554 = vpack.c.b16 %v2242, %v2226
    %v3555 = vpack.c.b16 %v2243, %v2227
    %v3556 = vpack.c.b16 %v2244, %v2228
    %v3557 = vpack.c.b16 %v2245, %v2229
    %v3558 = vpack.c.b16 %v2246, %v2230
    %v3559 = vpack.c.b16 %v2247, %v2231
    %v3560 = vpack.c.b16 %v2248, %v2232
    %v3561 = vpack.c.b16 %v2249, %v2233
    %v3562 = vpack.c.b16 %v2250, %v2234
    %v3563 = vpack.c.b16 %v2251, %v2235
    %v3564 = vpack.c.b16 %v2252, %v2236
    %v3565 = vpack.c.b16 %v2253, %v2237
    %v3566 = vpack.c.b16 %v2254, %v2238
    %v3567 = vpack.c.b16 %v2271, %v2255
    %v3568 = vpack.c.b16 %v2272, %v2256
    %v3569 = vpack.c.b16 %v2273, %v2257
    %v3570 = vpack.c.b16 %v2274, %v2258
    %v3571 = vpack.c.b16 %v2275, %v2259
    %v3572 = vpack.c.b16 %v2276, %v2260
    %v3573 = vpack.c.b16 %v2277, %v2261
    %v3574 = vpack.c.b16 %v2278, %v2262
    %v3575 = vpack.c.b16 %v2279, %v2263
    %v3576 = vpack.c.b16 %v2280, %v2264
    %v3577 = vpack.c.b16 %v2281, %v2265
    %v3578 = vpack.c.b16 %v2282, %v2266
    %v3579 = vpack.c.b16 %v2283, %v2267
    %v3580 = vpack.c.b16 %v2284, %v2268
    %v3581 = vpack.c.b16 %v2285, %v2269
    %v3582 = vpack.c.b16 %v2286, %v2270
    %v3583 = vpack.c.b16 %v2303, %v2287
    %v3584 = vpack.c.b16 %v2304, %v2288
    %v3585 = vpack.c.b16 %v2305, %v2289
    %v3586 = vpack.c.b16 %v2306, %v2290
    %v3587 = vpack.c.b16 %v2307, %v2291
    %v3588 = vpack.c.b16 %v2308, %v2292
    %v3589 = vpack.c.b16 %v2309, %v2293
    %v3590 = vpack.c.b16 %v2310, %v2294
    %v3591 = vpack.c.b16 %v2311, %v2295
    %v3592 = vpack.c.b16 %v2312, %v2296
    %v3593 = vpack.c.b16 %v2313, %v2297
    %v3594 = vpack.c.b16 %v2314, %v2298
    %v3595 = vpack.c.b16 %v2315, %v2299
    %v3596 = vpack.c.b16 %v2316, %v2300
    %v3597 = vpack.c.b16 %v2317, %v2301
    %v3598 = vpack.c.b16 %v2318, %v2302
    %v3599 = vpack.c.b16 %v2335, %v2319
    %v3600 = vpack.c.b16 %v2336, %v2320
    %v3601 = vpack.c.b16 %v2337, %v2321
    %v3602 = vpack.c.b16 %v2338, %v2322
    %v3603 = vpack.c.b16 %v2339, %v2323
    %v3604 = vpack.c.b16 %v2340, %v2324
    %v3605 = vpack.c.b16 %v2341, %v2325
    %v3606 = vpack.c.b16 %v2342, %v2326
    %v3607 = vpack.c.b16 %v2343, %v2327
    %v3608 = vpack.c.b16 %v2344, %v2328
    %v3609 = vpack.c.b16 %v2345, %v2329
    %v3610 = vpack.c.b16 %v2346, %v2330
    %v3611 = vpack.c.b16 %v2347, %v2331
    %v3612 = vpack.c.b16 %v2348, %v2332
    %v3613 = vpack.c.b16 %v2349, %v2333
    %v3614 = vpack.c.b16 %v2350, %v2334
    %v3615 = vpack.c.b16 %v2367, %v2351
    %v3616 = vpack.c.b16 %v2368, %v2352
    %v3617 = vpack.c.b16 %v2369, %v2353
    %v3618 = vpack.c.b16 %v2370, %v2354
    %v3619 = vpack.c.b16 %v2371, %v2355
    %v3620 = vpack.c.b16 %v2372, %v2356
    %v3621 = vpack.c.b16 %v2373, %v2357
    %v3622 = vpack.c.b16 %v2374, %v2358
    %v3623 = vpack.c.b16 %v2375, %v2359
    %v3624 = vpack.c.b16 %v2376, %v2360
    %v3625 = vpack.c.b16 %v2377, %v2361
    %v3626 = vpack.c.b16 %v2378, %v2362
    %v3627 = vpack.c.b16 %v2379, %v2363
    %v3628 = vpack.c.b16 %v2380, %v2364
    %v3629 = vpack.c.b16 %v2381, %v2365
    %v3630 = vpack.c.b16 %v2382, %v2366
    %v3631 = vpack.c.b16 %v2399, %v2383
    %v3632 = vpack.c.b16 %v2400, %v2384
    %v3633 = vpack.c.b16 %v2401, %v2385
    %v3634 = vpack.c.b16 %v2402, %v2386
    %v3635 = vpack.c.b16 %v2403, %v2387
    %v3636 = vpack.c.b16 %v2404, %v2388
    %v3637 = vpack.c.b16 %v2405, %v2389
    %v3638 = vpack.c.b16 %v2406, %v2390
    %v3639 = vpack.c.b16 %v2407, %v2391
    %v3640 = vpack.c.b16 %v2408, %v2392
    %v3641 = vpack.c.b16 %v2409, %v2393
    %v3642 = vpack.c.b16 %v2410, %v2394
    %v3643 = vpack.c.b16 %v2411, %v2395
    %v3644 = vpack.c.b16 %v2412, %v2396
    %v3645 = vpack.c.b16 %v2413, %v2397
    %v3646 = vpack.c.b16 %v2414, %v2398
    %v3647 = vpack.c.b16 %v2431, %v2415
    %v3648 = vpack.c.b16 %v2432, %v2416
    %v3649 = vpack.c.b16 %v2433, %v2417
    %v3650 = vpack.c.b16 %v2434, %v2418
    %v3651 = vpack.c.b16 %v2435, %v2419
    %v3652 = vpack.c.b16 %v2436, %v2420
    %v3653 = vpack.c.b16 %v2437, %v2421
    %v3654 = vpack.c.b16 %v2438, %v2422
    %v3655 = vpack.c.b16 %v2439, %v2423
    %v3656 = vpack.c.b16 %v2440, %v2424
    %v3657 = vpack.c.b16 %v2441, %v2425
    %v3658 = vpack.c.b16 %v2442, %v2426
    %v3659 = vpack.c.b16 %v2443, %v2427
    %v3660 = vpack.c.b16 %v2444, %v2428
    %v3661 = vpack.c.b16 %v2445, %v2429
    %v3662 = vpack.c.b16 %v2446, %v2430
    %v3663 = vpack.c.b16 %v2463, %v2447
    %v3664 = vpack.c.b16 %v2464, %v2448
    %v3665 = vpack.c.b16 %v2465, %v2449
    %v3666 = vpack.c.b16 %v2466, %v2450
    %v3667 = vpack.c.b16 %v2467, %v2451
    %v3668 = vpack.c.b16 %v2468, %v2452
    %v3669 = vpack.c.b16 %v2469, %v2453
    %v3670 = vpack.c.b16 %v2470, %v2454
    %v3671 = vpack.c.b16 %v2471, %v2455
    %v3672 = vpack.c.b16 %v2472, %v2456
    %v3673 = vpack.c.b16 %v2473, %v2457
    %v3674 = vpack.c.b16 %v2474, %v2458
    %v3675 = vpack.c.b16 %v2475, %v2459
    %v3676 = vpack.c.b16 %v2476, %v2460
    %v3677 = vpack.c.b16 %v2477, %v2461
    %v3678 = vpack.c.b16 %v2478, %v2462
    %v3679 = vpack.c.b16 %v2495, %v2479
    %v3680 = vpack.c.b16 %v2496, %v2480
    %v3681 = vpack.c.b16 %v2497, %v2481
    %v3682 = vpack.c.b16 %v2498, %v2482
    %v3683 = vpack.c.b16 %v2499, %v2483
    %v3684 = vpack.c.b16 %v2500, %v2484
    %v3685 = vpack.c.b16 %v2501, %v2485
    %v3686 = vpack.c.b16 %v2502, %v2486
    %v3687 = vpack.c.b16 %v2503, %v2487
    %v3688 = vpack.c.b16 %v2504, %v2488
    %v3689 = vpack.c.b16 %v2505, %v2489
    %v3690 = vpack.c.b16 %v2506, %v2490
    %v3691 = vpack.c.b16 %v2507, %v2491
    %v3692 = vpack.c.b16 %v2508, %v2492
    %v3693 = vpack.c.b16 %v2509, %v2493
    %v3694 = vpack.c.b16 %v2510, %v2494
    %v3695 = vpack.c.b16 %v2527, %v2511
    %v3696 = vpack.c.b16 %v2528, %v2512
    %v3697 = vpack.c.b16 %v2529, %v2513
    %v3698 = vpack.c.b16 %v2530, %v2514
    %v3699 = vpack.c.b16 %v2531, %v2515
    %v3700 = vpack.c.b16 %v2532, %v2516
    %v3701 = vpack.c.b16 %v2533, %v2517
    %v3702 = vpack.c.b16 %v2534, %v2518
    %v3703 = vpack.c.b16 %v2535, %v2519
    %v3704 = vpack.c.b16 %v2536, %v2520
    %v3705 = vpack.c.b16 %v2537, %v2521
    %v3706 = vpack.c.b16 %v2538, %v2522
    %v3707 = vpack.c.b16 %v2539, %v2523
    %v3708 = vpack.c.b16 %v2540, %v2524
    %v3709 = vpack.c.b16 %v2541, %v2525
    %v3710 = vpack.c.b16 %v2542, %v2526
    %v3711 = vpack.c.b16 %v2559, %v2543
    %v3712 = vpack.c.b16 %v2560, %v2544
    %v3713 = vpack.c.b16 %v2561, %v2545
    %v3714 = vpack.c.b16 %v2562, %v2546
    %v3715 = vpack.c.b16 %v2563, %v2547
    %v3716 = vpack.c.b16 %v2564, %v2548
    %v3717 = vpack.c.b16 %v2565, %v2549
    %v3718 = vpack.c.b16 %v2566, %v2550
    %v3719 = vpack.c.b16 %v2567, %v2551
    %v3720 = vpack.c.b16 %v2568, %v2552
    %v3721 = vpack.c.b16 %v2569, %v2553
    %v3722 = vpack.c.b16 %v2570, %v2554
    %v3723 = vpack.c.b16 %v2571, %v2555
    %v3724 = vpack.c.b16 %v2572, %v2556
    %v3725 = vpack.c.b16 %v2573, %v2557
    %v3726 = vpack.c.b16 %v2574, %v2558
    %v3727 = vpack.c.b16 %v2591, %v2575
    %v3728 = vpack.c.b16 %v2592, %v2576
    %v3729 = vpack.c.b16 %v2593, %v2577
    %v3730 = vpack.c.b16 %v2594, %v2578
    %v3731 = vpack.c.b16 %v2595, %v2579
    %v3732 = vpack.c.b16 %v2596, %v2580
    %v3733 = vpack.c.b16 %v2597, %v2581
    %v3734 = vpack.c.b16 %v2598, %v2582
    %v3735 = vpack.c.b16 %v2599, %v2583
    %v3736 = vpack.c.b16 %v2600, %v2584
    %v3737 = vpack.c.b16 %v2601, %v2585
    %v3738 = vpack.c.b16 %v2602, %v2586
    %v3739 = vpack.c.b16 %v2603, %v2587
    %v3740 = vpack.c.b16 %v2604, %v2588
    %v3741 = vpack.c.b16 %v2605, %v2589
    %v3742 = vpack.c.b16 %v2606, %v2590
    %v3743 = vpack.c.b16 %v2623, %v2607
    %v3744 = vpack.c.b16 %v2624, %v2608
    %v3745 = vpack.c.b16 %v2625, %v2609
    %v3746 = vpack.c.b16 %v2626, %v2610
    %v3747 = vpack.c.b16 %v2627, %v2611
    %v3748 = vpack.c.b16 %v2628, %v2612
    %v3749 = vpack.c.b16 %v2629, %v2613
    %v3750 = vpack.c.b16 %v2630, %v2614
    %v3751 = vpack.c.b16 %v2631, %v2615
    %v3752 = vpack.c.b16 %v2632, %v2616
    %v3753 = vpack.c.b16 %v2633, %v2617
    %v3754 = vpack.c.b16 %v2634, %v2618
    %v3755 = vpack.c.b16 %v2635, %v2619
    %v3756 = vpack.c.b16 %v2636, %v2620
    %v3757 = vpack.c.b16 %v2637, %v2621
    %v3758 = vpack.c.b16 %v2638, %v2622
    %v3759 = vpack.c.b16 %v2655, %v2639
    %v3760 = vpack.c.b16 %v2656, %v2640
    %v3761 = vpack.c.b16 %v2657, %v2641
    %v3762 = vpack.c.b16 %v2658, %v2642
    %v3763 = vpack.c.b16 %v2659, %v2643
    %v3764 = vpack.c.b16 %v2660, %v2644
    %v3765 = vpack.c.b16 %v2661, %v2645
    %v3766 = vpack.c.b16 %v2662, %v2646
    %v3767 = vpack.c.b16 %v2663, %v2647
    %v3768 = vpack.c.b16 %v2664, %v2648
    %v3769 = vpack.c.b16 %v2665, %v2649
    %v3770 = vpack.c.b16 %v2666, %v2650
    %v3771 = vpack.c.b16 %v2667, %v2651
    %v3772 = vpack.c.b16 %v2668, %v2652
    %v3773 = vpack.c.b16 %v2669, %v2653
    %v3774 = vpack.c.b16 %v2670, %v2654
    %v3775 = vpack.c.b16 %v2687, %v2671
    %v3776 = vpack.c.b16 %v2688, %v2672
    %v3777 = vpack.c.b16 %v2689, %v2673
    %v3778 = vpack.c.b16 %v2690, %v2674
    %v3779 = vpack.c.b16 %v2691, %v2675
    %v3780 = vpack.c.b16 %v2692, %v2676
    %v3781 = vpack.c.b16 %v2693, %v2677
    %v3782 = vpack.c.b16 %v2694, %v2678
    %v3783 = vpack.c.b16 %v2695, %v2679
    %v3784 = vpack.c.b16 %v2696, %v2680
    %v3785 = vpack.c.b16 %v2697, %v2681
    %v3786 = vpack.c.b16 %v2698, %v2682
    %v3787 = vpack.c.b16 %v2699, %v2683
    %v3788 = vpack.c.b16 %v2700, %v2684
    %v3789 = vpack.c.b16 %v2701, %v2685
    %v3790 = vpack.c.b16 %v2702, %v2686
    %v3791 = vpack.c.b16 %v2719, %v2703
    %v3792 = vpack.c.b16 %v2720, %v2704
    %v3793 = vpack.c.b16 %v2721, %v2705
    %v3794 = vpack.c.b16 %v2722, %v2706
    %v3795 = vpack.c.b16 %v2723, %v2707
    %v3796 = vpack.c.b16 %v2724, %v2708
    %v3797 = vpack.c.b16 %v2725, %v2709
    %v3798 = vpack.c.b16 %v2726, %v2710
    %v3799 = vpack.c.b16 %v2727, %v2711
    %v3800 = vpack.c.b16 %v2728, %v2712
    %v3801 = vpack.c.b16 %v2729, %v2713
    %v3802 = vpack.c.b16 %v2730, %v2714
    %v3803 = vpack.c.b16 %v2731, %v2715
    %v3804 = vpack.c.b16 %v2732, %v2716
    %v3805 = vpack.c.b16 %v2733, %v2717
    %v3806 = vpack.c.b16 %v2734, %v2718
    %v3807 = vpack.c.b16 %v2751, %v2735
    %v3808 = vpack.c.b16 %v2752, %v2736
    %v3809 = vpack.c.b16 %v2753, %v2737
    %v3810 = vpack.c.b16 %v2754, %v2738
    %v3811 = vpack.c.b16 %v2755, %v2739
    %v3812 = vpack.c.b16 %v2756, %v2740
    %v3813 = vpack.c.b16 %v2757, %v2741
    %v3814 = vpack.c.b16 %v2758, %v2742
    %v3815 = vpack.c.b16 %v2759, %v2743
    %v3816 = vpack.c.b16 %v2760, %v2744
    %v3817 = vpack.c.b16 %v2761, %v2745
    %v3818 = vpack.c.b16 %v2762, %v2746
    %v3819 = vpack.c.b16 %v2763, %v2747
    %v3820 = vpack.c.b16 %v2764, %v2748
    %v3821 = vpack.c.b16 %v2765, %v2749
    %v3822 = vpack.c.b16 %v2766, %v2750
    %v3823 = vpack.c.b16 %v2783, %v2767
    %v3824 = vpack.c.b16 %v2784, %v2768
    %v3825 = vpack.c.b16 %v2785, %v2769
    %v3826 = vpack.c.b16 %v2786, %v2770
    %v3827 = vpack.c.b16 %v2787, %v2771
    %v3828 = vpack.c.b16 %v2788, %v2772
    %v3829 = vpack.c.b16 %v2789, %v2773
    %v3830 = vpack.c.b16 %v2790, %v2774
    %v3831 = vpack.c.b16 %v2791, %v2775
    %v3832 = vpack.c.b16 %v2792, %v2776
    %v3833 = vpack.c.b16 %v2793, %v2777
    %v3834 = vpack.c.b16 %v2794, %v2778
    %v3835 = vpack.c.b16 %v2795, %v2779
    %v3836 = vpack.c.b16 %v2796, %v2780
    %v3837 = vpack.c.b16 %v2797, %v2781
    %v3838 = vpack.c.b16 %v2798, %v2782
    %v3839 = vpack.c.b16 %v2815, %v2799
    %v3840 = vpack.c.b16 %v2816, %v2800
    %v3841 = vpack.c.b16 %v2817, %v2801
    %v3842 = vpack.c.b16 %v2818, %v2802
    %v3843 = vpack.c.b16 %v2819, %v2803
    %v3844 = vpack.c.b16 %v2820, %v2804
    %v3845 = vpack.c.b16 %v2821, %v2805
    %v3846 = vpack.c.b16 %v2822, %v2806
    %v3847 = vpack.c.b16 %v2823, %v2807
    %v3848 = vpack.c.b16 %v2824, %v2808
    %v3849 = vpack.c.b16 %v2825, %v2809
    %v3850 = vpack.c.b16 %v2826, %v2810
    %v3851 = vpack.c.b16 %v2827, %v2811
    %v3852 = vpack.c.b16 %v2828, %v2812
    %v3853 = vpack.c.b16 %v2829, %v2813
    %v3854 = vpack.c.b16 %v2830, %v2814
    %v3855 = vpack.c.b16 %v2847, %v2831
    %v3856 = vpack.c.b16 %v2848, %v2832
    %v3857 = vpack.c.b16 %v2849, %v2833
    %v3858 = vpack.c.b16 %v2850, %v2834
    %v3859 = vpack.c.b16 %v2851, %v2835
    %v3860 = vpack.c.b16 %v2852, %v2836
    %v3861 = vpack.c.b16 %v2853, %v2837
    %v3862 = vpack.c.b16 %v2854, %v2838
    %v3863 = vpack.c.b16 %v2855, %v2839
    %v3864 = vpack.c.b16 %v2856, %v2840
    %v3865 = vpack.c.b16 %v2857, %v2841
    %v3866 = vpack.c.b16 %v2858, %v2842
    %v3867 = vpack.c.b16 %v2859, %v2843
    %v3868 = vpack.c.b16 %v2860, %v2844
    %v3869 = vpack.c.b16 %v2861, %v2845
    %v3870 = vpack.c.b16 %v2862, %v2846
    %v3871 = vpack.c.b16 %v2879, %v2863
    %v3872 = vpack.c.b16 %v2880, %v2864
    %v3873 = vpack.c.b16 %v2881, %v2865
    %v3874 = vpack.c.b16 %v2882, %v2866
    %v3875 = vpack.c.b16 %v2883, %v2867
    %v3876 = vpack.c.b16 %v2884, %v2868
    %v3877 = vpack.c.b16 %v2885, %v2869
    %v3878 = vpack.c.b16 %v2886, %v2870
    %v3879 = vpack.c.b16 %v2887, %v2871
    %v3880 = vpack.c.b16 %v2888, %v2872
    %v3881 = vpack.c.b16 %v2889, %v2873
    %v3882 = vpack.c.b16 %v2890, %v2874
    %v3883 = vpack.c.b16 %v2891, %v2875
    %v3884 = vpack.c.b16 %v2892, %v2876
    %v3885 = vpack.c.b16 %v2893, %v2877
    %v3886 = vpack.c.b16 %v2894, %v2878
    %v3887 = vpack.c.b16 %v2911, %v2895
    %v3888 = vpack.c.b16 %v2912, %v2896
    %v3889 = vpack.c.b16 %v2913, %v2897
    %v3890 = vpack.c.b16 %v2914, %v2898
    %v3891 = vpack.c.b16 %v2915, %v2899
    %v3892 = vpack.c.b16 %v2916, %v2900
    %v3893 = vpack.c.b16 %v2917, %v2901
    %v3894 = vpack.c.b16 %v2918, %v2902
    %v3895 = vpack.c.b16 %v2919, %v2903
    %v3896 = vpack.c.b16 %v2920, %v2904
    %v3897 = vpack.c.b16 %v2921, %v2905
    %v3898 = vpack.c.b16 %v2922, %v2906
    %v3899 = vpack.c.b16 %v2923, %v2907
    %v3900 = vpack.c.b16 %v2924, %v2908
    %v3901 = vpack.c.b16 %v2925, %v2909
    %v3902 = vpack.c.b16 %v2926, %v2910
    %v3903 = vpack.c.b16 %v2943, %v2927
    %v3904 = vpack.c.b16 %v2944, %v2928
    %v3905 = vpack.c.b16 %v2945, %v2929
    %v3906 = vpack.c.b16 %v2946, %v2930
    %v3907 = vpack.c.b16 %v2947, %v2931
    %v3908 = vpack.c.b16 %v2948, %v2932
    %v3909 = vpack.c.b16 %v2949, %v2933
    %v3910 = vpack.c.b16 %v2950, %v2934
    %v3911 = vpack.c.b16 %v2951, %v2935
    %v3912 = vpack.c.b16 %v2952, %v2936
    %v3913 = vpack.c.b16 %v2953, %v2937
    %v3914 = vpack.c.b16 %v2954, %v2938
    %v3915 = vpack.c.b16 %v2955, %v2939
    %v3916 = vpack.c.b16 %v2956, %v2940
    %v3917 = vpack.c.b16 %v2957, %v2941
    %v3918 = vpack.c.b16 %v2958, %v2942
    %v3919 = vpack.c.b16 %v2975, %v2959
    %v3920 = vpack.c.b16 %v2976, %v2960
    %v3921 = vpack.c.b16 %v2977, %v2961
    %v3922 = vpack.c.b16 %v2978, %v2962
    %v3923 = vpack.c.b16 %v2979, %v2963
    %v3924 = vpack.c.b16 %v2980, %v2964
    %v3925 = vpack.c.b16 %v2981, %v2965
    %v3926 = vpack.c.b16 %v2982, %v2966
    %v3927 = vpack.c.b16 %v2983, %v2967
    %v3928 = vpack.c.b16 %v2984, %v2968
    %v3929 = vpack.c.b16 %v2985, %v2969
    %v3930 = vpack.c.b16 %v2986, %v2970
    %v3931 = vpack.c.b16 %v2987, %v2971
    %v3932 = vpack.c.b16 %v2988, %v2972
    %v3933 = vpack.c.b16 %v2989, %v2973
    %v3934 = vpack.c.b16 %v2990, %v2974
    %v3935 = vpack.c.b16 %v3007, %v2991
    %v3936 = vpack.c.b16 %v3008, %v2992
    %v3937 = vpack.c.b16 %v3009, %v2993
    %v3938 = vpack.c.b16 %v3010, %v2994
    %v3939 = vpack.c.b16 %v3011, %v2995
    %v3940 = vpack.c.b16 %v3012, %v2996
    %v3941 = vpack.c.b16 %v3013, %v2997
    %v3942 = vpack.c.b16 %v3014, %v2998
    %v3943 = vpack.c.b16 %v3015, %v2999
    %v3944 = vpack.c.b16 %v3016, %v3000
    %v3945 = vpack.c.b16 %v3017, %v3001
    %v3946 = vpack.c.b16 %v3018, %v3002
    %v3947 = vpack.c.b16 %v3019, %v3003
    %v3948 = vpack.c.b16 %v3020, %v3004
    %v3949 = vpack.c.b16 %v3021, %v3005
    %v3950 = vpack.c.b16 %v3022, %v3006
    %v3951 = vpack.c.b16 %v3039, %v3023
    %v3952 = vpack.c.b16 %v3040, %v3024
    %v3953 = vpack.c.b16 %v3041, %v3025
    %v3954 = vpack.c.b16 %v3042, %v3026
    %v3955 = vpack.c.b16 %v3043, %v3027
    %v3956 = vpack.c.b16 %v3044, %v3028
    %v3957 = vpack.c.b16 %v3045, %v3029
    %v3958 = vpack.c.b16 %v3046, %v3030
    %v3959 = vpack.c.b16 %v3047, %v3031
    %v3960 = vpack.c.b16 %v3048, %v3032
    %v3961 = vpack.c.b16 %v3049, %v3033
    %v3962 = vpack.c.b16 %v3050, %v3034
    %v3963 = vpack.c.b16 %v3051, %v3035
    %v3964 = vpack.c.b16 %v3052, %v3036
    %v3965 = vpack.c.b16 %v3053, %v3037
    %v3966 = vpack.c.b16 %v3054, %v3038
    %v3967 = vpack.c.b16 %v3071, %v3055
    %v3968 = vpack.c.b16 %v3072, %v3056
    %v3969 = vpack.c.b16 %v3073, %v3057
    %v3970 = vpack.c.b16 %v3074, %v3058
    %v3971 = vpack.c.b16 %v3075, %v3059
    %v3972 = vpack.c.b16 %v3076, %v3060
    %v3973 = vpack.c.b16 %v3077, %v3061
    %v3974 = vpack.c.b16 %v3078, %v3062
    %v3975 = vpack.c.b16 %v3079, %v3063
    %v3976 = vpack.c.b16 %v3080, %v3064
    %v3977 = vpack.c.b16 %v3081, %v3065
    %v3978 = vpack.c.b16 %v3082, %v3066
    %v3979 = vpack.c.b16 %v3083, %v3067
    %v3980 = vpack.c.b16 %v3084, %v3068
    %v3981 = vpack.c.b16 %v3085, %v3069
    %v3982 = vpack.c.b16 %v3086, %v3070
    %v3983 = vpack.c.b16 %v3103, %v3087
    %v3984 = vpack.c.b16 %v3104, %v3088
    %v3985 = vpack.c.b16 %v3105, %v3089
    %v3986 = vpack.c.b16 %v3106, %v3090
    %v3987 = vpack.c.b16 %v3107, %v3091
    %v3988 = vpack.c.b16 %v3108, %v3092
    %v3989 = vpack.c.b16 %v3109, %v3093
    %v3990 = vpack.c.b16 %v3110, %v3094
    %v3991 = vpack.c.b16 %v3111, %v3095
    %v3992 = vpack.c.b16 %v3112, %v3096
    %v3993 = vpack.c.b16 %v3113, %v3097
    %v3994 = vpack.c.b16 %v3114, %v3098
    %v3995 = vpack.c.b16 %v3115, %v3099
    %v3996 = vpack.c.b16 %v3116, %v3100
    %v3997 = vpack.c.b16 %v3117, %v3101
    %v3998 = vpack.c.b16 %v3118, %v3102
    %v3999 = vpack.c.b16 %v3135, %v3119
    %v4000 = vpack.c.b16 %v3136, %v3120
    %v4001 = vpack.c.b16 %v3137, %v3121
    %v4002 = vpack.c.b16 %v3138, %v3122
    %v4003 = vpack.c.b16 %v3139, %v3123
    %v4004 = vpack.c.b16 %v3140, %v3124
    %v4005 = vpack.c.b16 %v3141, %v3125
    %v4006 = vpack.c.b16 %v3142, %v3126
    %v4007 = vpack.c.b16 %v3143, %v3127
    %v4008 = vpack.c.b16 %v3144, %v3128
    %v4009 = vpack.c.b16 %v3145, %v3129
    %v4010 = vpack.c.b16 %v3146, %v3130
    %v4011 = vpack.c.b16 %v3147, %v3131
    %v4012 = vpack.c.b16 %v3148, %v3132
    %v4013 = vpack.c.b16 %v3149, %v3133
    %v4014 = vpack.c.b16 %v3150, %v3134
    %v4015 = vpack.c.b16 %v3167, %v3151
    %v4016 = vpack.c.b16 %v3168, %v3152
    %v4017 = vpack.c.b16 %v3169, %v3153
    %v4018 = vpack.c.b16 %v3170, %v3154
    %v4019 = vpack.c.b16 %v3171, %v3155
    %v4020 = vpack.c.b16 %v3172, %v3156
    %v4021 = vpack.c.b16 %v3173, %v3157
    %v4022 = vpack.c.b16 %v3174, %v3158
    %v4023 = vpack.c.b16 %v3175, %v3159
    %v4024 = vpack.c.b16 %v3176, %v3160
    %v4025 = vpack.c.b16 %v3177, %v3161
    %v4026 = vpack.c.b16 %v3178, %v3162
    %v4027 = vpack.c.b16 %v3179, %v3163
    %v4028 = vpack.c.b16 %v3180, %v3164
    %v4029 = vpack.c.b16 %v3181, %v3165
    %v4030 = vpack.c.b16 %v3182, %v3166
    %v4031 = vpack.c.b16 %v3199, %v3183
    %v4032 = vpack.c.b16 %v3200, %v3184
    %v4033 = vpack.c.b16 %v3201, %v3185
    %v4034 = vpack.c.b16 %v3202, %v3186
    %v4035 = vpack.c.b16 %v3203, %v3187
    %v4036 = vpack.c.b16 %v3204, %v3188
    %v4037 = vpack.c.b16 %v3205, %v3189
    %v4038 = vpack.c.b16 %v3206, %v3190
    %v4039 = vpack.c.b16 %v3207, %v3191
    %v4040 = vpack.c.b16 %v3208, %v3192
    %v4041 = vpack.c.b16 %v3209, %v3193
    %v4042 = vpack.c.b16 %v3210, %v3194
    %v4043 = vpack.c.b16 %v3211, %v3195
    %v4044 = vpack.c.b16 %v3212, %v3196
    %v4045 = vpack.c.b16 %v3213, %v3197
    %v4046 = vpack.c.b16 %v3214, %v3198
    %v4047 = vpack.c.b16 %v3231, %v3215
    %v4048 = vpack.c.b16 %v3232, %v3216
    %v4049 = vpack.c.b16 %v3233, %v3217
    %v4050 = vpack.c.b16 %v3234, %v3218
    %v4051 = vpack.c.b16 %v3235, %v3219
    %v4052 = vpack.c.b16 %v3236, %v3220
    %v4053 = vpack.c.b16 %v3237, %v3221
    %v4054 = vpack.c.b16 %v3238, %v3222
    %v4055 = vpack.c.b16 %v3239, %v3223
    %v4056 = vpack.c.b16 %v3240, %v3224
    %v4057 = vpack.c.b16 %v3241, %v3225
    %v4058 = vpack.c.b16 %v3242, %v3226
    %v4059 = vpack.c.b16 %v3243, %v3227
    %v4060 = vpack.c.b16 %v3244, %v3228
    %v4061 = vpack.c.b16 %v3245, %v3229
    %v4062 = vpack.c.b16 %v3246, %v3230
    %v4063 = vpack.c.b16 %v3263, %v3247
    %v4064 = vpack.c.b16 %v3264, %v3248
    %v4065 = vpack.c.b16 %v3265, %v3249
    %v4066 = vpack.c.b16 %v3266, %v3250
    %v4067 = vpack.c.b16 %v3267, %v3251
    %v4068 = vpack.c.b16 %v3268, %v3252
    %v4069 = vpack.c.b16 %v3269, %v3253
    %v4070 = vpack.c.b16 %v3270, %v3254
    %v4071 = vpack.c.b16 %v3271, %v3255
    %v4072 = vpack.c.b16 %v3272, %v3256
    %v4073 = vpack.c.b16 %v3273, %v3257
    %v4074 = vpack.c.b16 %v3274, %v3258
    %v4075 = vpack.c.b16 %v3275, %v3259
    %v4076 = vpack.c.b16 %v3276, %v3260
    %v4077 = vpack.c.b16 %v3277, %v3261
    %v4078 = vpack.c.b16 %v3278, %v3262
    %v4079 = vpack.c.b16 %v3295, %v3279
    %v4080 = vpack.c.b16 %v3296, %v3280
    %v4081 = vpack.c.b16 %v3297, %v3281
    %v4082 = vpack.c.b16 %v3298, %v3282
    %v4083 = vpack.c.b16 %v3299, %v3283
    %v4084 = vpack.c.b16 %v3300, %v3284
    %v4085 = vpack.c.b16 %v3301, %v3285
    %v4086 = vpack.c.b16 %v3302, %v3286
    %v4087 = vpack.c.b16 %v3303, %v3287
    %v4088 = vpack.c.b16 %v3304, %v3288
    %v4089 = vpack.c.b16 %v3305, %v3289
    %v4090 = vpack.c.b16 %v3306, %v3290
    %v4091 = vpack.c.b16 %v3307, %v3291
    %v4092 = vpack.c.b16 %v3308, %v3292
    %v4093 = vpack.c.b16 %v3309, %v3293
    %v4094 = vpack.c.b16 %v3310, %v3294
    %vm4879 = vcmask 130048
    %v4881 = vsel %vm4879, %v952, 0
    %4883 = vmatpush.bf16.msra.mxu0 %v3423
    %4884 = vmatpush.bf16.msra.mxu0 %v3407
    %4885 = vmatpush.bf16.msra.mxu0 %v3391
    %4886 = vmatpush.bf16.msra.mxu0 %v3375
    %4887 = vmatpush.bf16.msra.mxu0 %v3359
    %4888 = vmatpush.bf16.msra.mxu0 %v3343
    %4889 = vmatpush.bf16.msra.mxu0 %v3327
    %4890 = vmatpush.bf16.msra.mxu0 %v3311
    %4891 = vmatmul.bf16.gmra.mxu0 %v946
    %v4892 = vpop.f32.mrf.mxu0
    %v4893 = vadd.f32 %v892, %v4892
    %v4894 = vpop.f32.mrf.mxu0
    %v4895 = vadd.f32 %v892, %v4894
    %4896 = vdwg.mxu0
    %4897 = vmatpush.bf16.msra.mxu0 %v3551
    %4898 = vmatpush.bf16.msra.mxu0 %v3535
    %4899 = vmatpush.bf16.msra.mxu0 %v3519
    %4900 = vmatpush.bf16.msra.mxu0 %v3503
    %4901 = vmatpush.bf16.msra.mxu0 %v3487
    %4902 = vmatpush.bf16.msra.mxu0 %v3471
    %4903 = vmatpush.bf16.msra.mxu0 %v3455
    %4904 = vmatpush.bf16.msra.mxu0 %v3439
    %4905 = vmatmul.bf16.gmra.mxu0 %v947
    %v4906 = vpop.f32.mrf.mxu0
    %v4907 = vadd.f32 %v4893, %v4906
    %v4908 = vpop.f32.mrf.mxu0
    %v4909 = vadd.f32 %v4895, %v4908
    %4910 = vdwg.mxu0
    %4911 = vmatpush.bf16.msra.mxu0 %v3679
    %4912 = vmatpush.bf16.msra.mxu0 %v3663
    %4913 = vmatpush.bf16.msra.mxu0 %v3647
    %4914 = vmatpush.bf16.msra.mxu0 %v3631
    %4915 = vmatpush.bf16.msra.mxu0 %v3615
    %4916 = vmatpush.bf16.msra.mxu0 %v3599
    %4917 = vmatpush.bf16.msra.mxu0 %v3583
    %4918 = vmatpush.bf16.msra.mxu0 %v3567
    %4919 = vmatmul.bf16.gmra.mxu0 %v948
    %v4920 = vpop.f32.mrf.mxu0
    %v4921 = vadd.f32 %v4907, %v4920
    %v4922 = vpop.f32.mrf.mxu0
    %v4923 = vadd.f32 %v4909, %v4922
    %4924 = vdwg.mxu0
    %4925 = vmatpush.bf16.msra.mxu0 %v3807
    %4926 = vmatpush.bf16.msra.mxu0 %v3791
    %4927 = vmatpush.bf16.msra.mxu0 %v3775
    %4928 = vmatpush.bf16.msra.mxu0 %v3759
    %4929 = vmatpush.bf16.msra.mxu0 %v3743
    %4930 = vmatpush.bf16.msra.mxu0 %v3727
    %4931 = vmatpush.bf16.msra.mxu0 %v3711
    %4932 = vmatpush.bf16.msra.mxu0 %v3695
    %4933 = vmatmul.bf16.gmra.mxu0 %v949
    %v4934 = vpop.f32.mrf.mxu0
    %v4935 = vadd.f32 %v4921, %v4934
    %v4936 = vpop.f32.mrf.mxu0
    %v4937 = vadd.f32 %v4923, %v4936
    %4938 = vdwg.mxu0
    %4939 = vmatpush.bf16.msra.mxu0 %v3935
    %4940 = vmatpush.bf16.msra.mxu0 %v3919
    %4941 = vmatpush.bf16.msra.mxu0 %v3903
    %4942 = vmatpush.bf16.msra.mxu0 %v3887
    %4943 = vmatpush.bf16.msra.mxu0 %v3871
    %4944 = vmatpush.bf16.msra.mxu0 %v3855
    %4945 = vmatpush.bf16.msra.mxu0 %v3839
    %4946 = vmatpush.bf16.msra.mxu0 %v3823
    %4947 = vmatmul.bf16.gmra.mxu0 %v950
    %v4948 = vpop.f32.mrf.mxu0
    %v4949 = vadd.f32 %v4935, %v4948
    %v4950 = vpop.f32.mrf.mxu0
    %v4951 = vadd.f32 %v4937, %v4950
    %4952 = vdwg.mxu0
    %4953 = vmatpush.bf16.msra.mxu0 %v4063
    %4954 = vmatpush.bf16.msra.mxu0 %v4047
    %4955 = vmatpush.bf16.msra.mxu0 %v4031
    %4956 = vmatpush.bf16.msra.mxu0 %v4015
    %4957 = vmatpush.bf16.msra.mxu0 %v3999
    %4958 = vmatpush.bf16.msra.mxu0 %v3983
    %4959 = vmatpush.bf16.msra.mxu0 %v3967
    %4960 = vmatpush.bf16.msra.mxu0 %v3951
    %4961 = vmatmul.bf16.gmra.mxu0 %v951
    %v4962 = vpop.f32.mrf.mxu0
    %v4963 = vadd.f32 %v4949, %v4962
    %v4964 = vpop.f32.mrf.mxu0
    %v4965 = vadd.f32 %v4951, %v4964
    %4966 = vdwg.mxu0
    %4967 = vmatpush.bf16.msra.mxu0 0
    %4968 = vmatpush.bf16.msra.mxu0 0
    %4969 = vmatpush.bf16.msra.mxu0 0
    %4970 = vmatpush.bf16.msra.mxu0 0
    %4971 = vmatpush.bf16.msra.mxu0 0
    %4972 = vmatpush.bf16.msra.mxu0 0
    %4973 = vmatpush.bf16.msra.mxu0 0
    %4974 = vmatpush.bf16.msra.mxu0 %v4079
    %4975 = vmatmul.bf16.gmra.mxu0 %v4881
    %v4976 = vpop.f32.mrf.mxu0
    %v4977 = vadd.f32 %v4963, %v4976
    %v4978 = vpop.f32.mrf.mxu0
    %v4979 = vadd.f32 %v4965, %v4978
    %4980 = vdwg.mxu0
    %4981 = vmatpush.bf16.msra.mxu0 %v3424
    %4982 = vmatpush.bf16.msra.mxu0 %v3408
    %4983 = vmatpush.bf16.msra.mxu0 %v3392
    %4984 = vmatpush.bf16.msra.mxu0 %v3376
    %4985 = vmatpush.bf16.msra.mxu0 %v3360
    %4986 = vmatpush.bf16.msra.mxu0 %v3344
    %4987 = vmatpush.bf16.msra.mxu0 %v3328
    %4988 = vmatpush.bf16.msra.mxu0 %v3312
    %4989 = vmatmul.bf16.gmra.mxu0 %v946
    %v4990 = vpop.f32.mrf.mxu0
    %v4991 = vadd.f32 %v893, %v4990
    %v4992 = vpop.f32.mrf.mxu0
    %v4993 = vadd.f32 %v893, %v4992
    %4994 = vdwg.mxu0
    %4995 = vmatpush.bf16.msra.mxu0 %v3552
    %4996 = vmatpush.bf16.msra.mxu0 %v3536
    %4997 = vmatpush.bf16.msra.mxu0 %v3520
    %4998 = vmatpush.bf16.msra.mxu0 %v3504
    %4999 = vmatpush.bf16.msra.mxu0 %v3488
    %5000 = vmatpush.bf16.msra.mxu0 %v3472
    %5001 = vmatpush.bf16.msra.mxu0 %v3456
    %5002 = vmatpush.bf16.msra.mxu0 %v3440
    %5003 = vmatmul.bf16.gmra.mxu0 %v947
    %v5004 = vpop.f32.mrf.mxu0
    %v5005 = vadd.f32 %v4991, %v5004
    %v5006 = vpop.f32.mrf.mxu0
    %v5007 = vadd.f32 %v4993, %v5006
    %5008 = vdwg.mxu0
    %5009 = vmatpush.bf16.msra.mxu0 %v3680
    %5010 = vmatpush.bf16.msra.mxu0 %v3664
    %5011 = vmatpush.bf16.msra.mxu0 %v3648
    %5012 = vmatpush.bf16.msra.mxu0 %v3632
    %5013 = vmatpush.bf16.msra.mxu0 %v3616
    %5014 = vmatpush.bf16.msra.mxu0 %v3600
    %5015 = vmatpush.bf16.msra.mxu0 %v3584
    %5016 = vmatpush.bf16.msra.mxu0 %v3568
    %5017 = vmatmul.bf16.gmra.mxu0 %v948
    %v5018 = vpop.f32.mrf.mxu0
    %v5019 = vadd.f32 %v5005, %v5018
    %v5020 = vpop.f32.mrf.mxu0
    %v5021 = vadd.f32 %v5007, %v5020
    %5022 = vdwg.mxu0
    %5023 = vmatpush.bf16.msra.mxu0 %v3808
    %5024 = vmatpush.bf16.msra.mxu0 %v3792
    %5025 = vmatpush.bf16.msra.mxu0 %v3776
    %5026 = vmatpush.bf16.msra.mxu0 %v3760
    %5027 = vmatpush.bf16.msra.mxu0 %v3744
    %5028 = vmatpush.bf16.msra.mxu0 %v3728
    %5029 = vmatpush.bf16.msra.mxu0 %v3712
    %5030 = vmatpush.bf16.msra.mxu0 %v3696
    %5031 = vmatmul.bf16.gmra.mxu0 %v949
    %v5032 = vpop.f32.mrf.mxu0
    %v5033 = vadd.f32 %v5019, %v5032
    %v5034 = vpop.f32.mrf.mxu0
    %v5035 = vadd.f32 %v5021, %v5034
    %5036 = vdwg.mxu0
    %5037 = vmatpush.bf16.msra.mxu0 %v3936
    %5038 = vmatpush.bf16.msra.mxu0 %v3920
    %5039 = vmatpush.bf16.msra.mxu0 %v3904
    %5040 = vmatpush.bf16.msra.mxu0 %v3888
    %5041 = vmatpush.bf16.msra.mxu0 %v3872
    %5042 = vmatpush.bf16.msra.mxu0 %v3856
    %5043 = vmatpush.bf16.msra.mxu0 %v3840
    %5044 = vmatpush.bf16.msra.mxu0 %v3824
    %5045 = vmatmul.bf16.gmra.mxu0 %v950
    %v5046 = vpop.f32.mrf.mxu0
    %v5047 = vadd.f32 %v5033, %v5046
    %v5048 = vpop.f32.mrf.mxu0
    %v5049 = vadd.f32 %v5035, %v5048
    %5050 = vdwg.mxu0
    %5051 = vmatpush.bf16.msra.mxu0 %v4064
    %5052 = vmatpush.bf16.msra.mxu0 %v4048
    %5053 = vmatpush.bf16.msra.mxu0 %v4032
    %5054 = vmatpush.bf16.msra.mxu0 %v4016
    %5055 = vmatpush.bf16.msra.mxu0 %v4000
    %5056 = vmatpush.bf16.msra.mxu0 %v3984
    %5057 = vmatpush.bf16.msra.mxu0 %v3968
    %5058 = vmatpush.bf16.msra.mxu0 %v3952
    %5059 = vmatmul.bf16.gmra.mxu0 %v951
    %v5060 = vpop.f32.mrf.mxu0
    %v5061 = vadd.f32 %v5047, %v5060
    %v5062 = vpop.f32.mrf.mxu0
    %v5063 = vadd.f32 %v5049, %v5062
    %5064 = vdwg.mxu0
    %5065 = vmatpush.bf16.msra.mxu0 0
    %5066 = vmatpush.bf16.msra.mxu0 0
    %5067 = vmatpush.bf16.msra.mxu0 0
    %5068 = vmatpush.bf16.msra.mxu0 0
    %5069 = vmatpush.bf16.msra.mxu0 0
    %5070 = vmatpush.bf16.msra.mxu0 0
    %5071 = vmatpush.bf16.msra.mxu0 0
    %5072 = vmatpush.bf16.msra.mxu0 %v4080
    %5073 = vmatmul.bf16.gmra.mxu0 %v4881
    %v5074 = vpop.f32.mrf.mxu0
    %v5075 = vadd.f32 %v5061, %v5074
    %v5076 = vpop.f32.mrf.mxu0
    %v5077 = vadd.f32 %v5063, %v5076
    %5078 = vdwg.mxu0
    %5079 = vmatpush.bf16.msra.mxu0 %v3425
    %5080 = vmatpush.bf16.msra.mxu0 %v3409
    %5081 = vmatpush.bf16.msra.mxu0 %v3393
    %5082 = vmatpush.bf16.msra.mxu0 %v3377
    %5083 = vmatpush.bf16.msra.mxu0 %v3361
    %5084 = vmatpush.bf16.msra.mxu0 %v3345
    %5085 = vmatpush.bf16.msra.mxu0 %v3329
    %5086 = vmatpush.bf16.msra.mxu0 %v3313
    %5087 = vmatmul.bf16.gmra.mxu0 %v946
    %v5088 = vpop.f32.mrf.mxu0
    %v5089 = vadd.f32 %v894, %v5088
    %v5090 = vpop.f32.mrf.mxu0
    %v5091 = vadd.f32 %v894, %v5090
    %5092 = vdwg.mxu0
    %5093 = vmatpush.bf16.msra.mxu0 %v3553
    %5094 = vmatpush.bf16.msra.mxu0 %v3537
    %5095 = vmatpush.bf16.msra.mxu0 %v3521
    %5096 = vmatpush.bf16.msra.mxu0 %v3505
    %5097 = vmatpush.bf16.msra.mxu0 %v3489
    %5098 = vmatpush.bf16.msra.mxu0 %v3473
    %5099 = vmatpush.bf16.msra.mxu0 %v3457
    %5100 = vmatpush.bf16.msra.mxu0 %v3441
    %5101 = vmatmul.bf16.gmra.mxu0 %v947
    %v5102 = vpop.f32.mrf.mxu0
    %v5103 = vadd.f32 %v5089, %v5102
    %v5104 = vpop.f32.mrf.mxu0
    %v5105 = vadd.f32 %v5091, %v5104
    %5106 = vdwg.mxu0
    %5107 = vmatpush.bf16.msra.mxu0 %v3681
    %5108 = vmatpush.bf16.msra.mxu0 %v3665
    %5109 = vmatpush.bf16.msra.mxu0 %v3649
    %5110 = vmatpush.bf16.msra.mxu0 %v3633
    %5111 = vmatpush.bf16.msra.mxu0 %v3617
    %5112 = vmatpush.bf16.msra.mxu0 %v3601
    %5113 = vmatpush.bf16.msra.mxu0 %v3585
    %5114 = vmatpush.bf16.msra.mxu0 %v3569
    %5115 = vmatmul.bf16.gmra.mxu0 %v948
    %v5116 = vpop.f32.mrf.mxu0
    %v5117 = vadd.f32 %v5103, %v5116
    %v5118 = vpop.f32.mrf.mxu0
    %v5119 = vadd.f32 %v5105, %v5118
    %5120 = vdwg.mxu0
    %5121 = vmatpush.bf16.msra.mxu0 %v3809
    %5122 = vmatpush.bf16.msra.mxu0 %v3793
    %5123 = vmatpush.bf16.msra.mxu0 %v3777
    %5124 = vmatpush.bf16.msra.mxu0 %v3761
    %5125 = vmatpush.bf16.msra.mxu0 %v3745
    %5126 = vmatpush.bf16.msra.mxu0 %v3729
    %5127 = vmatpush.bf16.msra.mxu0 %v3713
    %5128 = vmatpush.bf16.msra.mxu0 %v3697
    %5129 = vmatmul.bf16.gmra.mxu0 %v949
    %v5130 = vpop.f32.mrf.mxu0
    %v5131 = vadd.f32 %v5117, %v5130
    %v5132 = vpop.f32.mrf.mxu0
    %v5133 = vadd.f32 %v5119, %v5132
    %5134 = vdwg.mxu0
    %5135 = vmatpush.bf16.msra.mxu0 %v3937
    %5136 = vmatpush.bf16.msra.mxu0 %v3921
    %5137 = vmatpush.bf16.msra.mxu0 %v3905
    %5138 = vmatpush.bf16.msra.mxu0 %v3889
    %5139 = vmatpush.bf16.msra.mxu0 %v3873
    %5140 = vmatpush.bf16.msra.mxu0 %v3857
    %5141 = vmatpush.bf16.msra.mxu0 %v3841
    %5142 = vmatpush.bf16.msra.mxu0 %v3825
    %5143 = vmatmul.bf16.gmra.mxu0 %v950
    %v5144 = vpop.f32.mrf.mxu0
    %v5145 = vadd.f32 %v5131, %v5144
    %v5146 = vpop.f32.mrf.mxu0
    %v5147 = vadd.f32 %v5133, %v5146
    %5148 = vdwg.mxu0
    %5149 = vmatpush.bf16.msra.mxu0 %v4065
    %5150 = vmatpush.bf16.msra.mxu0 %v4049
    %5151 = vmatpush.bf16.msra.mxu0 %v4033
    %5152 = vmatpush.bf16.msra.mxu0 %v4017
    %5153 = vmatpush.bf16.msra.mxu0 %v4001
    %5154 = vmatpush.bf16.msra.mxu0 %v3985
    %5155 = vmatpush.bf16.msra.mxu0 %v3969
    %5156 = vmatpush.bf16.msra.mxu0 %v3953
    %5157 = vmatmul.bf16.gmra.mxu0 %v951
    %v5158 = vpop.f32.mrf.mxu0
    %v5159 = vadd.f32 %v5145, %v5158
    %v5160 = vpop.f32.mrf.mxu0
    %v5161 = vadd.f32 %v5147, %v5160
    %5162 = vdwg.mxu0
    %5163 = vmatpush.bf16.msra.mxu0 0
    %5164 = vmatpush.bf16.msra.mxu0 0
    %5165 = vmatpush.bf16.msra.mxu0 0
    %5166 = vmatpush.bf16.msra.mxu0 0
    %5167 = vmatpush.bf16.msra.mxu0 0
    %5168 = vmatpush.bf16.msra.mxu0 0
    %5169 = vmatpush.bf16.msra.mxu0 0
    %5170 = vmatpush.bf16.msra.mxu0 %v4081
    %5171 = vmatmul.bf16.gmra.mxu0 %v4881
    %v5172 = vpop.f32.mrf.mxu0
    %v5173 = vadd.f32 %v5159, %v5172
    %v5174 = vpop.f32.mrf.mxu0
    %v5175 = vadd.f32 %v5161, %v5174
    %5176 = vdwg.mxu0
    %5177 = vmatpush.bf16.msra.mxu0 %v3426
    %5178 = vmatpush.bf16.msra.mxu0 %v3410
    %5179 = vmatpush.bf16.msra.mxu0 %v3394
    %5180 = vmatpush.bf16.msra.mxu0 %v3378
    %5181 = vmatpush.bf16.msra.mxu0 %v3362
    %5182 = vmatpush.bf16.msra.mxu0 %v3346
    %5183 = vmatpush.bf16.msra.mxu0 %v3330
    %5184 = vmatpush.bf16.msra.mxu0 %v3314
    %5185 = vmatmul.bf16.gmra.mxu0 %v946
    %v5186 = vpop.f32.mrf.mxu0
    %v5187 = vadd.f32 %v895, %v5186
    %v5188 = vpop.f32.mrf.mxu0
    %v5189 = vadd.f32 %v895, %v5188
    %5190 = vdwg.mxu0
    %5191 = vmatpush.bf16.msra.mxu0 %v3554
    %5192 = vmatpush.bf16.msra.mxu0 %v3538
    %5193 = vmatpush.bf16.msra.mxu0 %v3522
    %5194 = vmatpush.bf16.msra.mxu0 %v3506
    %5195 = vmatpush.bf16.msra.mxu0 %v3490
    %5196 = vmatpush.bf16.msra.mxu0 %v3474
    %5197 = vmatpush.bf16.msra.mxu0 %v3458
    %5198 = vmatpush.bf16.msra.mxu0 %v3442
    %5199 = vmatmul.bf16.gmra.mxu0 %v947
    %v5200 = vpop.f32.mrf.mxu0
    %v5201 = vadd.f32 %v5187, %v5200
    %v5202 = vpop.f32.mrf.mxu0
    %v5203 = vadd.f32 %v5189, %v5202
    %5204 = vdwg.mxu0
    %5205 = vmatpush.bf16.msra.mxu0 %v3682
    %5206 = vmatpush.bf16.msra.mxu0 %v3666
    %5207 = vmatpush.bf16.msra.mxu0 %v3650
    %5208 = vmatpush.bf16.msra.mxu0 %v3634
    %5209 = vmatpush.bf16.msra.mxu0 %v3618
    %5210 = vmatpush.bf16.msra.mxu0 %v3602
    %5211 = vmatpush.bf16.msra.mxu0 %v3586
    %5212 = vmatpush.bf16.msra.mxu0 %v3570
    %5213 = vmatmul.bf16.gmra.mxu0 %v948
    %v5214 = vpop.f32.mrf.mxu0
    %v5215 = vadd.f32 %v5201, %v5214
    %v5216 = vpop.f32.mrf.mxu0
    %v5217 = vadd.f32 %v5203, %v5216
    %5218 = vdwg.mxu0
    %5219 = vmatpush.bf16.msra.mxu0 %v3810
    %5220 = vmatpush.bf16.msra.mxu0 %v3794
    %5221 = vmatpush.bf16.msra.mxu0 %v3778
    %5222 = vmatpush.bf16.msra.mxu0 %v3762
    %5223 = vmatpush.bf16.msra.mxu0 %v3746
    %5224 = vmatpush.bf16.msra.mxu0 %v3730
    %5225 = vmatpush.bf16.msra.mxu0 %v3714
    %5226 = vmatpush.bf16.msra.mxu0 %v3698
    %5227 = vmatmul.bf16.gmra.mxu0 %v949
    %v5228 = vpop.f32.mrf.mxu0
    %v5229 = vadd.f32 %v5215, %v5228
    %v5230 = vpop.f32.mrf.mxu0
    %v5231 = vadd.f32 %v5217, %v5230
    %5232 = vdwg.mxu0
    %5233 = vmatpush.bf16.msra.mxu0 %v3938
    %5234 = vmatpush.bf16.msra.mxu0 %v3922
    %5235 = vmatpush.bf16.msra.mxu0 %v3906
    %5236 = vmatpush.bf16.msra.mxu0 %v3890
    %5237 = vmatpush.bf16.msra.mxu0 %v3874
    %5238 = vmatpush.bf16.msra.mxu0 %v3858
    %5239 = vmatpush.bf16.msra.mxu0 %v3842
    %5240 = vmatpush.bf16.msra.mxu0 %v3826
    %5241 = vmatmul.bf16.gmra.mxu0 %v950
    %v5242 = vpop.f32.mrf.mxu0
    %v5243 = vadd.f32 %v5229, %v5242
    %v5244 = vpop.f32.mrf.mxu0
    %v5245 = vadd.f32 %v5231, %v5244
    %5246 = vdwg.mxu0
    %5247 = vmatpush.bf16.msra.mxu0 %v4066
    %5248 = vmatpush.bf16.msra.mxu0 %v4050
    %5249 = vmatpush.bf16.msra.mxu0 %v4034
    %5250 = vmatpush.bf16.msra.mxu0 %v4018
    %5251 = vmatpush.bf16.msra.mxu0 %v4002
    %5252 = vmatpush.bf16.msra.mxu0 %v3986
    %5253 = vmatpush.bf16.msra.mxu0 %v3970
    %5254 = vmatpush.bf16.msra.mxu0 %v3954
    %5255 = vmatmul.bf16.gmra.mxu0 %v951
    %v5256 = vpop.f32.mrf.mxu0
    %v5257 = vadd.f32 %v5243, %v5256
    %v5258 = vpop.f32.mrf.mxu0
    %v5259 = vadd.f32 %v5245, %v5258
    %5260 = vdwg.mxu0
    %5261 = vmatpush.bf16.msra.mxu0 0
    %5262 = vmatpush.bf16.msra.mxu0 0
    %5263 = vmatpush.bf16.msra.mxu0 0
    %5264 = vmatpush.bf16.msra.mxu0 0
    %5265 = vmatpush.bf16.msra.mxu0 0
    %5266 = vmatpush.bf16.msra.mxu0 0
    %5267 = vmatpush.bf16.msra.mxu0 0
    %5268 = vmatpush.bf16.msra.mxu0 %v4082
    %5269 = vmatmul.bf16.gmra.mxu0 %v4881
    %v5270 = vpop.f32.mrf.mxu0
    %v5271 = vadd.f32 %v5257, %v5270
    %v5272 = vpop.f32.mrf.mxu0
    %v5273 = vadd.f32 %v5259, %v5272
    %5274 = vdwg.mxu0
    %5275 = vmatpush.bf16.msra.mxu0 %v3427
    %5276 = vmatpush.bf16.msra.mxu0 %v3411
    %5277 = vmatpush.bf16.msra.mxu0 %v3395
    %5278 = vmatpush.bf16.msra.mxu0 %v3379
    %5279 = vmatpush.bf16.msra.mxu0 %v3363
    %5280 = vmatpush.bf16.msra.mxu0 %v3347
    %5281 = vmatpush.bf16.msra.mxu0 %v3331
    %5282 = vmatpush.bf16.msra.mxu0 %v3315
    %5283 = vmatmul.bf16.gmra.mxu0 %v946
    %v5284 = vpop.f32.mrf.mxu0
    %v5285 = vadd.f32 %v896, %v5284
    %v5286 = vpop.f32.mrf.mxu0
    %v5287 = vadd.f32 %v896, %v5286
    %5288 = vdwg.mxu0
    %5289 = vmatpush.bf16.msra.mxu0 %v3555
    %5290 = vmatpush.bf16.msra.mxu0 %v3539
    %5291 = vmatpush.bf16.msra.mxu0 %v3523
    %5292 = vmatpush.bf16.msra.mxu0 %v3507
    %5293 = vmatpush.bf16.msra.mxu0 %v3491
    %5294 = vmatpush.bf16.msra.mxu0 %v3475
    %5295 = vmatpush.bf16.msra.mxu0 %v3459
    %5296 = vmatpush.bf16.msra.mxu0 %v3443
    %5297 = vmatmul.bf16.gmra.mxu0 %v947
    %v5298 = vpop.f32.mrf.mxu0
    %v5299 = vadd.f32 %v5285, %v5298
    %v5300 = vpop.f32.mrf.mxu0
    %v5301 = vadd.f32 %v5287, %v5300
    %5302 = vdwg.mxu0
    %5303 = vmatpush.bf16.msra.mxu0 %v3683
    %5304 = vmatpush.bf16.msra.mxu0 %v3667
    %5305 = vmatpush.bf16.msra.mxu0 %v3651
    %5306 = vmatpush.bf16.msra.mxu0 %v3635
    %5307 = vmatpush.bf16.msra.mxu0 %v3619
    %5308 = vmatpush.bf16.msra.mxu0 %v3603
    %5309 = vmatpush.bf16.msra.mxu0 %v3587
    %5310 = vmatpush.bf16.msra.mxu0 %v3571
    %5311 = vmatmul.bf16.gmra.mxu0 %v948
    %v5312 = vpop.f32.mrf.mxu0
    %v5313 = vadd.f32 %v5299, %v5312
    %v5314 = vpop.f32.mrf.mxu0
    %v5315 = vadd.f32 %v5301, %v5314
    %5316 = vdwg.mxu0
    %5317 = vmatpush.bf16.msra.mxu0 %v3811
    %5318 = vmatpush.bf16.msra.mxu0 %v3795
    %5319 = vmatpush.bf16.msra.mxu0 %v3779
    %5320 = vmatpush.bf16.msra.mxu0 %v3763
    %5321 = vmatpush.bf16.msra.mxu0 %v3747
    %5322 = vmatpush.bf16.msra.mxu0 %v3731
    %5323 = vmatpush.bf16.msra.mxu0 %v3715
    %5324 = vmatpush.bf16.msra.mxu0 %v3699
    %5325 = vmatmul.bf16.gmra.mxu0 %v949
    %v5326 = vpop.f32.mrf.mxu0
    %v5327 = vadd.f32 %v5313, %v5326
    %v5328 = vpop.f32.mrf.mxu0
    %v5329 = vadd.f32 %v5315, %v5328
    %5330 = vdwg.mxu0
    %5331 = vmatpush.bf16.msra.mxu0 %v3939
    %5332 = vmatpush.bf16.msra.mxu0 %v3923
    %5333 = vmatpush.bf16.msra.mxu0 %v3907
    %5334 = vmatpush.bf16.msra.mxu0 %v3891
    %5335 = vmatpush.bf16.msra.mxu0 %v3875
    %5336 = vmatpush.bf16.msra.mxu0 %v3859
    %5337 = vmatpush.bf16.msra.mxu0 %v3843
    %5338 = vmatpush.bf16.msra.mxu0 %v3827
    %5339 = vmatmul.bf16.gmra.mxu0 %v950
    %v5340 = vpop.f32.mrf.mxu0
    %v5341 = vadd.f32 %v5327, %v5340
    %v5342 = vpop.f32.mrf.mxu0
    %v5343 = vadd.f32 %v5329, %v5342
    %5344 = vdwg.mxu0
    %5345 = vmatpush.bf16.msra.mxu0 %v4067
    %5346 = vmatpush.bf16.msra.mxu0 %v4051
    %5347 = vmatpush.bf16.msra.mxu0 %v4035
    %5348 = vmatpush.bf16.msra.mxu0 %v4019
    %5349 = vmatpush.bf16.msra.mxu0 %v4003
    %5350 = vmatpush.bf16.msra.mxu0 %v3987
    %5351 = vmatpush.bf16.msra.mxu0 %v3971
    %5352 = vmatpush.bf16.msra.mxu0 %v3955
    %5353 = vmatmul.bf16.gmra.mxu0 %v951
    %v5354 = vpop.f32.mrf.mxu0
    %v5355 = vadd.f32 %v5341, %v5354
    %v5356 = vpop.f32.mrf.mxu0
    %v5357 = vadd.f32 %v5343, %v5356
    %5358 = vdwg.mxu0
    %5359 = vmatpush.bf16.msra.mxu0 0
    %5360 = vmatpush.bf16.msra.mxu0 0
    %5361 = vmatpush.bf16.msra.mxu0 0
    %5362 = vmatpush.bf16.msra.mxu0 0
    %5363 = vmatpush.bf16.msra.mxu0 0
    %5364 = vmatpush.bf16.msra.mxu0 0
    %5365 = vmatpush.bf16.msra.mxu0 0
    %5366 = vmatpush.bf16.msra.mxu0 %v4083
    %5367 = vmatmul.bf16.gmra.mxu0 %v4881
    %v5368 = vpop.f32.mrf.mxu0
    %v5369 = vadd.f32 %v5355, %v5368
    %v5370 = vpop.f32.mrf.mxu0
    %v5371 = vadd.f32 %v5357, %v5370
    %5372 = vdwg.mxu0
    %5373 = vmatpush.bf16.msra.mxu0 %v3428
    %5374 = vmatpush.bf16.msra.mxu0 %v3412
    %5375 = vmatpush.bf16.msra.mxu0 %v3396
    %5376 = vmatpush.bf16.msra.mxu0 %v3380
    %5377 = vmatpush.bf16.msra.mxu0 %v3364
    %5378 = vmatpush.bf16.msra.mxu0 %v3348
    %5379 = vmatpush.bf16.msra.mxu0 %v3332
    %5380 = vmatpush.bf16.msra.mxu0 %v3316
    %5381 = vmatmul.bf16.gmra.mxu0 %v946
    %v5382 = vpop.f32.mrf.mxu0
    %v5383 = vadd.f32 %v897, %v5382
    %v5384 = vpop.f32.mrf.mxu0
    %v5385 = vadd.f32 %v897, %v5384
    %5386 = vdwg.mxu0
    %5387 = vmatpush.bf16.msra.mxu0 %v3556
    %5388 = vmatpush.bf16.msra.mxu0 %v3540
    %5389 = vmatpush.bf16.msra.mxu0 %v3524
    %5390 = vmatpush.bf16.msra.mxu0 %v3508
    %5391 = vmatpush.bf16.msra.mxu0 %v3492
    %5392 = vmatpush.bf16.msra.mxu0 %v3476
    %5393 = vmatpush.bf16.msra.mxu0 %v3460
    %5394 = vmatpush.bf16.msra.mxu0 %v3444
    %5395 = vmatmul.bf16.gmra.mxu0 %v947
    %v5396 = vpop.f32.mrf.mxu0
    %v5397 = vadd.f32 %v5383, %v5396
    %v5398 = vpop.f32.mrf.mxu0
    %v5399 = vadd.f32 %v5385, %v5398
    %5400 = vdwg.mxu0
    %5401 = vmatpush.bf16.msra.mxu0 %v3684
    %5402 = vmatpush.bf16.msra.mxu0 %v3668
    %5403 = vmatpush.bf16.msra.mxu0 %v3652
    %5404 = vmatpush.bf16.msra.mxu0 %v3636
    %5405 = vmatpush.bf16.msra.mxu0 %v3620
    %5406 = vmatpush.bf16.msra.mxu0 %v3604
    %5407 = vmatpush.bf16.msra.mxu0 %v3588
    %5408 = vmatpush.bf16.msra.mxu0 %v3572
    %5409 = vmatmul.bf16.gmra.mxu0 %v948
    %v5410 = vpop.f32.mrf.mxu0
    %v5411 = vadd.f32 %v5397, %v5410
    %v5412 = vpop.f32.mrf.mxu0
    %v5413 = vadd.f32 %v5399, %v5412
    %5414 = vdwg.mxu0
    %5415 = vmatpush.bf16.msra.mxu0 %v3812
    %5416 = vmatpush.bf16.msra.mxu0 %v3796
    %5417 = vmatpush.bf16.msra.mxu0 %v3780
    %5418 = vmatpush.bf16.msra.mxu0 %v3764
    %5419 = vmatpush.bf16.msra.mxu0 %v3748
    %5420 = vmatpush.bf16.msra.mxu0 %v3732
    %5421 = vmatpush.bf16.msra.mxu0 %v3716
    %5422 = vmatpush.bf16.msra.mxu0 %v3700
    %5423 = vmatmul.bf16.gmra.mxu0 %v949
    %v5424 = vpop.f32.mrf.mxu0
    %v5425 = vadd.f32 %v5411, %v5424
    %v5426 = vpop.f32.mrf.mxu0
    %v5427 = vadd.f32 %v5413, %v5426
    %5428 = vdwg.mxu0
    %5429 = vmatpush.bf16.msra.mxu0 %v3940
    %5430 = vmatpush.bf16.msra.mxu0 %v3924
    %5431 = vmatpush.bf16.msra.mxu0 %v3908
    %5432 = vmatpush.bf16.msra.mxu0 %v3892
    %5433 = vmatpush.bf16.msra.mxu0 %v3876
    %5434 = vmatpush.bf16.msra.mxu0 %v3860
    %5435 = vmatpush.bf16.msra.mxu0 %v3844
    %5436 = vmatpush.bf16.msra.mxu0 %v3828
    %5437 = vmatmul.bf16.gmra.mxu0 %v950
    %v5438 = vpop.f32.mrf.mxu0
    %v5439 = vadd.f32 %v5425, %v5438
    %v5440 = vpop.f32.mrf.mxu0
    %v5441 = vadd.f32 %v5427, %v5440
    %5442 = vdwg.mxu0
    %5443 = vmatpush.bf16.msra.mxu0 %v4068
    %5444 = vmatpush.bf16.msra.mxu0 %v4052
    %5445 = vmatpush.bf16.msra.mxu0 %v4036
    %5446 = vmatpush.bf16.msra.mxu0 %v4020
    %5447 = vmatpush.bf16.msra.mxu0 %v4004
    %5448 = vmatpush.bf16.msra.mxu0 %v3988
    %5449 = vmatpush.bf16.msra.mxu0 %v3972
    %5450 = vmatpush.bf16.msra.mxu0 %v3956
    %5451 = vmatmul.bf16.gmra.mxu0 %v951
    %v5452 = vpop.f32.mrf.mxu0
    %v5453 = vadd.f32 %v5439, %v5452
    %v5454 = vpop.f32.mrf.mxu0
    %v5455 = vadd.f32 %v5441, %v5454
    %5456 = vdwg.mxu0
    %5457 = vmatpush.bf16.msra.mxu0 0
    %5458 = vmatpush.bf16.msra.mxu0 0
    %5459 = vmatpush.bf16.msra.mxu0 0
    %5460 = vmatpush.bf16.msra.mxu0 0
    %5461 = vmatpush.bf16.msra.mxu0 0
    %5462 = vmatpush.bf16.msra.mxu0 0
    %5463 = vmatpush.bf16.msra.mxu0 0
    %5464 = vmatpush.bf16.msra.mxu0 %v4084
    %5465 = vmatmul.bf16.gmra.mxu0 %v4881
    %v5466 = vpop.f32.mrf.mxu0
    %v5467 = vadd.f32 %v5453, %v5466
    %v5468 = vpop.f32.mrf.mxu0
    %v5469 = vadd.f32 %v5455, %v5468
    %5470 = vdwg.mxu0
    %5471 = vmatpush.bf16.msra.mxu0 %v3429
    %5472 = vmatpush.bf16.msra.mxu0 %v3413
    %5473 = vmatpush.bf16.msra.mxu0 %v3397
    %5474 = vmatpush.bf16.msra.mxu0 %v3381
    %5475 = vmatpush.bf16.msra.mxu0 %v3365
    %5476 = vmatpush.bf16.msra.mxu0 %v3349
    %5477 = vmatpush.bf16.msra.mxu0 %v3333
    %5478 = vmatpush.bf16.msra.mxu0 %v3317
    %5479 = vmatmul.bf16.gmra.mxu0 %v946
    %v5480 = vpop.f32.mrf.mxu0
    %v5481 = vadd.f32 %v898, %v5480
    %v5482 = vpop.f32.mrf.mxu0
    %v5483 = vadd.f32 %v898, %v5482
    %5484 = vdwg.mxu0
    %5485 = vmatpush.bf16.msra.mxu0 %v3557
    %5486 = vmatpush.bf16.msra.mxu0 %v3541
    %5487 = vmatpush.bf16.msra.mxu0 %v3525
    %5488 = vmatpush.bf16.msra.mxu0 %v3509
    %5489 = vmatpush.bf16.msra.mxu0 %v3493
    %5490 = vmatpush.bf16.msra.mxu0 %v3477
    %5491 = vmatpush.bf16.msra.mxu0 %v3461
    %5492 = vmatpush.bf16.msra.mxu0 %v3445
    %5493 = vmatmul.bf16.gmra.mxu0 %v947
    %v5494 = vpop.f32.mrf.mxu0
    %v5495 = vadd.f32 %v5481, %v5494
    %v5496 = vpop.f32.mrf.mxu0
    %v5497 = vadd.f32 %v5483, %v5496
    %5498 = vdwg.mxu0
    %5499 = vmatpush.bf16.msra.mxu0 %v3685
    %5500 = vmatpush.bf16.msra.mxu0 %v3669
    %5501 = vmatpush.bf16.msra.mxu0 %v3653
    %5502 = vmatpush.bf16.msra.mxu0 %v3637
    %5503 = vmatpush.bf16.msra.mxu0 %v3621
    %5504 = vmatpush.bf16.msra.mxu0 %v3605
    %5505 = vmatpush.bf16.msra.mxu0 %v3589
    %5506 = vmatpush.bf16.msra.mxu0 %v3573
    %5507 = vmatmul.bf16.gmra.mxu0 %v948
    %v5508 = vpop.f32.mrf.mxu0
    %v5509 = vadd.f32 %v5495, %v5508
    %v5510 = vpop.f32.mrf.mxu0
    %v5511 = vadd.f32 %v5497, %v5510
    %5512 = vdwg.mxu0
    %5513 = vmatpush.bf16.msra.mxu0 %v3813
    %5514 = vmatpush.bf16.msra.mxu0 %v3797
    %5515 = vmatpush.bf16.msra.mxu0 %v3781
    %5516 = vmatpush.bf16.msra.mxu0 %v3765
    %5517 = vmatpush.bf16.msra.mxu0 %v3749
    %5518 = vmatpush.bf16.msra.mxu0 %v3733
    %5519 = vmatpush.bf16.msra.mxu0 %v3717
    %5520 = vmatpush.bf16.msra.mxu0 %v3701
    %5521 = vmatmul.bf16.gmra.mxu0 %v949
    %v5522 = vpop.f32.mrf.mxu0
    %v5523 = vadd.f32 %v5509, %v5522
    %v5524 = vpop.f32.mrf.mxu0
    %v5525 = vadd.f32 %v5511, %v5524
    %5526 = vdwg.mxu0
    %5527 = vmatpush.bf16.msra.mxu0 %v3941
    %5528 = vmatpush.bf16.msra.mxu0 %v3925
    %5529 = vmatpush.bf16.msra.mxu0 %v3909
    %5530 = vmatpush.bf16.msra.mxu0 %v3893
    %5531 = vmatpush.bf16.msra.mxu0 %v3877
    %5532 = vmatpush.bf16.msra.mxu0 %v3861
    %5533 = vmatpush.bf16.msra.mxu0 %v3845
    %5534 = vmatpush.bf16.msra.mxu0 %v3829
    %5535 = vmatmul.bf16.gmra.mxu0 %v950
    %v5536 = vpop.f32.mrf.mxu0
    %v5537 = vadd.f32 %v5523, %v5536
    %v5538 = vpop.f32.mrf.mxu0
    %v5539 = vadd.f32 %v5525, %v5538
    %5540 = vdwg.mxu0
    %5541 = vmatpush.bf16.msra.mxu0 %v4069
    %5542 = vmatpush.bf16.msra.mxu0 %v4053
    %5543 = vmatpush.bf16.msra.mxu0 %v4037
    %5544 = vmatpush.bf16.msra.mxu0 %v4021
    %5545 = vmatpush.bf16.msra.mxu0 %v4005
    %5546 = vmatpush.bf16.msra.mxu0 %v3989
    %5547 = vmatpush.bf16.msra.mxu0 %v3973
    %5548 = vmatpush.bf16.msra.mxu0 %v3957
    %5549 = vmatmul.bf16.gmra.mxu0 %v951
    %v5550 = vpop.f32.mrf.mxu0
    %v5551 = vadd.f32 %v5537, %v5550
    %v5552 = vpop.f32.mrf.mxu0
    %v5553 = vadd.f32 %v5539, %v5552
    %5554 = vdwg.mxu0
    %5555 = vmatpush.bf16.msra.mxu0 0
    %5556 = vmatpush.bf16.msra.mxu0 0
    %5557 = vmatpush.bf16.msra.mxu0 0
    %5558 = vmatpush.bf16.msra.mxu0 0
    %5559 = vmatpush.bf16.msra.mxu0 0
    %5560 = vmatpush.bf16.msra.mxu0 0
    %5561 = vmatpush.bf16.msra.mxu0 0
    %5562 = vmatpush.bf16.msra.mxu0 %v4085
    %5563 = vmatmul.bf16.gmra.mxu0 %v4881
    %v5564 = vpop.f32.mrf.mxu0
    %v5565 = vadd.f32 %v5551, %v5564
    %v5566 = vpop.f32.mrf.mxu0
    %v5567 = vadd.f32 %v5553, %v5566
    %5568 = vdwg.mxu0
    %5569 = vmatpush.bf16.msra.mxu0 %v3430
    %5570 = vmatpush.bf16.msra.mxu0 %v3414
    %5571 = vmatpush.bf16.msra.mxu0 %v3398
    %5572 = vmatpush.bf16.msra.mxu0 %v3382
    %5573 = vmatpush.bf16.msra.mxu0 %v3366
    %5574 = vmatpush.bf16.msra.mxu0 %v3350
    %5575 = vmatpush.bf16.msra.mxu0 %v3334
    %5576 = vmatpush.bf16.msra.mxu0 %v3318
    %5577 = vmatmul.bf16.gmra.mxu0 %v946
    %v5578 = vpop.f32.mrf.mxu0
    %v5579 = vadd.f32 %v899, %v5578
    %v5580 = vpop.f32.mrf.mxu0
    %v5581 = vadd.f32 %v899, %v5580
    %5582 = vdwg.mxu0
    %5583 = vmatpush.bf16.msra.mxu0 %v3558
    %5584 = vmatpush.bf16.msra.mxu0 %v3542
    %5585 = vmatpush.bf16.msra.mxu0 %v3526
    %5586 = vmatpush.bf16.msra.mxu0 %v3510
    %5587 = vmatpush.bf16.msra.mxu0 %v3494
    %5588 = vmatpush.bf16.msra.mxu0 %v3478
    %5589 = vmatpush.bf16.msra.mxu0 %v3462
    %5590 = vmatpush.bf16.msra.mxu0 %v3446
    %5591 = vmatmul.bf16.gmra.mxu0 %v947
    %v5592 = vpop.f32.mrf.mxu0
    %v5593 = vadd.f32 %v5579, %v5592
    %v5594 = vpop.f32.mrf.mxu0
    %v5595 = vadd.f32 %v5581, %v5594
    %5596 = vdwg.mxu0
    %5597 = vmatpush.bf16.msra.mxu0 %v3686
    %5598 = vmatpush.bf16.msra.mxu0 %v3670
    %5599 = vmatpush.bf16.msra.mxu0 %v3654
    %5600 = vmatpush.bf16.msra.mxu0 %v3638
    %5601 = vmatpush.bf16.msra.mxu0 %v3622
    %5602 = vmatpush.bf16.msra.mxu0 %v3606
    %5603 = vmatpush.bf16.msra.mxu0 %v3590
    %5604 = vmatpush.bf16.msra.mxu0 %v3574
    %5605 = vmatmul.bf16.gmra.mxu0 %v948
    %v5606 = vpop.f32.mrf.mxu0
    %v5607 = vadd.f32 %v5593, %v5606
    %v5608 = vpop.f32.mrf.mxu0
    %v5609 = vadd.f32 %v5595, %v5608
    %5610 = vdwg.mxu0
    %5611 = vmatpush.bf16.msra.mxu0 %v3814
    %5612 = vmatpush.bf16.msra.mxu0 %v3798
    %5613 = vmatpush.bf16.msra.mxu0 %v3782
    %5614 = vmatpush.bf16.msra.mxu0 %v3766
    %5615 = vmatpush.bf16.msra.mxu0 %v3750
    %5616 = vmatpush.bf16.msra.mxu0 %v3734
    %5617 = vmatpush.bf16.msra.mxu0 %v3718
    %5618 = vmatpush.bf16.msra.mxu0 %v3702
    %5619 = vmatmul.bf16.gmra.mxu0 %v949
    %v5620 = vpop.f32.mrf.mxu0
    %v5621 = vadd.f32 %v5607, %v5620
    %v5622 = vpop.f32.mrf.mxu0
    %v5623 = vadd.f32 %v5609, %v5622
    %5624 = vdwg.mxu0
    %5625 = vmatpush.bf16.msra.mxu0 %v3942
    %5626 = vmatpush.bf16.msra.mxu0 %v3926
    %5627 = vmatpush.bf16.msra.mxu0 %v3910
    %5628 = vmatpush.bf16.msra.mxu0 %v3894
    %5629 = vmatpush.bf16.msra.mxu0 %v3878
    %5630 = vmatpush.bf16.msra.mxu0 %v3862
    %5631 = vmatpush.bf16.msra.mxu0 %v3846
    %5632 = vmatpush.bf16.msra.mxu0 %v3830
    %5633 = vmatmul.bf16.gmra.mxu0 %v950
    %v5634 = vpop.f32.mrf.mxu0
    %v5635 = vadd.f32 %v5621, %v5634
    %v5636 = vpop.f32.mrf.mxu0
    %v5637 = vadd.f32 %v5623, %v5636
    %5638 = vdwg.mxu0
    %5639 = vmatpush.bf16.msra.mxu0 %v4070
    %5640 = vmatpush.bf16.msra.mxu0 %v4054
    %5641 = vmatpush.bf16.msra.mxu0 %v4038
    %5642 = vmatpush.bf16.msra.mxu0 %v4022
    %5643 = vmatpush.bf16.msra.mxu0 %v4006
    %5644 = vmatpush.bf16.msra.mxu0 %v3990
    %5645 = vmatpush.bf16.msra.mxu0 %v3974
    %5646 = vmatpush.bf16.msra.mxu0 %v3958
    %5647 = vmatmul.bf16.gmra.mxu0 %v951
    %v5648 = vpop.f32.mrf.mxu0
    %v5649 = vadd.f32 %v5635, %v5648
    %v5650 = vpop.f32.mrf.mxu0
    %v5651 = vadd.f32 %v5637, %v5650
    %5652 = vdwg.mxu0
    %5653 = vmatpush.bf16.msra.mxu0 0
    %5654 = vmatpush.bf16.msra.mxu0 0
    %5655 = vmatpush.bf16.msra.mxu0 0
    %5656 = vmatpush.bf16.msra.mxu0 0
    %5657 = vmatpush.bf16.msra.mxu0 0
    %5658 = vmatpush.bf16.msra.mxu0 0
    %5659 = vmatpush.bf16.msra.mxu0 0
    %5660 = vmatpush.bf16.msra.mxu0 %v4086
    %5661 = vmatmul.bf16.gmra.mxu0 %v4881
    %v5662 = vpop.f32.mrf.mxu0
    %v5663 = vadd.f32 %v5649, %v5662
    %v5664 = vpop.f32.mrf.mxu0
    %v5665 = vadd.f32 %v5651, %v5664
    %5666 = vdwg.mxu0
    %5667 = vmatpush.bf16.msra.mxu0 %v3431
    %5668 = vmatpush.bf16.msra.mxu0 %v3415
    %5669 = vmatpush.bf16.msra.mxu0 %v3399
    %5670 = vmatpush.bf16.msra.mxu0 %v3383
    %5671 = vmatpush.bf16.msra.mxu0 %v3367
    %5672 = vmatpush.bf16.msra.mxu0 %v3351
    %5673 = vmatpush.bf16.msra.mxu0 %v3335
    %5674 = vmatpush.bf16.msra.mxu0 %v3319
    %5675 = vmatmul.bf16.gmra.mxu0 %v946
    %v5676 = vpop.f32.mrf.mxu0
    %v5677 = vadd.f32 %v900, %v5676
    %v5678 = vpop.f32.mrf.mxu0
    %v5679 = vadd.f32 %v900, %v5678
    %5680 = vdwg.mxu0
    %5681 = vmatpush.bf16.msra.mxu0 %v3559
    %5682 = vmatpush.bf16.msra.mxu0 %v3543
    %5683 = vmatpush.bf16.msra.mxu0 %v3527
    %5684 = vmatpush.bf16.msra.mxu0 %v3511
    %5685 = vmatpush.bf16.msra.mxu0 %v3495
    %5686 = vmatpush.bf16.msra.mxu0 %v3479
    %5687 = vmatpush.bf16.msra.mxu0 %v3463
    %5688 = vmatpush.bf16.msra.mxu0 %v3447
    %5689 = vmatmul.bf16.gmra.mxu0 %v947
    %v5690 = vpop.f32.mrf.mxu0
    %v5691 = vadd.f32 %v5677, %v5690
    %v5692 = vpop.f32.mrf.mxu0
    %v5693 = vadd.f32 %v5679, %v5692
    %5694 = vdwg.mxu0
    %5695 = vmatpush.bf16.msra.mxu0 %v3687
    %5696 = vmatpush.bf16.msra.mxu0 %v3671
    %5697 = vmatpush.bf16.msra.mxu0 %v3655
    %5698 = vmatpush.bf16.msra.mxu0 %v3639
    %5699 = vmatpush.bf16.msra.mxu0 %v3623
    %5700 = vmatpush.bf16.msra.mxu0 %v3607
    %5701 = vmatpush.bf16.msra.mxu0 %v3591
    %5702 = vmatpush.bf16.msra.mxu0 %v3575
    %5703 = vmatmul.bf16.gmra.mxu0 %v948
    %v5704 = vpop.f32.mrf.mxu0
    %v5705 = vadd.f32 %v5691, %v5704
    %v5706 = vpop.f32.mrf.mxu0
    %v5707 = vadd.f32 %v5693, %v5706
    %5708 = vdwg.mxu0
    %5709 = vmatpush.bf16.msra.mxu0 %v3815
    %5710 = vmatpush.bf16.msra.mxu0 %v3799
    %5711 = vmatpush.bf16.msra.mxu0 %v3783
    %5712 = vmatpush.bf16.msra.mxu0 %v3767
    %5713 = vmatpush.bf16.msra.mxu0 %v3751
    %5714 = vmatpush.bf16.msra.mxu0 %v3735
    %5715 = vmatpush.bf16.msra.mxu0 %v3719
    %5716 = vmatpush.bf16.msra.mxu0 %v3703
    %5717 = vmatmul.bf16.gmra.mxu0 %v949
    %v5718 = vpop.f32.mrf.mxu0
    %v5719 = vadd.f32 %v5705, %v5718
    %v5720 = vpop.f32.mrf.mxu0
    %v5721 = vadd.f32 %v5707, %v5720
    %5722 = vdwg.mxu0
    %5723 = vmatpush.bf16.msra.mxu0 %v3943
    %5724 = vmatpush.bf16.msra.mxu0 %v3927
    %5725 = vmatpush.bf16.msra.mxu0 %v3911
    %5726 = vmatpush.bf16.msra.mxu0 %v3895
    %5727 = vmatpush.bf16.msra.mxu0 %v3879
    %5728 = vmatpush.bf16.msra.mxu0 %v3863
    %5729 = vmatpush.bf16.msra.mxu0 %v3847
    %5730 = vmatpush.bf16.msra.mxu0 %v3831
    %5731 = vmatmul.bf16.gmra.mxu0 %v950
    %v5732 = vpop.f32.mrf.mxu0
    %v5733 = vadd.f32 %v5719, %v5732
    %v5734 = vpop.f32.mrf.mxu0
    %v5735 = vadd.f32 %v5721, %v5734
    %5736 = vdwg.mxu0
    %5737 = vmatpush.bf16.msra.mxu0 %v4071
    %5738 = vmatpush.bf16.msra.mxu0 %v4055
    %5739 = vmatpush.bf16.msra.mxu0 %v4039
    %5740 = vmatpush.bf16.msra.mxu0 %v4023
    %5741 = vmatpush.bf16.msra.mxu0 %v4007
    %5742 = vmatpush.bf16.msra.mxu0 %v3991
    %5743 = vmatpush.bf16.msra.mxu0 %v3975
    %5744 = vmatpush.bf16.msra.mxu0 %v3959
    %5745 = vmatmul.bf16.gmra.mxu0 %v951
    %v5746 = vpop.f32.mrf.mxu0
    %v5747 = vadd.f32 %v5733, %v5746
    %v5748 = vpop.f32.mrf.mxu0
    %v5749 = vadd.f32 %v5735, %v5748
    %5750 = vdwg.mxu0
    %5751 = vmatpush.bf16.msra.mxu0 0
    %5752 = vmatpush.bf16.msra.mxu0 0
    %5753 = vmatpush.bf16.msra.mxu0 0
    %5754 = vmatpush.bf16.msra.mxu0 0
    %5755 = vmatpush.bf16.msra.mxu0 0
    %5756 = vmatpush.bf16.msra.mxu0 0
    %5757 = vmatpush.bf16.msra.mxu0 0
    %5758 = vmatpush.bf16.msra.mxu0 %v4087
    %5759 = vmatmul.bf16.gmra.mxu0 %v4881
    %v5760 = vpop.f32.mrf.mxu0
    %v5761 = vadd.f32 %v5747, %v5760
    %v5762 = vpop.f32.mrf.mxu0
    %v5763 = vadd.f32 %v5749, %v5762
    %5764 = vdwg.mxu0
    %5765 = vmatpush.bf16.msra.mxu0 %v3432
    %5766 = vmatpush.bf16.msra.mxu0 %v3416
    %5767 = vmatpush.bf16.msra.mxu0 %v3400
    %5768 = vmatpush.bf16.msra.mxu0 %v3384
    %5769 = vmatpush.bf16.msra.mxu0 %v3368
    %5770 = vmatpush.bf16.msra.mxu0 %v3352
    %5771 = vmatpush.bf16.msra.mxu0 %v3336
    %5772 = vmatpush.bf16.msra.mxu0 %v3320
    %5773 = vmatmul.bf16.gmra.mxu0 %v946
    %v5774 = vpop.f32.mrf.mxu0
    %v5775 = vadd.f32 %v901, %v5774
    %v5776 = vpop.f32.mrf.mxu0
    %v5777 = vadd.f32 %v901, %v5776
    %5778 = vdwg.mxu0
    %5779 = vmatpush.bf16.msra.mxu0 %v3560
    %5780 = vmatpush.bf16.msra.mxu0 %v3544
    %5781 = vmatpush.bf16.msra.mxu0 %v3528
    %5782 = vmatpush.bf16.msra.mxu0 %v3512
    %5783 = vmatpush.bf16.msra.mxu0 %v3496
    %5784 = vmatpush.bf16.msra.mxu0 %v3480
    %5785 = vmatpush.bf16.msra.mxu0 %v3464
    %5786 = vmatpush.bf16.msra.mxu0 %v3448
    %5787 = vmatmul.bf16.gmra.mxu0 %v947
    %v5788 = vpop.f32.mrf.mxu0
    %v5789 = vadd.f32 %v5775, %v5788
    %v5790 = vpop.f32.mrf.mxu0
    %v5791 = vadd.f32 %v5777, %v5790
    %5792 = vdwg.mxu0
    %5793 = vmatpush.bf16.msra.mxu0 %v3688
    %5794 = vmatpush.bf16.msra.mxu0 %v3672
    %5795 = vmatpush.bf16.msra.mxu0 %v3656
    %5796 = vmatpush.bf16.msra.mxu0 %v3640
    %5797 = vmatpush.bf16.msra.mxu0 %v3624
    %5798 = vmatpush.bf16.msra.mxu0 %v3608
    %5799 = vmatpush.bf16.msra.mxu0 %v3592
    %5800 = vmatpush.bf16.msra.mxu0 %v3576
    %5801 = vmatmul.bf16.gmra.mxu0 %v948
    %v5802 = vpop.f32.mrf.mxu0
    %v5803 = vadd.f32 %v5789, %v5802
    %v5804 = vpop.f32.mrf.mxu0
    %v5805 = vadd.f32 %v5791, %v5804
    %5806 = vdwg.mxu0
    %5807 = vmatpush.bf16.msra.mxu0 %v3816
    %5808 = vmatpush.bf16.msra.mxu0 %v3800
    %5809 = vmatpush.bf16.msra.mxu0 %v3784
    %5810 = vmatpush.bf16.msra.mxu0 %v3768
    %5811 = vmatpush.bf16.msra.mxu0 %v3752
    %5812 = vmatpush.bf16.msra.mxu0 %v3736
    %5813 = vmatpush.bf16.msra.mxu0 %v3720
    %5814 = vmatpush.bf16.msra.mxu0 %v3704
    %5815 = vmatmul.bf16.gmra.mxu0 %v949
    %v5816 = vpop.f32.mrf.mxu0
    %v5817 = vadd.f32 %v5803, %v5816
    %v5818 = vpop.f32.mrf.mxu0
    %v5819 = vadd.f32 %v5805, %v5818
    %5820 = vdwg.mxu0
    %5821 = vmatpush.bf16.msra.mxu0 %v3944
    %5822 = vmatpush.bf16.msra.mxu0 %v3928
    %5823 = vmatpush.bf16.msra.mxu0 %v3912
    %5824 = vmatpush.bf16.msra.mxu0 %v3896
    %5825 = vmatpush.bf16.msra.mxu0 %v3880
    %5826 = vmatpush.bf16.msra.mxu0 %v3864
    %5827 = vmatpush.bf16.msra.mxu0 %v3848
    %5828 = vmatpush.bf16.msra.mxu0 %v3832
    %5829 = vmatmul.bf16.gmra.mxu0 %v950
    %v5830 = vpop.f32.mrf.mxu0
    %v5831 = vadd.f32 %v5817, %v5830
    %v5832 = vpop.f32.mrf.mxu0
    %v5833 = vadd.f32 %v5819, %v5832
    %5834 = vdwg.mxu0
    %5835 = vmatpush.bf16.msra.mxu0 %v4072
    %5836 = vmatpush.bf16.msra.mxu0 %v4056
    %5837 = vmatpush.bf16.msra.mxu0 %v4040
    %5838 = vmatpush.bf16.msra.mxu0 %v4024
    %5839 = vmatpush.bf16.msra.mxu0 %v4008
    %5840 = vmatpush.bf16.msra.mxu0 %v3992
    %5841 = vmatpush.bf16.msra.mxu0 %v3976
    %5842 = vmatpush.bf16.msra.mxu0 %v3960
    %5843 = vmatmul.bf16.gmra.mxu0 %v951
    %v5844 = vpop.f32.mrf.mxu0
    %v5845 = vadd.f32 %v5831, %v5844
    %v5846 = vpop.f32.mrf.mxu0
    %v5847 = vadd.f32 %v5833, %v5846
    %5848 = vdwg.mxu0
    %5849 = vmatpush.bf16.msra.mxu0 0
    %5850 = vmatpush.bf16.msra.mxu0 0
    %5851 = vmatpush.bf16.msra.mxu0 0
    %5852 = vmatpush.bf16.msra.mxu0 0
    %5853 = vmatpush.bf16.msra.mxu0 0
    %5854 = vmatpush.bf16.msra.mxu0 0
    %5855 = vmatpush.bf16.msra.mxu0 0
    %5856 = vmatpush.bf16.msra.mxu0 %v4088
    %5857 = vmatmul.bf16.gmra.mxu0 %v4881
    %v5858 = vpop.f32.mrf.mxu0
    %v5859 = vadd.f32 %v5845, %v5858
    %v5860 = vpop.f32.mrf.mxu0
    %v5861 = vadd.f32 %v5847, %v5860
    %5862 = vdwg.mxu0
    %5863 = vmatpush.bf16.msra.mxu0 %v3433
    %5864 = vmatpush.bf16.msra.mxu0 %v3417
    %5865 = vmatpush.bf16.msra.mxu0 %v3401
    %5866 = vmatpush.bf16.msra.mxu0 %v3385
    %5867 = vmatpush.bf16.msra.mxu0 %v3369
    %5868 = vmatpush.bf16.msra.mxu0 %v3353
    %5869 = vmatpush.bf16.msra.mxu0 %v3337
    %5870 = vmatpush.bf16.msra.mxu0 %v3321
    %5871 = vmatmul.bf16.gmra.mxu0 %v946
    %v5872 = vpop.f32.mrf.mxu0
    %v5873 = vadd.f32 %v902, %v5872
    %v5874 = vpop.f32.mrf.mxu0
    %v5875 = vadd.f32 %v902, %v5874
    %5876 = vdwg.mxu0
    %5877 = vmatpush.bf16.msra.mxu0 %v3561
    %5878 = vmatpush.bf16.msra.mxu0 %v3545
    %5879 = vmatpush.bf16.msra.mxu0 %v3529
    %5880 = vmatpush.bf16.msra.mxu0 %v3513
    %5881 = vmatpush.bf16.msra.mxu0 %v3497
    %5882 = vmatpush.bf16.msra.mxu0 %v3481
    %5883 = vmatpush.bf16.msra.mxu0 %v3465
    %5884 = vmatpush.bf16.msra.mxu0 %v3449
    %5885 = vmatmul.bf16.gmra.mxu0 %v947
    %v5886 = vpop.f32.mrf.mxu0
    %v5887 = vadd.f32 %v5873, %v5886
    %v5888 = vpop.f32.mrf.mxu0
    %v5889 = vadd.f32 %v5875, %v5888
    %5890 = vdwg.mxu0
    %5891 = vmatpush.bf16.msra.mxu0 %v3689
    %5892 = vmatpush.bf16.msra.mxu0 %v3673
    %5893 = vmatpush.bf16.msra.mxu0 %v3657
    %5894 = vmatpush.bf16.msra.mxu0 %v3641
    %5895 = vmatpush.bf16.msra.mxu0 %v3625
    %5896 = vmatpush.bf16.msra.mxu0 %v3609
    %5897 = vmatpush.bf16.msra.mxu0 %v3593
    %5898 = vmatpush.bf16.msra.mxu0 %v3577
    %5899 = vmatmul.bf16.gmra.mxu0 %v948
    %v5900 = vpop.f32.mrf.mxu0
    %v5901 = vadd.f32 %v5887, %v5900
    %v5902 = vpop.f32.mrf.mxu0
    %v5903 = vadd.f32 %v5889, %v5902
    %5904 = vdwg.mxu0
    %5905 = vmatpush.bf16.msra.mxu0 %v3817
    %5906 = vmatpush.bf16.msra.mxu0 %v3801
    %5907 = vmatpush.bf16.msra.mxu0 %v3785
    %5908 = vmatpush.bf16.msra.mxu0 %v3769
    %5909 = vmatpush.bf16.msra.mxu0 %v3753
    %5910 = vmatpush.bf16.msra.mxu0 %v3737
    %5911 = vmatpush.bf16.msra.mxu0 %v3721
    %5912 = vmatpush.bf16.msra.mxu0 %v3705
    %5913 = vmatmul.bf16.gmra.mxu0 %v949
    %v5914 = vpop.f32.mrf.mxu0
    %v5915 = vadd.f32 %v5901, %v5914
    %v5916 = vpop.f32.mrf.mxu0
    %v5917 = vadd.f32 %v5903, %v5916
    %5918 = vdwg.mxu0
    %5919 = vmatpush.bf16.msra.mxu0 %v3945
    %5920 = vmatpush.bf16.msra.mxu0 %v3929
    %5921 = vmatpush.bf16.msra.mxu0 %v3913
    %5922 = vmatpush.bf16.msra.mxu0 %v3897
    %5923 = vmatpush.bf16.msra.mxu0 %v3881
    %5924 = vmatpush.bf16.msra.mxu0 %v3865
    %5925 = vmatpush.bf16.msra.mxu0 %v3849
    %5926 = vmatpush.bf16.msra.mxu0 %v3833
    %5927 = vmatmul.bf16.gmra.mxu0 %v950
    %v5928 = vpop.f32.mrf.mxu0
    %v5929 = vadd.f32 %v5915, %v5928
    %v5930 = vpop.f32.mrf.mxu0
    %v5931 = vadd.f32 %v5917, %v5930
    %5932 = vdwg.mxu0
    %5933 = vmatpush.bf16.msra.mxu0 %v4073
    %5934 = vmatpush.bf16.msra.mxu0 %v4057
    %5935 = vmatpush.bf16.msra.mxu0 %v4041
    %5936 = vmatpush.bf16.msra.mxu0 %v4025
    %5937 = vmatpush.bf16.msra.mxu0 %v4009
    %5938 = vmatpush.bf16.msra.mxu0 %v3993
    %5939 = vmatpush.bf16.msra.mxu0 %v3977
    %5940 = vmatpush.bf16.msra.mxu0 %v3961
    %5941 = vmatmul.bf16.gmra.mxu0 %v951
    %v5942 = vpop.f32.mrf.mxu0
    %v5943 = vadd.f32 %v5929, %v5942
    %v5944 = vpop.f32.mrf.mxu0
    %v5945 = vadd.f32 %v5931, %v5944
    %5946 = vdwg.mxu0
    %5947 = vmatpush.bf16.msra.mxu0 0
    %5948 = vmatpush.bf16.msra.mxu0 0
    %5949 = vmatpush.bf16.msra.mxu0 0
    %5950 = vmatpush.bf16.msra.mxu0 0
    %5951 = vmatpush.bf16.msra.mxu0 0
    %5952 = vmatpush.bf16.msra.mxu0 0
    %5953 = vmatpush.bf16.msra.mxu0 0
    %5954 = vmatpush.bf16.msra.mxu0 %v4089
    %5955 = vmatmul.bf16.gmra.mxu0 %v4881
    %v5956 = vpop.f32.mrf.mxu0
    %v5957 = vadd.f32 %v5943, %v5956
    %v5958 = vpop.f32.mrf.mxu0
    %v5959 = vadd.f32 %v5945, %v5958
    %5960 = vdwg.mxu0
    %5961 = vmatpush.bf16.msra.mxu0 %v3434
    %5962 = vmatpush.bf16.msra.mxu0 %v3418
    %5963 = vmatpush.bf16.msra.mxu0 %v3402
    %5964 = vmatpush.bf16.msra.mxu0 %v3386
    %5965 = vmatpush.bf16.msra.mxu0 %v3370
    %5966 = vmatpush.bf16.msra.mxu0 %v3354
    %5967 = vmatpush.bf16.msra.mxu0 %v3338
    %5968 = vmatpush.bf16.msra.mxu0 %v3322
    %5969 = vmatmul.bf16.gmra.mxu0 %v946
    %v5970 = vpop.f32.mrf.mxu0
    %v5971 = vadd.f32 %v903, %v5970
    %v5972 = vpop.f32.mrf.mxu0
    %v5973 = vadd.f32 %v903, %v5972
    %5974 = vdwg.mxu0
    %5975 = vmatpush.bf16.msra.mxu0 %v3562
    %5976 = vmatpush.bf16.msra.mxu0 %v3546
    %5977 = vmatpush.bf16.msra.mxu0 %v3530
    %5978 = vmatpush.bf16.msra.mxu0 %v3514
    %5979 = vmatpush.bf16.msra.mxu0 %v3498
    %5980 = vmatpush.bf16.msra.mxu0 %v3482
    %5981 = vmatpush.bf16.msra.mxu0 %v3466
    %5982 = vmatpush.bf16.msra.mxu0 %v3450
    %5983 = vmatmul.bf16.gmra.mxu0 %v947
    %v5984 = vpop.f32.mrf.mxu0
    %v5985 = vadd.f32 %v5971, %v5984
    %v5986 = vpop.f32.mrf.mxu0
    %v5987 = vadd.f32 %v5973, %v5986
    %5988 = vdwg.mxu0
    %5989 = vmatpush.bf16.msra.mxu0 %v3690
    %5990 = vmatpush.bf16.msra.mxu0 %v3674
    %5991 = vmatpush.bf16.msra.mxu0 %v3658
    %5992 = vmatpush.bf16.msra.mxu0 %v3642
    %5993 = vmatpush.bf16.msra.mxu0 %v3626
    %5994 = vmatpush.bf16.msra.mxu0 %v3610
    %5995 = vmatpush.bf16.msra.mxu0 %v3594
    %5996 = vmatpush.bf16.msra.mxu0 %v3578
    %5997 = vmatmul.bf16.gmra.mxu0 %v948
    %v5998 = vpop.f32.mrf.mxu0
    %v5999 = vadd.f32 %v5985, %v5998
    %v6000 = vpop.f32.mrf.mxu0
    %v6001 = vadd.f32 %v5987, %v6000
    %6002 = vdwg.mxu0
    %6003 = vmatpush.bf16.msra.mxu0 %v3818
    %6004 = vmatpush.bf16.msra.mxu0 %v3802
    %6005 = vmatpush.bf16.msra.mxu0 %v3786
    %6006 = vmatpush.bf16.msra.mxu0 %v3770
    %6007 = vmatpush.bf16.msra.mxu0 %v3754
    %6008 = vmatpush.bf16.msra.mxu0 %v3738
    %6009 = vmatpush.bf16.msra.mxu0 %v3722
    %6010 = vmatpush.bf16.msra.mxu0 %v3706
    %6011 = vmatmul.bf16.gmra.mxu0 %v949
    %v6012 = vpop.f32.mrf.mxu0
    %v6013 = vadd.f32 %v5999, %v6012
    %v6014 = vpop.f32.mrf.mxu0
    %v6015 = vadd.f32 %v6001, %v6014
    %6016 = vdwg.mxu0
    %6017 = vmatpush.bf16.msra.mxu0 %v3946
    %6018 = vmatpush.bf16.msra.mxu0 %v3930
    %6019 = vmatpush.bf16.msra.mxu0 %v3914
    %6020 = vmatpush.bf16.msra.mxu0 %v3898
    %6021 = vmatpush.bf16.msra.mxu0 %v3882
    %6022 = vmatpush.bf16.msra.mxu0 %v3866
    %6023 = vmatpush.bf16.msra.mxu0 %v3850
    %6024 = vmatpush.bf16.msra.mxu0 %v3834
    %6025 = vmatmul.bf16.gmra.mxu0 %v950
    %v6026 = vpop.f32.mrf.mxu0
    %v6027 = vadd.f32 %v6013, %v6026
    %v6028 = vpop.f32.mrf.mxu0
    %v6029 = vadd.f32 %v6015, %v6028
    %6030 = vdwg.mxu0
    %6031 = vmatpush.bf16.msra.mxu0 %v4074
    %6032 = vmatpush.bf16.msra.mxu0 %v4058
    %6033 = vmatpush.bf16.msra.mxu0 %v4042
    %6034 = vmatpush.bf16.msra.mxu0 %v4026
    %6035 = vmatpush.bf16.msra.mxu0 %v4010
    %6036 = vmatpush.bf16.msra.mxu0 %v3994
    %6037 = vmatpush.bf16.msra.mxu0 %v3978
    %6038 = vmatpush.bf16.msra.mxu0 %v3962
    %6039 = vmatmul.bf16.gmra.mxu0 %v951
    %v6040 = vpop.f32.mrf.mxu0
    %v6041 = vadd.f32 %v6027, %v6040
    %v6042 = vpop.f32.mrf.mxu0
    %v6043 = vadd.f32 %v6029, %v6042
    %6044 = vdwg.mxu0
    %6045 = vmatpush.bf16.msra.mxu0 0
    %6046 = vmatpush.bf16.msra.mxu0 0
    %6047 = vmatpush.bf16.msra.mxu0 0
    %6048 = vmatpush.bf16.msra.mxu0 0
    %6049 = vmatpush.bf16.msra.mxu0 0
    %6050 = vmatpush.bf16.msra.mxu0 0
    %6051 = vmatpush.bf16.msra.mxu0 0
    %6052 = vmatpush.bf16.msra.mxu0 %v4090
    %6053 = vmatmul.bf16.gmra.mxu0 %v4881
    %v6054 = vpop.f32.mrf.mxu0
    %v6055 = vadd.f32 %v6041, %v6054
    %v6056 = vpop.f32.mrf.mxu0
    %v6057 = vadd.f32 %v6043, %v6056
    %6058 = vdwg.mxu0
    %6059 = vmatpush.bf16.msra.mxu0 %v3435
    %6060 = vmatpush.bf16.msra.mxu0 %v3419
    %6061 = vmatpush.bf16.msra.mxu0 %v3403
    %6062 = vmatpush.bf16.msra.mxu0 %v3387
    %6063 = vmatpush.bf16.msra.mxu0 %v3371
    %6064 = vmatpush.bf16.msra.mxu0 %v3355
    %6065 = vmatpush.bf16.msra.mxu0 %v3339
    %6066 = vmatpush.bf16.msra.mxu0 %v3323
    %6067 = vmatmul.bf16.gmra.mxu0 %v946
    %v6068 = vpop.f32.mrf.mxu0
    %v6069 = vadd.f32 %v904, %v6068
    %v6070 = vpop.f32.mrf.mxu0
    %v6071 = vadd.f32 %v904, %v6070
    %6072 = vdwg.mxu0
    %6073 = vmatpush.bf16.msra.mxu0 %v3563
    %6074 = vmatpush.bf16.msra.mxu0 %v3547
    %6075 = vmatpush.bf16.msra.mxu0 %v3531
    %6076 = vmatpush.bf16.msra.mxu0 %v3515
    %6077 = vmatpush.bf16.msra.mxu0 %v3499
    %6078 = vmatpush.bf16.msra.mxu0 %v3483
    %6079 = vmatpush.bf16.msra.mxu0 %v3467
    %6080 = vmatpush.bf16.msra.mxu0 %v3451
    %6081 = vmatmul.bf16.gmra.mxu0 %v947
    %v6082 = vpop.f32.mrf.mxu0
    %v6083 = vadd.f32 %v6069, %v6082
    %v6084 = vpop.f32.mrf.mxu0
    %v6085 = vadd.f32 %v6071, %v6084
    %6086 = vdwg.mxu0
    %6087 = vmatpush.bf16.msra.mxu0 %v3691
    %6088 = vmatpush.bf16.msra.mxu0 %v3675
    %6089 = vmatpush.bf16.msra.mxu0 %v3659
    %6090 = vmatpush.bf16.msra.mxu0 %v3643
    %6091 = vmatpush.bf16.msra.mxu0 %v3627
    %6092 = vmatpush.bf16.msra.mxu0 %v3611
    %6093 = vmatpush.bf16.msra.mxu0 %v3595
    %6094 = vmatpush.bf16.msra.mxu0 %v3579
    %6095 = vmatmul.bf16.gmra.mxu0 %v948
    %v6096 = vpop.f32.mrf.mxu0
    %v6097 = vadd.f32 %v6083, %v6096
    %v6098 = vpop.f32.mrf.mxu0
    %v6099 = vadd.f32 %v6085, %v6098
    %6100 = vdwg.mxu0
    %6101 = vmatpush.bf16.msra.mxu0 %v3819
    %6102 = vmatpush.bf16.msra.mxu0 %v3803
    %6103 = vmatpush.bf16.msra.mxu0 %v3787
    %6104 = vmatpush.bf16.msra.mxu0 %v3771
    %6105 = vmatpush.bf16.msra.mxu0 %v3755
    %6106 = vmatpush.bf16.msra.mxu0 %v3739
    %6107 = vmatpush.bf16.msra.mxu0 %v3723
    %6108 = vmatpush.bf16.msra.mxu0 %v3707
    %6109 = vmatmul.bf16.gmra.mxu0 %v949
    %v6110 = vpop.f32.mrf.mxu0
    %v6111 = vadd.f32 %v6097, %v6110
    %v6112 = vpop.f32.mrf.mxu0
    %v6113 = vadd.f32 %v6099, %v6112
    %6114 = vdwg.mxu0
    %6115 = vmatpush.bf16.msra.mxu0 %v3947
    %6116 = vmatpush.bf16.msra.mxu0 %v3931
    %6117 = vmatpush.bf16.msra.mxu0 %v3915
    %6118 = vmatpush.bf16.msra.mxu0 %v3899
    %6119 = vmatpush.bf16.msra.mxu0 %v3883
    %6120 = vmatpush.bf16.msra.mxu0 %v3867
    %6121 = vmatpush.bf16.msra.mxu0 %v3851
    %6122 = vmatpush.bf16.msra.mxu0 %v3835
    %6123 = vmatmul.bf16.gmra.mxu0 %v950
    %v6124 = vpop.f32.mrf.mxu0
    %v6125 = vadd.f32 %v6111, %v6124
    %v6126 = vpop.f32.mrf.mxu0
    %v6127 = vadd.f32 %v6113, %v6126
    %6128 = vdwg.mxu0
    %6129 = vmatpush.bf16.msra.mxu0 %v4075
    %6130 = vmatpush.bf16.msra.mxu0 %v4059
    %6131 = vmatpush.bf16.msra.mxu0 %v4043
    %6132 = vmatpush.bf16.msra.mxu0 %v4027
    %6133 = vmatpush.bf16.msra.mxu0 %v4011
    %6134 = vmatpush.bf16.msra.mxu0 %v3995
    %6135 = vmatpush.bf16.msra.mxu0 %v3979
    %6136 = vmatpush.bf16.msra.mxu0 %v3963
    %6137 = vmatmul.bf16.gmra.mxu0 %v951
    %v6138 = vpop.f32.mrf.mxu0
    %v6139 = vadd.f32 %v6125, %v6138
    %v6140 = vpop.f32.mrf.mxu0
    %v6141 = vadd.f32 %v6127, %v6140
    %6142 = vdwg.mxu0
    %6143 = vmatpush.bf16.msra.mxu0 0
    %6144 = vmatpush.bf16.msra.mxu0 0
    %6145 = vmatpush.bf16.msra.mxu0 0
    %6146 = vmatpush.bf16.msra.mxu0 0
    %6147 = vmatpush.bf16.msra.mxu0 0
    %6148 = vmatpush.bf16.msra.mxu0 0
    %6149 = vmatpush.bf16.msra.mxu0 0
    %6150 = vmatpush.bf16.msra.mxu0 %v4091
    %6151 = vmatmul.bf16.gmra.mxu0 %v4881
    %v6152 = vpop.f32.mrf.mxu0
    %v6153 = vadd.f32 %v6139, %v6152
    %v6154 = vpop.f32.mrf.mxu0
    %v6155 = vadd.f32 %v6141, %v6154
    %6156 = vdwg.mxu0
    %6157 = vmatpush.bf16.msra.mxu0 %v3436
    %6158 = vmatpush.bf16.msra.mxu0 %v3420
    %6159 = vmatpush.bf16.msra.mxu0 %v3404
    %6160 = vmatpush.bf16.msra.mxu0 %v3388
    %6161 = vmatpush.bf16.msra.mxu0 %v3372
    %6162 = vmatpush.bf16.msra.mxu0 %v3356
    %6163 = vmatpush.bf16.msra.mxu0 %v3340
    %6164 = vmatpush.bf16.msra.mxu0 %v3324
    %6165 = vmatmul.bf16.gmra.mxu0 %v946
    %v6166 = vpop.f32.mrf.mxu0
    %v6167 = vadd.f32 %v905, %v6166
    %v6168 = vpop.f32.mrf.mxu0
    %v6169 = vadd.f32 %v905, %v6168
    %6170 = vdwg.mxu0
    %6171 = vmatpush.bf16.msra.mxu0 %v3564
    %6172 = vmatpush.bf16.msra.mxu0 %v3548
    %6173 = vmatpush.bf16.msra.mxu0 %v3532
    %6174 = vmatpush.bf16.msra.mxu0 %v3516
    %6175 = vmatpush.bf16.msra.mxu0 %v3500
    %6176 = vmatpush.bf16.msra.mxu0 %v3484
    %6177 = vmatpush.bf16.msra.mxu0 %v3468
    %6178 = vmatpush.bf16.msra.mxu0 %v3452
    %6179 = vmatmul.bf16.gmra.mxu0 %v947
    %v6180 = vpop.f32.mrf.mxu0
    %v6181 = vadd.f32 %v6167, %v6180
    %v6182 = vpop.f32.mrf.mxu0
    %v6183 = vadd.f32 %v6169, %v6182
    %6184 = vdwg.mxu0
    %6185 = vmatpush.bf16.msra.mxu0 %v3692
    %6186 = vmatpush.bf16.msra.mxu0 %v3676
    %6187 = vmatpush.bf16.msra.mxu0 %v3660
    %6188 = vmatpush.bf16.msra.mxu0 %v3644
    %6189 = vmatpush.bf16.msra.mxu0 %v3628
    %6190 = vmatpush.bf16.msra.mxu0 %v3612
    %6191 = vmatpush.bf16.msra.mxu0 %v3596
    %6192 = vmatpush.bf16.msra.mxu0 %v3580
    %6193 = vmatmul.bf16.gmra.mxu0 %v948
    %v6194 = vpop.f32.mrf.mxu0
    %v6195 = vadd.f32 %v6181, %v6194
    %v6196 = vpop.f32.mrf.mxu0
    %v6197 = vadd.f32 %v6183, %v6196
    %6198 = vdwg.mxu0
    %6199 = vmatpush.bf16.msra.mxu0 %v3820
    %6200 = vmatpush.bf16.msra.mxu0 %v3804
    %6201 = vmatpush.bf16.msra.mxu0 %v3788
    %6202 = vmatpush.bf16.msra.mxu0 %v3772
    %6203 = vmatpush.bf16.msra.mxu0 %v3756
    %6204 = vmatpush.bf16.msra.mxu0 %v3740
    %6205 = vmatpush.bf16.msra.mxu0 %v3724
    %6206 = vmatpush.bf16.msra.mxu0 %v3708
    %6207 = vmatmul.bf16.gmra.mxu0 %v949
    %v6208 = vpop.f32.mrf.mxu0
    %v6209 = vadd.f32 %v6195, %v6208
    %v6210 = vpop.f32.mrf.mxu0
    %v6211 = vadd.f32 %v6197, %v6210
    %6212 = vdwg.mxu0
    %6213 = vmatpush.bf16.msra.mxu0 %v3948
    %6214 = vmatpush.bf16.msra.mxu0 %v3932
    %6215 = vmatpush.bf16.msra.mxu0 %v3916
    %6216 = vmatpush.bf16.msra.mxu0 %v3900
    %6217 = vmatpush.bf16.msra.mxu0 %v3884
    %6218 = vmatpush.bf16.msra.mxu0 %v3868
    %6219 = vmatpush.bf16.msra.mxu0 %v3852
    %6220 = vmatpush.bf16.msra.mxu0 %v3836
    %6221 = vmatmul.bf16.gmra.mxu0 %v950
    %v6222 = vpop.f32.mrf.mxu0
    %v6223 = vadd.f32 %v6209, %v6222
    %v6224 = vpop.f32.mrf.mxu0
    %v6225 = vadd.f32 %v6211, %v6224
    %6226 = vdwg.mxu0
    %6227 = vmatpush.bf16.msra.mxu0 %v4076
    %6228 = vmatpush.bf16.msra.mxu0 %v4060
    %6229 = vmatpush.bf16.msra.mxu0 %v4044
    %6230 = vmatpush.bf16.msra.mxu0 %v4028
    %6231 = vmatpush.bf16.msra.mxu0 %v4012
    %6232 = vmatpush.bf16.msra.mxu0 %v3996
    %6233 = vmatpush.bf16.msra.mxu0 %v3980
    %6234 = vmatpush.bf16.msra.mxu0 %v3964
    %6235 = vmatmul.bf16.gmra.mxu0 %v951
    %v6236 = vpop.f32.mrf.mxu0
    %v6237 = vadd.f32 %v6223, %v6236
    %v6238 = vpop.f32.mrf.mxu0
    %v6239 = vadd.f32 %v6225, %v6238
    %6240 = vdwg.mxu0
    %6241 = vmatpush.bf16.msra.mxu0 0
    %6242 = vmatpush.bf16.msra.mxu0 0
    %6243 = vmatpush.bf16.msra.mxu0 0
    %6244 = vmatpush.bf16.msra.mxu0 0
    %6245 = vmatpush.bf16.msra.mxu0 0
    %6246 = vmatpush.bf16.msra.mxu0 0
    %6247 = vmatpush.bf16.msra.mxu0 0
    %6248 = vmatpush.bf16.msra.mxu0 %v4092
    %6249 = vmatmul.bf16.gmra.mxu0 %v4881
    %v6250 = vpop.f32.mrf.mxu0
    %v6251 = vadd.f32 %v6237, %v6250
    %v6252 = vpop.f32.mrf.mxu0
    %v6253 = vadd.f32 %v6239, %v6252
    %6254 = vdwg.mxu0
    %6255 = vmatpush.bf16.msra.mxu0 %v3437
    %6256 = vmatpush.bf16.msra.mxu0 %v3421
    %6257 = vmatpush.bf16.msra.mxu0 %v3405
    %6258 = vmatpush.bf16.msra.mxu0 %v3389
    %6259 = vmatpush.bf16.msra.mxu0 %v3373
    %6260 = vmatpush.bf16.msra.mxu0 %v3357
    %6261 = vmatpush.bf16.msra.mxu0 %v3341
    %6262 = vmatpush.bf16.msra.mxu0 %v3325
    %6263 = vmatmul.bf16.gmra.mxu0 %v946
    %v6264 = vpop.f32.mrf.mxu0
    %v6265 = vadd.f32 %v906, %v6264
    %v6266 = vpop.f32.mrf.mxu0
    %v6267 = vadd.f32 %v906, %v6266
    %6268 = vdwg.mxu0
    %6269 = vmatpush.bf16.msra.mxu0 %v3565
    %6270 = vmatpush.bf16.msra.mxu0 %v3549
    %6271 = vmatpush.bf16.msra.mxu0 %v3533
    %6272 = vmatpush.bf16.msra.mxu0 %v3517
    %6273 = vmatpush.bf16.msra.mxu0 %v3501
    %6274 = vmatpush.bf16.msra.mxu0 %v3485
    %6275 = vmatpush.bf16.msra.mxu0 %v3469
    %6276 = vmatpush.bf16.msra.mxu0 %v3453
    %6277 = vmatmul.bf16.gmra.mxu0 %v947
    %v6278 = vpop.f32.mrf.mxu0
    %v6279 = vadd.f32 %v6265, %v6278
    %v6280 = vpop.f32.mrf.mxu0
    %v6281 = vadd.f32 %v6267, %v6280
    %6282 = vdwg.mxu0
    %6283 = vmatpush.bf16.msra.mxu0 %v3693
    %6284 = vmatpush.bf16.msra.mxu0 %v3677
    %6285 = vmatpush.bf16.msra.mxu0 %v3661
    %6286 = vmatpush.bf16.msra.mxu0 %v3645
    %6287 = vmatpush.bf16.msra.mxu0 %v3629
    %6288 = vmatpush.bf16.msra.mxu0 %v3613
    %6289 = vmatpush.bf16.msra.mxu0 %v3597
    %6290 = vmatpush.bf16.msra.mxu0 %v3581
    %6291 = vmatmul.bf16.gmra.mxu0 %v948
    %v6292 = vpop.f32.mrf.mxu0
    %v6293 = vadd.f32 %v6279, %v6292
    %v6294 = vpop.f32.mrf.mxu0
    %v6295 = vadd.f32 %v6281, %v6294
    %6296 = vdwg.mxu0
    %6297 = vmatpush.bf16.msra.mxu0 %v3821
    %6298 = vmatpush.bf16.msra.mxu0 %v3805
    %6299 = vmatpush.bf16.msra.mxu0 %v3789
    %6300 = vmatpush.bf16.msra.mxu0 %v3773
    %6301 = vmatpush.bf16.msra.mxu0 %v3757
    %6302 = vmatpush.bf16.msra.mxu0 %v3741
    %6303 = vmatpush.bf16.msra.mxu0 %v3725
    %6304 = vmatpush.bf16.msra.mxu0 %v3709
    %6305 = vmatmul.bf16.gmra.mxu0 %v949
    %v6306 = vpop.f32.mrf.mxu0
    %v6307 = vadd.f32 %v6293, %v6306
    %v6308 = vpop.f32.mrf.mxu0
    %v6309 = vadd.f32 %v6295, %v6308
    %6310 = vdwg.mxu0
    %6311 = vmatpush.bf16.msra.mxu0 %v3949
    %6312 = vmatpush.bf16.msra.mxu0 %v3933
    %6313 = vmatpush.bf16.msra.mxu0 %v3917
    %6314 = vmatpush.bf16.msra.mxu0 %v3901
    %6315 = vmatpush.bf16.msra.mxu0 %v3885
    %6316 = vmatpush.bf16.msra.mxu0 %v3869
    %6317 = vmatpush.bf16.msra.mxu0 %v3853
    %6318 = vmatpush.bf16.msra.mxu0 %v3837
    %6319 = vmatmul.bf16.gmra.mxu0 %v950
    %v6320 = vpop.f32.mrf.mxu0
    %v6321 = vadd.f32 %v6307, %v6320
    %v6322 = vpop.f32.mrf.mxu0
    %v6323 = vadd.f32 %v6309, %v6322
    %6324 = vdwg.mxu0
    %6325 = vmatpush.bf16.msra.mxu0 %v4077
    %6326 = vmatpush.bf16.msra.mxu0 %v4061
    %6327 = vmatpush.bf16.msra.mxu0 %v4045
    %6328 = vmatpush.bf16.msra.mxu0 %v4029
    %6329 = vmatpush.bf16.msra.mxu0 %v4013
    %6330 = vmatpush.bf16.msra.mxu0 %v3997
    %6331 = vmatpush.bf16.msra.mxu0 %v3981
    %6332 = vmatpush.bf16.msra.mxu0 %v3965
    %6333 = vmatmul.bf16.gmra.mxu0 %v951
    %v6334 = vpop.f32.mrf.mxu0
    %v6335 = vadd.f32 %v6321, %v6334
    %v6336 = vpop.f32.mrf.mxu0
    %v6337 = vadd.f32 %v6323, %v6336
    %6338 = vdwg.mxu0
    %6339 = vmatpush.bf16.msra.mxu0 0
    %6340 = vmatpush.bf16.msra.mxu0 0
    %6341 = vmatpush.bf16.msra.mxu0 0
    %6342 = vmatpush.bf16.msra.mxu0 0
    %6343 = vmatpush.bf16.msra.mxu0 0
    %6344 = vmatpush.bf16.msra.mxu0 0
    %6345 = vmatpush.bf16.msra.mxu0 0
    %6346 = vmatpush.bf16.msra.mxu0 %v4093
    %6347 = vmatmul.bf16.gmra.mxu0 %v4881
    %v6348 = vpop.f32.mrf.mxu0
    %v6349 = vadd.f32 %v6335, %v6348
    %v6350 = vpop.f32.mrf.mxu0
    %v6351 = vadd.f32 %v6337, %v6350
    %6352 = vdwg.mxu0
    %6353 = vmatpush.bf16.msra.mxu0 %v3438
    %6354 = vmatpush.bf16.msra.mxu0 %v3422
    %6355 = vmatpush.bf16.msra.mxu0 %v3406
    %6356 = vmatpush.bf16.msra.mxu0 %v3390
    %6357 = vmatpush.bf16.msra.mxu0 %v3374
    %6358 = vmatpush.bf16.msra.mxu0 %v3358
    %6359 = vmatpush.bf16.msra.mxu0 %v3342
    %6360 = vmatpush.bf16.msra.mxu0 %v3326
    %6361 = vmatmul.bf16.gmra.mxu0 %v946
    %v6362 = vpop.f32.mrf.mxu0
    %v6363 = vadd.f32 %v907, %v6362
    %v6364 = vpop.f32.mrf.mxu0
    %v6365 = vadd.f32 %v907, %v6364
    %6366 = vdwg.mxu0
    %6367 = vmatpush.bf16.msra.mxu0 %v3566
    %6368 = vmatpush.bf16.msra.mxu0 %v3550
    %6369 = vmatpush.bf16.msra.mxu0 %v3534
    %6370 = vmatpush.bf16.msra.mxu0 %v3518
    %6371 = vmatpush.bf16.msra.mxu0 %v3502
    %6372 = vmatpush.bf16.msra.mxu0 %v3486
    %6373 = vmatpush.bf16.msra.mxu0 %v3470
    %6374 = vmatpush.bf16.msra.mxu0 %v3454
    %6375 = vmatmul.bf16.gmra.mxu0 %v947
    %v6376 = vpop.f32.mrf.mxu0
    %v6377 = vadd.f32 %v6363, %v6376
    %v6378 = vpop.f32.mrf.mxu0
    %v6379 = vadd.f32 %v6365, %v6378
    %6380 = vdwg.mxu0
    %6381 = vmatpush.bf16.msra.mxu0 %v3694
    %6382 = vmatpush.bf16.msra.mxu0 %v3678
    %6383 = vmatpush.bf16.msra.mxu0 %v3662
    %6384 = vmatpush.bf16.msra.mxu0 %v3646
    %6385 = vmatpush.bf16.msra.mxu0 %v3630
    %6386 = vmatpush.bf16.msra.mxu0 %v3614
    %6387 = vmatpush.bf16.msra.mxu0 %v3598
    %6388 = vmatpush.bf16.msra.mxu0 %v3582
    %6389 = vmatmul.bf16.gmra.mxu0 %v948
    %v6390 = vpop.f32.mrf.mxu0
    %v6391 = vadd.f32 %v6377, %v6390
    %v6392 = vpop.f32.mrf.mxu0
    %v6393 = vadd.f32 %v6379, %v6392
    %6394 = vdwg.mxu0
    %6395 = vmatpush.bf16.msra.mxu0 %v3822
    %6396 = vmatpush.bf16.msra.mxu0 %v3806
    %6397 = vmatpush.bf16.msra.mxu0 %v3790
    %6398 = vmatpush.bf16.msra.mxu0 %v3774
    %6399 = vmatpush.bf16.msra.mxu0 %v3758
    %6400 = vmatpush.bf16.msra.mxu0 %v3742
    %6401 = vmatpush.bf16.msra.mxu0 %v3726
    %6402 = vmatpush.bf16.msra.mxu0 %v3710
    %6403 = vmatmul.bf16.gmra.mxu0 %v949
    %v6404 = vpop.f32.mrf.mxu0
    %v6405 = vadd.f32 %v6391, %v6404
    %v6406 = vpop.f32.mrf.mxu0
    %v6407 = vadd.f32 %v6393, %v6406
    %6408 = vdwg.mxu0
    %6409 = vmatpush.bf16.msra.mxu0 %v3950
    %6410 = vmatpush.bf16.msra.mxu0 %v3934
    %6411 = vmatpush.bf16.msra.mxu0 %v3918
    %6412 = vmatpush.bf16.msra.mxu0 %v3902
    %6413 = vmatpush.bf16.msra.mxu0 %v3886
    %6414 = vmatpush.bf16.msra.mxu0 %v3870
    %6415 = vmatpush.bf16.msra.mxu0 %v3854
    %6416 = vmatpush.bf16.msra.mxu0 %v3838
    %6417 = vmatmul.bf16.gmra.mxu0 %v950
    %v6418 = vpop.f32.mrf.mxu0
    %v6419 = vadd.f32 %v6405, %v6418
    %v6420 = vpop.f32.mrf.mxu0
    %v6421 = vadd.f32 %v6407, %v6420
    %6422 = vdwg.mxu0
    %6423 = vmatpush.bf16.msra.mxu0 %v4078
    %6424 = vmatpush.bf16.msra.mxu0 %v4062
    %6425 = vmatpush.bf16.msra.mxu0 %v4046
    %6426 = vmatpush.bf16.msra.mxu0 %v4030
    %6427 = vmatpush.bf16.msra.mxu0 %v4014
    %6428 = vmatpush.bf16.msra.mxu0 %v3998
    %6429 = vmatpush.bf16.msra.mxu0 %v3982
    %6430 = vmatpush.bf16.msra.mxu0 %v3966
    %6431 = vmatmul.bf16.gmra.mxu0 %v951
    %v6432 = vpop.f32.mrf.mxu0
    %v6433 = vadd.f32 %v6419, %v6432
    %v6434 = vpop.f32.mrf.mxu0
    %v6435 = vadd.f32 %v6421, %v6434
    %6436 = vdwg.mxu0
    %6437 = vmatpush.bf16.msra.mxu0 0
    %6438 = vmatpush.bf16.msra.mxu0 0
    %6439 = vmatpush.bf16.msra.mxu0 0
    %6440 = vmatpush.bf16.msra.mxu0 0
    %6441 = vmatpush.bf16.msra.mxu0 0
    %6442 = vmatpush.bf16.msra.mxu0 0
    %6443 = vmatpush.bf16.msra.mxu0 0
    %6444 = vmatpush.bf16.msra.mxu0 %v4094
    %6445 = vmatmul.bf16.gmra.mxu0 %v4881
    %v6446 = vpop.f32.mrf.mxu0
    %v6447 = vadd.f32 %v6433, %v6446
    %v6448 = vpop.f32.mrf.mxu0
    %v6449 = vadd.f32 %v6435, %v6448
    %6450 = vdwg.mxu0
    %v6451 = vpack.c.bf16 %v4979, %v4977
    %v6452 = vpack.c.bf16 %v5077, %v5075
    %v6453 = vpack.c.bf16 %v5175, %v5173
    %v6454 = vpack.c.bf16 %v5273, %v5271
    %v6455 = vpack.c.bf16 %v5371, %v5369
    %v6456 = vpack.c.bf16 %v5469, %v5467
    %v6457 = vpack.c.bf16 %v5567, %v5565
    %v6458 = vpack.c.bf16 %v5665, %v5663
    %v6459 = vpack.c.bf16 %v5763, %v5761
    %v6460 = vpack.c.bf16 %v5861, %v5859
    %v6461 = vpack.c.bf16 %v5959, %v5957
    %v6462 = vpack.c.bf16 %v6057, %v6055
    %v6463 = vpack.c.bf16 %v6155, %v6153
    %v6464 = vpack.c.bf16 %v6253, %v6251
    %v6465 = vpack.c.bf16 %v6351, %v6349
    %v6466 = vpack.c.bf16 %v6449, %v6447
    %v6467 = vld [vmem:[#allocation8] sm:$0xf]
    %v6468 = vld [vmem:[#allocation8 + $0x4] sm:$0xf]
    %v6469 = vld [vmem:[#allocation8 + $0x8] sm:$0xf]
    %v6470 = vld [vmem:[#allocation8 + $0xc] sm:$0xf]
    %v6471 = vld [vmem:[#allocation8 + $0x10] sm:$0xf]
    %v6472 = vld [vmem:[#allocation8 + $0x14] sm:$0xf]
    %v6473 = vld [vmem:[#allocation8 + $0x18] sm:$0xf]
    %v6474 = vld [vmem:[#allocation8 + $0x1c] sm:$0xf]
    %v6475 = vld [vmem:[#allocation8 + $0x20] sm:$0xf]
    %v6476 = vld [vmem:[#allocation8 + $0x24] sm:$0xf]
    %v6477 = vld [vmem:[#allocation8 + $0x28] sm:$0xf]
    %v6478 = vld [vmem:[#allocation8 + $0x2c] sm:$0xf]
    %v6479 = vld [vmem:[#allocation8 + $0x30] sm:$0xf]
    %v6480 = vld [vmem:[#allocation8 + $0x34] sm:$0xf]
    %v6481 = vld [vmem:[#allocation8 + $0x38] sm:$0xf]
    %v6482 = vld [vmem:[#allocation8 + $0x3c] sm:$0xf]
    %v6483 = vld [vmem:[#allocation8 + $0x40] sm:$0xf]
    %v6484 = vld [vmem:[#allocation8 + $0x44] sm:$0xf]
    %v6485 = vld [vmem:[#allocation8 + $0x48] sm:$0xf]
    %v6486 = vld [vmem:[#allocation8 + $0x4c] sm:$0xf]
    %v6487 = vld [vmem:[#allocation8 + $0x50] sm:$0xf]
    %v6488 = vld [vmem:[#allocation8 + $0x54] sm:$0xf]
    %v6489 = vld [vmem:[#allocation8 + $0x58] sm:$0xf]
    %v6490 = vld [vmem:[#allocation8 + $0x5c] sm:$0xf]
    %v6491 = vld [vmem:[#allocation8 + $0x60] sm:$0xf]
    %v6492 = vld [vmem:[#allocation8 + $0x64] sm:$0xf]
    %v6493 = vld [vmem:[#allocation8 + $0x68] sm:$0xf]
    %v6494 = vld [vmem:[#allocation8 + $0x6c] sm:$0xf]
    %v6495 = vld [vmem:[#allocation8 + $0x70] sm:$0xf]
    %v6496 = vld [vmem:[#allocation8 + $0x74] sm:$0xf]
    %v6497 = vld [vmem:[#allocation8 + $0x78] sm:$0xf]
    %v6498 = vld [vmem:[#allocation8 + $0x7c] sm:$0xf]
    %v6499 = vld [vmem:[#allocation8 + $0x80] sm:$0xf]
    %v6500 = vld [vmem:[#allocation8 + $0x84] sm:$0xf]
    %v6501 = vld [vmem:[#allocation8 + $0x88] sm:$0xf]
    %v6502 = vld [vmem:[#allocation8 + $0x8c] sm:$0xf]
    %v6503 = vld [vmem:[#allocation8 + $0x90] sm:$0xf]
    %v6504 = vld [vmem:[#allocation8 + $0x94] sm:$0xf]
    %v6505 = vld [vmem:[#allocation8 + $0x98] sm:$0xf]
    %v6506 = vld [vmem:[#allocation8 + $0x9c] sm:$0xf]
    %v6507 = vld [vmem:[#allocation8 + $0xa0] sm:$0xf]
    %v6508 = vld [vmem:[#allocation8 + $0xa4] sm:$0xf]
    %v6509 = vld [vmem:[#allocation8 + $0xa8] sm:$0xf]
    %v6510 = vld [vmem:[#allocation8 + $0xac] sm:$0xf]
    %v6511 = vld [vmem:[#allocation8 + $0xb0] sm:$0xf]
    %v6512 = vld [vmem:[#allocation8 + $0xb4] sm:$0xf]
    %v6513 = vld [vmem:[#allocation8 + $0xb8] sm:$0xf]
    %v6514 = vld [vmem:[#allocation8 + $0xbc] sm:$0xf]
    %v6515 = vld [vmem:[#allocation8 + $0xc0] sm:$0xf]
    %v6516 = vld [vmem:[#allocation8 + $0xc4] sm:$0xf]
    %v6517 = vld [vmem:[#allocation8 + $0xc8] sm:$0xf]
    %v6518 = vld [vmem:[#allocation8 + $0xcc] sm:$0xf]
    %v6519 = vld [vmem:[#allocation8 + $0xd0] sm:$0xf]
    %v6520 = vld [vmem:[#allocation8 + $0xd4] sm:$0xf]
    %v6521 = vld [vmem:[#allocation8 + $0xd8] sm:$0xf]
    %v6522 = vld [vmem:[#allocation8 + $0xdc] sm:$0xf]
    %v6523 = vld [vmem:[#allocation8 + $0xe0] sm:$0xf]
    %v6524 = vld [vmem:[#allocation8 + $0xe4] sm:$0xf]
    %v6525 = vld [vmem:[#allocation8 + $0xe8] sm:$0xf]
    %v6526 = vld [vmem:[#allocation8 + $0xec] sm:$0xf]
    %v6527 = vld [vmem:[#allocation8 + $0xf0] sm:$0xf]
    %v6528 = vld [vmem:[#allocation8 + $0xf4] sm:$0xf]
    %v6529 = vld [vmem:[#allocation8 + $0xf8] sm:$0xf]
    %v6530 = vld [vmem:[#allocation8 + $0xfc] sm:$0xf]
    %v6531 = vld [vmem:[#allocation8 + $0x100] sm:$0xf]
    %v6532 = vld [vmem:[#allocation8 + $0x104] sm:$0xf]
    %v6533 = vld [vmem:[#allocation8 + $0x108] sm:$0xf]
    %v6534 = vld [vmem:[#allocation8 + $0x10c] sm:$0xf]
    %v6535 = vld [vmem:[#allocation8 + $0x110] sm:$0xf]
    %v6536 = vld [vmem:[#allocation8 + $0x114] sm:$0xf]
    %v6537 = vld [vmem:[#allocation8 + $0x118] sm:$0xf]
    %v6538 = vld [vmem:[#allocation8 + $0x11c] sm:$0xf]
    %v6539 = vld [vmem:[#allocation8 + $0x120] sm:$0xf]
    %v6540 = vld [vmem:[#allocation8 + $0x124] sm:$0xf]
    %v6541 = vld [vmem:[#allocation8 + $0x128] sm:$0xf]
    %v6542 = vld [vmem:[#allocation8 + $0x12c] sm:$0xf]
    %v6543 = vld [vmem:[#allocation8 + $0x130] sm:$0xf]
    %v6544 = vld [vmem:[#allocation8 + $0x134] sm:$0xf]
    %v6545 = vld [vmem:[#allocation8 + $0x138] sm:$0xf]
    %v6546 = vld [vmem:[#allocation8 + $0x13c] sm:$0xf]
    %v6547 = vld [vmem:[#allocation8 + $0x140] sm:$0xf]
    %v6548 = vld [vmem:[#allocation8 + $0x144] sm:$0xf]
    %v6549 = vld [vmem:[#allocation8 + $0x148] sm:$0xf]
    %v6550 = vld [vmem:[#allocation8 + $0x14c] sm:$0xf]
    %v6551 = vld [vmem:[#allocation8 + $0x150] sm:$0xf]
    %v6552 = vld [vmem:[#allocation8 + $0x154] sm:$0xf]
    %v6553 = vld [vmem:[#allocation8 + $0x158] sm:$0xf]
    %v6554 = vld [vmem:[#allocation8 + $0x15c] sm:$0xf]
    %v6555 = vld [vmem:[#allocation8 + $0x160] sm:$0xf]
    %v6556 = vld [vmem:[#allocation8 + $0x164] sm:$0xf]
    %v6557 = vld [vmem:[#allocation8 + $0x168] sm:$0xf]
    %v6558 = vld [vmem:[#allocation8 + $0x16c] sm:$0xf]
    %v6559 = vld [vmem:[#allocation8 + $0x170] sm:$0xf]
    %v6560 = vld [vmem:[#allocation8 + $0x174] sm:$0xf]
    %v6561 = vld [vmem:[#allocation8 + $0x178] sm:$0xf]
    %v6562 = vld [vmem:[#allocation8 + $0x17c] sm:$0xf]
    %v6563 = vld [vmem:[#allocation8 + $0x180] sm:$0xf]
    %v6564 = vld [vmem:[#allocation8 + $0x184] sm:$0xf]
    %v6565 = vld [vmem:[#allocation8 + $0x188] sm:$0xf]
    %v6566 = vld [vmem:[#allocation8 + $0x18c] sm:$0xf]
    %v6567 = vld [vmem:[#allocation8 + $0x190] sm:$0xf]
    %v6568 = vld [vmem:[#allocation8 + $0x194] sm:$0xf]
    %v6569 = vld [vmem:[#allocation8 + $0x198] sm:$0xf]
    %v6570 = vld [vmem:[#allocation8 + $0x19c] sm:$0xf]
    %v6571 = vld [vmem:[#allocation8 + $0x1a0] sm:$0xf]
    %v6572 = vld [vmem:[#allocation8 + $0x1a4] sm:$0xf]
    %v6573 = vld [vmem:[#allocation8 + $0x1a8] sm:$0xf]
    %v6574 = vld [vmem:[#allocation8 + $0x1ac] sm:$0xf]
    %v6575 = vld [vmem:[#allocation8 + $0x1b0] sm:$0xf]
    %v6576 = vld [vmem:[#allocation8 + $0x1b4] sm:$0xf]
    %v6577 = vld [vmem:[#allocation8 + $0x1b8] sm:$0xf]
    %v6578 = vld [vmem:[#allocation8 + $0x1bc] sm:$0xf]
    %v6579 = vld [vmem:[#allocation8 + $0x1c0] sm:$0xf]
    %v6580 = vld [vmem:[#allocation8 + $0x1c4] sm:$0xf]
    %v6581 = vld [vmem:[#allocation8 + $0x1c8] sm:$0xf]
    %v6582 = vld [vmem:[#allocation8 + $0x1cc] sm:$0xf]
    %v6583 = vld [vmem:[#allocation8 + $0x1d0] sm:$0xf]
    %v6584 = vld [vmem:[#allocation8 + $0x1d4] sm:$0xf]
    %v6585 = vld [vmem:[#allocation8 + $0x1d8] sm:$0xf]
    %v6586 = vld [vmem:[#allocation8 + $0x1dc] sm:$0xf]
    %v6587 = vld [vmem:[#allocation8 + $0x1e0] sm:$0xf]
    %v6588 = vld [vmem:[#allocation8 + $0x1e4] sm:$0xf]
    %v6589 = vld [vmem:[#allocation8 + $0x1e8] sm:$0xf]
    %v6590 = vld [vmem:[#allocation8 + $0x1ec] sm:$0xf]
    %v6591 = vld [vmem:[#allocation8 + $0x1f0] sm:$0xf]
    %v6592 = vld [vmem:[#allocation8 + $0x1f4] sm:$0xf]
    %v6593 = vld [vmem:[#allocation8 + $0x1f8] sm:$0xf]
    %v6594 = vld [vmem:[#allocation8 + $0x1fc] sm:$0xf]
    %v6595 = vld [vmem:[#allocation8 + $0x200] sm:$0xf]
    %v6596 = vld [vmem:[#allocation8 + $0x204] sm:$0xf]
    %v6597 = vld [vmem:[#allocation8 + $0x208] sm:$0xf]
    %v6598 = vld [vmem:[#allocation8 + $0x20c] sm:$0xf]
    %v6599 = vld [vmem:[#allocation8 + $0x210] sm:$0xf]
    %v6600 = vld [vmem:[#allocation8 + $0x214] sm:$0xf]
    %v6601 = vld [vmem:[#allocation8 + $0x218] sm:$0xf]
    %v6602 = vld [vmem:[#allocation8 + $0x21c] sm:$0xf]
    %v6603 = vld [vmem:[#allocation8 + $0x220] sm:$0xf]
    %v6604 = vld [vmem:[#allocation8 + $0x224] sm:$0xf]
    %v6605 = vld [vmem:[#allocation8 + $0x228] sm:$0xf]
    %v6606 = vld [vmem:[#allocation8 + $0x22c] sm:$0xf]
    %v6607 = vld [vmem:[#allocation8 + $0x230] sm:$0xf]
    %v6608 = vld [vmem:[#allocation8 + $0x234] sm:$0xf]
    %v6609 = vld [vmem:[#allocation8 + $0x238] sm:$0xf]
    %v6610 = vld [vmem:[#allocation8 + $0x23c] sm:$0xf]
    %v6611 = vld [vmem:[#allocation8 + $0x240] sm:$0xf]
    %v6612 = vld [vmem:[#allocation8 + $0x244] sm:$0xf]
    %v6613 = vld [vmem:[#allocation8 + $0x248] sm:$0xf]
    %v6614 = vld [vmem:[#allocation8 + $0x24c] sm:$0xf]
    %v6615 = vld [vmem:[#allocation8 + $0x250] sm:$0xf]
    %v6616 = vld [vmem:[#allocation8 + $0x254] sm:$0xf]
    %v6617 = vld [vmem:[#allocation8 + $0x258] sm:$0xf]
    %v6618 = vld [vmem:[#allocation8 + $0x25c] sm:$0xf]
    %v6619 = vld [vmem:[#allocation8 + $0x260] sm:$0xf]
    %v6620 = vld [vmem:[#allocation8 + $0x264] sm:$0xf]
    %v6621 = vld [vmem:[#allocation8 + $0x268] sm:$0xf]
    %v6622 = vld [vmem:[#allocation8 + $0x26c] sm:$0xf]
    %v6623 = vld [vmem:[#allocation8 + $0x270] sm:$0xf]
    %v6624 = vld [vmem:[#allocation8 + $0x274] sm:$0xf]
    %v6625 = vld [vmem:[#allocation8 + $0x278] sm:$0xf]
    %v6626 = vld [vmem:[#allocation8 + $0x27c] sm:$0xf]
    %v6627 = vld [vmem:[#allocation8 + $0x280] sm:$0xf]
    %v6628 = vld [vmem:[#allocation8 + $0x284] sm:$0xf]
    %v6629 = vld [vmem:[#allocation8 + $0x288] sm:$0xf]
    %v6630 = vld [vmem:[#allocation8 + $0x28c] sm:$0xf]
    %v6631 = vld [vmem:[#allocation8 + $0x290] sm:$0xf]
    %v6632 = vld [vmem:[#allocation8 + $0x294] sm:$0xf]
    %v6633 = vld [vmem:[#allocation8 + $0x298] sm:$0xf]
    %v6634 = vld [vmem:[#allocation8 + $0x29c] sm:$0xf]
    %v6635 = vld [vmem:[#allocation8 + $0x2a0] sm:$0xf]
    %v6636 = vld [vmem:[#allocation8 + $0x2a4] sm:$0xf]
    %v6637 = vld [vmem:[#allocation8 + $0x2a8] sm:$0xf]
    %v6638 = vld [vmem:[#allocation8 + $0x2ac] sm:$0xf]
    %v6639 = vld [vmem:[#allocation8 + $0x2b0] sm:$0xf]
    %v6640 = vld [vmem:[#allocation8 + $0x2b4] sm:$0xf]
    %v6641 = vld [vmem:[#allocation8 + $0x2b8] sm:$0xf]
    %v6642 = vld [vmem:[#allocation8 + $0x2bc] sm:$0xf]
    %v6643 = vld [vmem:[#allocation8 + $0x2c0] sm:$0xf]
    %v6644 = vld [vmem:[#allocation8 + $0x2c4] sm:$0xf]
    %v6645 = vld [vmem:[#allocation8 + $0x2c8] sm:$0xf]
    %v6646 = vld [vmem:[#allocation8 + $0x2cc] sm:$0xf]
    %v6647 = vld [vmem:[#allocation8 + $0x2d0] sm:$0xf]
    %v6648 = vld [vmem:[#allocation8 + $0x2d4] sm:$0xf]
    %v6649 = vld [vmem:[#allocation8 + $0x2d8] sm:$0xf]
    %v6650 = vld [vmem:[#allocation8 + $0x2dc] sm:$0xf]
    %v6651 = vld [vmem:[#allocation8 + $0x2e0] sm:$0xf]
    %v6652 = vld [vmem:[#allocation8 + $0x2e4] sm:$0xf]
    %v6653 = vld [vmem:[#allocation8 + $0x2e8] sm:$0xf]
    %v6654 = vld [vmem:[#allocation8 + $0x2ec] sm:$0xf]
    %v6655 = vld [vmem:[#allocation8 + $0x2f0] sm:$0xf]
    %v6656 = vld [vmem:[#allocation8 + $0x2f4] sm:$0xf]
    %v6657 = vld [vmem:[#allocation8 + $0x2f8] sm:$0xf]
    %v6658 = vld [vmem:[#allocation8 + $0x2fc] sm:$0xf]
    %v6659 = vld [vmem:[#allocation8 + $0x300] sm:$0xf]
    %v6660 = vld [vmem:[#allocation8 + $0x304] sm:$0xf]
    %v6661 = vld [vmem:[#allocation8 + $0x308] sm:$0xf]
    %v6662 = vld [vmem:[#allocation8 + $0x30c] sm:$0xf]
    %v6663 = vld [vmem:[#allocation8 + $0x310] sm:$0xf]
    %v6664 = vld [vmem:[#allocation8 + $0x314] sm:$0xf]
    %v6665 = vld [vmem:[#allocation8 + $0x318] sm:$0xf]
    %v6666 = vld [vmem:[#allocation8 + $0x31c] sm:$0xf]
    %v6667 = vld [vmem:[#allocation8 + $0x320] sm:$0xf]
    %v6668 = vld [vmem:[#allocation8 + $0x324] sm:$0xf]
    %v6669 = vld [vmem:[#allocation8 + $0x328] sm:$0xf]
    %v6670 = vld [vmem:[#allocation8 + $0x32c] sm:$0xf]
    %v6671 = vld [vmem:[#allocation8 + $0x330] sm:$0xf]
    %v6672 = vld [vmem:[#allocation8 + $0x334] sm:$0xf]
    %v6673 = vld [vmem:[#allocation8 + $0x338] sm:$0xf]
    %v6674 = vld [vmem:[#allocation8 + $0x33c] sm:$0xf]
    %v6675 = vld [vmem:[#allocation8 + $0x340] sm:$0xf]
    %v6676 = vld [vmem:[#allocation8 + $0x344] sm:$0xf]
    %v6677 = vld [vmem:[#allocation8 + $0x348] sm:$0xf]
    %v6678 = vld [vmem:[#allocation8 + $0x34c] sm:$0xf]
    %v6679 = vld [vmem:[#allocation8 + $0x350] sm:$0xf]
    %v6680 = vld [vmem:[#allocation8 + $0x354] sm:$0xf]
    %v6681 = vld [vmem:[#allocation8 + $0x358] sm:$0xf]
    %v6682 = vld [vmem:[#allocation8 + $0x35c] sm:$0xf]
    %v6683 = vld [vmem:[#allocation8 + $0x360] sm:$0xf]
    %v6684 = vld [vmem:[#allocation8 + $0x364] sm:$0xf]
    %v6685 = vld [vmem:[#allocation8 + $0x368] sm:$0xf]
    %v6686 = vld [vmem:[#allocation8 + $0x36c] sm:$0xf]
    %v6687 = vld [vmem:[#allocation8 + $0x370] sm:$0xf]
    %v6688 = vld [vmem:[#allocation8 + $0x374] sm:$0xf]
    %v6689 = vld [vmem:[#allocation8 + $0x378] sm:$0xf]
    %v6690 = vld [vmem:[#allocation8 + $0x37c] sm:$0xf]
    %v6691 = vld [vmem:[#allocation8 + $0x380] sm:$0xf]
    %v6692 = vld [vmem:[#allocation8 + $0x384] sm:$0xf]
    %v6693 = vld [vmem:[#allocation8 + $0x388] sm:$0xf]
    %v6694 = vld [vmem:[#allocation8 + $0x38c] sm:$0xf]
    %v6695 = vld [vmem:[#allocation8 + $0x390] sm:$0xf]
    %v6696 = vld [vmem:[#allocation8 + $0x394] sm:$0xf]
    %v6697 = vld [vmem:[#allocation8 + $0x398] sm:$0xf]
    %v6698 = vld [vmem:[#allocation8 + $0x39c] sm:$0xf]
    %v6699 = vld [vmem:[#allocation8 + $0x3a0] sm:$0xf]
    %v6700 = vld [vmem:[#allocation8 + $0x3a4] sm:$0xf]
    %v6701 = vld [vmem:[#allocation8 + $0x3a8] sm:$0xf]
    %v6702 = vld [vmem:[#allocation8 + $0x3ac] sm:$0xf]
    %v6703 = vld [vmem:[#allocation8 + $0x3b0] sm:$0xf]
    %v6704 = vld [vmem:[#allocation8 + $0x3b4] sm:$0xf]
    %v6705 = vld [vmem:[#allocation8 + $0x3b8] sm:$0xf]
    %v6706 = vld [vmem:[#allocation8 + $0x3bc] sm:$0xf]
    %v6707 = vld [vmem:[#allocation8 + $0x3c0] sm:$0xf]
    %v6708 = vld [vmem:[#allocation8 + $0x3c4] sm:$0xf]
    %v6709 = vld [vmem:[#allocation8 + $0x3c8] sm:$0xf]
    %v6710 = vld [vmem:[#allocation8 + $0x3cc] sm:$0xf]
    %v6711 = vld [vmem:[#allocation8 + $0x3d0] sm:$0xf]
    %v6712 = vld [vmem:[#allocation8 + $0x3d4] sm:$0xf]
    %v6713 = vld [vmem:[#allocation8 + $0x3d8] sm:$0xf]
    %v6714 = vld [vmem:[#allocation8 + $0x3dc] sm:$0xf]
    %v6715 = vld [vmem:[#allocation8 + $0x3e0] sm:$0xf]
    %v6716 = vld [vmem:[#allocation8 + $0x3e4] sm:$0xf]
    %v6717 = vld [vmem:[#allocation8 + $0x3e8] sm:$0xf]
    %v6718 = vld [vmem:[#allocation8 + $0x3ec] sm:$0xf]
    %v6719 = vld [vmem:[#allocation8 + $0x3f0] sm:$0xf]
    %v6720 = vld [vmem:[#allocation8 + $0x3f4] sm:$0xf]
    %v6721 = vld [vmem:[#allocation8 + $0x3f8] sm:$0xf]
    %v6722 = vld [vmem:[#allocation8 + $0x3fc] sm:$0xf]
    %v6723 = vld [vmem:[#allocation10] sm:$0x1]
    %v6725 = vperm.slane %v6723, 0
    %v6983 = vunpack.c.l.b16 %v6467
    %v6984 = vunpack.c.l.b16 %v6468
    %v6985 = vunpack.c.l.b16 %v6469
    %v6986 = vunpack.c.l.b16 %v6470
    %v6987 = vunpack.c.l.b16 %v6471
    %v6988 = vunpack.c.l.b16 %v6472
    %v6989 = vunpack.c.l.b16 %v6473
    %v6990 = vunpack.c.l.b16 %v6474
    %v6991 = vunpack.c.l.b16 %v6475
    %v6992 = vunpack.c.l.b16 %v6476
    %v6993 = vunpack.c.l.b16 %v6477
    %v6994 = vunpack.c.l.b16 %v6478
    %v6995 = vunpack.c.l.b16 %v6479
    %v6996 = vunpack.c.l.b16 %v6480
    %v6997 = vunpack.c.l.b16 %v6481
    %v6998 = vunpack.c.l.b16 %v6482
    %v6999 = vunpack.c.l.b16 %v6483
    %v7000 = vunpack.c.l.b16 %v6484
    %v7001 = vunpack.c.l.b16 %v6485
    %v7002 = vunpack.c.l.b16 %v6486
    %v7003 = vunpack.c.l.b16 %v6487
    %v7004 = vunpack.c.l.b16 %v6488
    %v7005 = vunpack.c.l.b16 %v6489
    %v7006 = vunpack.c.l.b16 %v6490
    %v7007 = vunpack.c.l.b16 %v6491
    %v7008 = vunpack.c.l.b16 %v6492
    %v7009 = vunpack.c.l.b16 %v6493
    %v7010 = vunpack.c.l.b16 %v6494
    %v7011 = vunpack.c.l.b16 %v6495
    %v7012 = vunpack.c.l.b16 %v6496
    %v7013 = vunpack.c.l.b16 %v6497
    %v7014 = vunpack.c.l.b16 %v6498
    %v7015 = vunpack.c.l.b16 %v6499
    %v7016 = vunpack.c.l.b16 %v6500
    %v7017 = vunpack.c.l.b16 %v6501
    %v7018 = vunpack.c.l.b16 %v6502
    %v7019 = vunpack.c.l.b16 %v6503
    %v7020 = vunpack.c.l.b16 %v6504
    %v7021 = vunpack.c.l.b16 %v6505
    %v7022 = vunpack.c.l.b16 %v6506
    %v7023 = vunpack.c.l.b16 %v6507
    %v7024 = vunpack.c.l.b16 %v6508
    %v7025 = vunpack.c.l.b16 %v6509
    %v7026 = vunpack.c.l.b16 %v6510
    %v7027 = vunpack.c.l.b16 %v6511
    %v7028 = vunpack.c.l.b16 %v6512
    %v7029 = vunpack.c.l.b16 %v6513
    %v7030 = vunpack.c.l.b16 %v6514
    %v7031 = vunpack.c.l.b16 %v6515
    %v7032 = vunpack.c.l.b16 %v6516
    %v7033 = vunpack.c.l.b16 %v6517
    %v7034 = vunpack.c.l.b16 %v6518
    %v7035 = vunpack.c.l.b16 %v6519
    %v7036 = vunpack.c.l.b16 %v6520
    %v7037 = vunpack.c.l.b16 %v6521
    %v7038 = vunpack.c.l.b16 %v6522
    %v7039 = vunpack.c.l.b16 %v6523
    %v7040 = vunpack.c.l.b16 %v6524
    %v7041 = vunpack.c.l.b16 %v6525
    %v7042 = vunpack.c.l.b16 %v6526
    %v7043 = vunpack.c.l.b16 %v6527
    %v7044 = vunpack.c.l.b16 %v6528
    %v7045 = vunpack.c.l.b16 %v6529
    %v7046 = vunpack.c.l.b16 %v6530
    %v7047 = vunpack.c.l.b16 %v6531
    %v7048 = vunpack.c.l.b16 %v6532
    %v7049 = vunpack.c.l.b16 %v6533
    %v7050 = vunpack.c.l.b16 %v6534
    %v7051 = vunpack.c.l.b16 %v6535
    %v7052 = vunpack.c.l.b16 %v6536
    %v7053 = vunpack.c.l.b16 %v6537
    %v7054 = vunpack.c.l.b16 %v6538
    %v7055 = vunpack.c.l.b16 %v6539
    %v7056 = vunpack.c.l.b16 %v6540
    %v7057 = vunpack.c.l.b16 %v6541
    %v7058 = vunpack.c.l.b16 %v6542
    %v7059 = vunpack.c.l.b16 %v6543
    %v7060 = vunpack.c.l.b16 %v6544
    %v7061 = vunpack.c.l.b16 %v6545
    %v7062 = vunpack.c.l.b16 %v6546
    %v7063 = vunpack.c.l.b16 %v6547
    %v7064 = vunpack.c.l.b16 %v6548
    %v7065 = vunpack.c.l.b16 %v6549
    %v7066 = vunpack.c.l.b16 %v6550
    %v7067 = vunpack.c.l.b16 %v6551
    %v7068 = vunpack.c.l.b16 %v6552
    %v7069 = vunpack.c.l.b16 %v6553
    %v7070 = vunpack.c.l.b16 %v6554
    %v7071 = vunpack.c.l.b16 %v6555
    %v7072 = vunpack.c.l.b16 %v6556
    %v7073 = vunpack.c.l.b16 %v6557
    %v7074 = vunpack.c.l.b16 %v6558
    %v7075 = vunpack.c.l.b16 %v6559
    %v7076 = vunpack.c.l.b16 %v6560
    %v7077 = vunpack.c.l.b16 %v6561
    %v7078 = vunpack.c.l.b16 %v6562
    %v7079 = vunpack.c.l.b16 %v6563
    %v7080 = vunpack.c.l.b16 %v6564
    %v7081 = vunpack.c.l.b16 %v6565
    %v7082 = vunpack.c.l.b16 %v6566
    %v7083 = vunpack.c.l.b16 %v6567
    %v7084 = vunpack.c.l.b16 %v6568
    %v7085 = vunpack.c.l.b16 %v6569
    %v7086 = vunpack.c.l.b16 %v6570
    %v7087 = vunpack.c.l.b16 %v6571
    %v7088 = vunpack.c.l.b16 %v6572
    %v7089 = vunpack.c.l.b16 %v6573
    %v7090 = vunpack.c.l.b16 %v6574
    %v7091 = vunpack.c.l.b16 %v6575
    %v7092 = vunpack.c.l.b16 %v6576
    %v7093 = vunpack.c.l.b16 %v6577
    %v7094 = vunpack.c.l.b16 %v6578
    %v7095 = vunpack.c.l.b16 %v6579
    %v7096 = vunpack.c.l.b16 %v6580
    %v7097 = vunpack.c.l.b16 %v6581
    %v7098 = vunpack.c.l.b16 %v6582
    %v7099 = vunpack.c.l.b16 %v6583
    %v7100 = vunpack.c.l.b16 %v6584
    %v7101 = vunpack.c.l.b16 %v6585
    %v7102 = vunpack.c.l.b16 %v6586
    %v7103 = vunpack.c.l.b16 %v6587
    %v7104 = vunpack.c.l.b16 %v6588
    %v7105 = vunpack.c.l.b16 %v6589
    %v7106 = vunpack.c.l.b16 %v6590
    %v7107 = vunpack.c.l.b16 %v6591
    %v7108 = vunpack.c.l.b16 %v6592
    %v7109 = vunpack.c.l.b16 %v6593
    %v7110 = vunpack.c.l.b16 %v6594
    %v7111 = vunpack.c.l.b16 %v6595
    %v7112 = vunpack.c.l.b16 %v6596
    %v7113 = vunpack.c.l.b16 %v6597
    %v7114 = vunpack.c.l.b16 %v6598
    %v7115 = vunpack.c.l.b16 %v6599
    %v7116 = vunpack.c.l.b16 %v6600
    %v7117 = vunpack.c.l.b16 %v6601
    %v7118 = vunpack.c.l.b16 %v6602
    %v7119 = vunpack.c.l.b16 %v6603
    %v7120 = vunpack.c.l.b16 %v6604
    %v7121 = vunpack.c.l.b16 %v6605
    %v7122 = vunpack.c.l.b16 %v6606
    %v7123 = vunpack.c.l.b16 %v6607
    %v7124 = vunpack.c.l.b16 %v6608
    %v7125 = vunpack.c.l.b16 %v6609
    %v7126 = vunpack.c.l.b16 %v6610
    %v7127 = vunpack.c.l.b16 %v6611
    %v7128 = vunpack.c.l.b16 %v6612
    %v7129 = vunpack.c.l.b16 %v6613
    %v7130 = vunpack.c.l.b16 %v6614
    %v7131 = vunpack.c.l.b16 %v6615
    %v7132 = vunpack.c.l.b16 %v6616
    %v7133 = vunpack.c.l.b16 %v6617
    %v7134 = vunpack.c.l.b16 %v6618
    %v7135 = vunpack.c.l.b16 %v6619
    %v7136 = vunpack.c.l.b16 %v6620
    %v7137 = vunpack.c.l.b16 %v6621
    %v7138 = vunpack.c.l.b16 %v6622
    %v7139 = vunpack.c.l.b16 %v6623
    %v7140 = vunpack.c.l.b16 %v6624
    %v7141 = vunpack.c.l.b16 %v6625
    %v7142 = vunpack.c.l.b16 %v6626
    %v7143 = vunpack.c.l.b16 %v6627
    %v7144 = vunpack.c.l.b16 %v6628
    %v7145 = vunpack.c.l.b16 %v6629
    %v7146 = vunpack.c.l.b16 %v6630
    %v7147 = vunpack.c.l.b16 %v6631
    %v7148 = vunpack.c.l.b16 %v6632
    %v7149 = vunpack.c.l.b16 %v6633
    %v7150 = vunpack.c.l.b16 %v6634
    %v7151 = vunpack.c.l.b16 %v6635
    %v7152 = vunpack.c.l.b16 %v6636
    %v7153 = vunpack.c.l.b16 %v6637
    %v7154 = vunpack.c.l.b16 %v6638
    %v7155 = vunpack.c.l.b16 %v6639
    %v7156 = vunpack.c.l.b16 %v6640
    %v7157 = vunpack.c.l.b16 %v6641
    %v7158 = vunpack.c.l.b16 %v6642
    %v7159 = vunpack.c.l.b16 %v6643
    %v7160 = vunpack.c.l.b16 %v6644
    %v7161 = vunpack.c.l.b16 %v6645
    %v7162 = vunpack.c.l.b16 %v6646
    %v7163 = vunpack.c.l.b16 %v6647
    %v7164 = vunpack.c.l.b16 %v6648
    %v7165 = vunpack.c.l.b16 %v6649
    %v7166 = vunpack.c.l.b16 %v6650
    %v7167 = vunpack.c.l.b16 %v6651
    %v7168 = vunpack.c.l.b16 %v6652
    %v7169 = vunpack.c.l.b16 %v6653
    %v7170 = vunpack.c.l.b16 %v6654
    %v7171 = vunpack.c.l.b16 %v6655
    %v7172 = vunpack.c.l.b16 %v6656
    %v7173 = vunpack.c.l.b16 %v6657
    %v7174 = vunpack.c.l.b16 %v6658
    %v7175 = vunpack.c.l.b16 %v6659
    %v7176 = vunpack.c.l.b16 %v6660
    %v7177 = vunpack.c.l.b16 %v6661
    %v7178 = vunpack.c.l.b16 %v6662
    %v7179 = vunpack.c.l.b16 %v6663
    %v7180 = vunpack.c.l.b16 %v6664
    %v7181 = vunpack.c.l.b16 %v6665
    %v7182 = vunpack.c.l.b16 %v6666
    %v7183 = vunpack.c.l.b16 %v6667
    %v7184 = vunpack.c.l.b16 %v6668
    %v7185 = vunpack.c.l.b16 %v6669
    %v7186 = vunpack.c.l.b16 %v6670
    %v7187 = vunpack.c.l.b16 %v6671
    %v7188 = vunpack.c.l.b16 %v6672
    %v7189 = vunpack.c.l.b16 %v6673
    %v7190 = vunpack.c.l.b16 %v6674
    %v7191 = vunpack.c.l.b16 %v6675
    %v7192 = vunpack.c.l.b16 %v6676
    %v7193 = vunpack.c.l.b16 %v6677
    %v7194 = vunpack.c.l.b16 %v6678
    %v7195 = vunpack.c.l.b16 %v6679
    %v7196 = vunpack.c.l.b16 %v6680
    %v7197 = vunpack.c.l.b16 %v6681
    %v7198 = vunpack.c.l.b16 %v6682
    %v7199 = vunpack.c.l.b16 %v6683
    %v7200 = vunpack.c.l.b16 %v6684
    %v7201 = vunpack.c.l.b16 %v6685
    %v7202 = vunpack.c.l.b16 %v6686
    %v7203 = vunpack.c.l.b16 %v6687
    %v7204 = vunpack.c.l.b16 %v6688
    %v7205 = vunpack.c.l.b16 %v6689
    %v7206 = vunpack.c.l.b16 %v6690
    %v7207 = vunpack.c.l.b16 %v6691
    %v7208 = vunpack.c.l.b16 %v6692
    %v7209 = vunpack.c.l.b16 %v6693
    %v7210 = vunpack.c.l.b16 %v6694
    %v7211 = vunpack.c.l.b16 %v6695
    %v7212 = vunpack.c.l.b16 %v6696
    %v7213 = vunpack.c.l.b16 %v6697
    %v7214 = vunpack.c.l.b16 %v6698
    %v7215 = vunpack.c.l.b16 %v6699
    %v7216 = vunpack.c.l.b16 %v6700
    %v7217 = vunpack.c.l.b16 %v6701
    %v7218 = vunpack.c.l.b16 %v6702
    %v7219 = vunpack.c.l.b16 %v6703
    %v7220 = vunpack.c.l.b16 %v6704
    %v7221 = vunpack.c.l.b16 %v6705
    %v7222 = vunpack.c.l.b16 %v6706
    %v7223 = vunpack.c.l.b16 %v6707
    %v7224 = vunpack.c.l.b16 %v6708
    %v7225 = vunpack.c.l.b16 %v6709
    %v7226 = vunpack.c.l.b16 %v6710
    %v7227 = vunpack.c.l.b16 %v6711
    %v7228 = vunpack.c.l.b16 %v6712
    %v7229 = vunpack.c.l.b16 %v6713
    %v7230 = vunpack.c.l.b16 %v6714
    %v7231 = vunpack.c.l.b16 %v6715
    %v7232 = vunpack.c.l.b16 %v6716
    %v7233 = vunpack.c.l.b16 %v6717
    %v7234 = vunpack.c.l.b16 %v6718
    %v7235 = vunpack.c.l.b16 %v6719
    %v7236 = vunpack.c.l.b16 %v6720
    %v7237 = vunpack.c.l.b16 %v6721
    %v7238 = vunpack.c.l.b16 %v6722
    %v7239 = vpack.c.b16 %v6984, %v6983
    %v7240 = vpack.c.b16 %v6986, %v6985
    %v7241 = vpack.c.b16 %v6988, %v6987
    %v7242 = vpack.c.b16 %v6990, %v6989
    %v7243 = vpack.c.b16 %v6992, %v6991
    %v7244 = vpack.c.b16 %v6994, %v6993
    %v7245 = vpack.c.b16 %v6996, %v6995
    %v7246 = vpack.c.b16 %v6998, %v6997
    %v7247 = vpack.c.b16 %v7000, %v6999
    %v7248 = vpack.c.b16 %v7002, %v7001
    %v7249 = vpack.c.b16 %v7004, %v7003
    %v7250 = vpack.c.b16 %v7006, %v7005
    %v7251 = vpack.c.b16 %v7008, %v7007
    %v7252 = vpack.c.b16 %v7010, %v7009
    %v7253 = vpack.c.b16 %v7012, %v7011
    %v7254 = vpack.c.b16 %v7014, %v7013
    %v7255 = vpack.c.b16 %v7016, %v7015
    %v7256 = vpack.c.b16 %v7018, %v7017
    %v7257 = vpack.c.b16 %v7020, %v7019
    %v7258 = vpack.c.b16 %v7022, %v7021
    %v7259 = vpack.c.b16 %v7024, %v7023
    %v7260 = vpack.c.b16 %v7026, %v7025
    %v7261 = vpack.c.b16 %v7028, %v7027
    %v7262 = vpack.c.b16 %v7030, %v7029
    %v7263 = vpack.c.b16 %v7032, %v7031
    %v7264 = vpack.c.b16 %v7034, %v7033
    %v7265 = vpack.c.b16 %v7036, %v7035
    %v7266 = vpack.c.b16 %v7038, %v7037
    %v7267 = vpack.c.b16 %v7040, %v7039
    %v7268 = vpack.c.b16 %v7042, %v7041
    %v7269 = vpack.c.b16 %v7044, %v7043
    %v7270 = vpack.c.b16 %v7046, %v7045
    %v7271 = vpack.c.b16 %v7048, %v7047
    %v7272 = vpack.c.b16 %v7050, %v7049
    %v7273 = vpack.c.b16 %v7052, %v7051
    %v7274 = vpack.c.b16 %v7054, %v7053
    %v7275 = vpack.c.b16 %v7056, %v7055
    %v7276 = vpack.c.b16 %v7058, %v7057
    %v7277 = vpack.c.b16 %v7060, %v7059
    %v7278 = vpack.c.b16 %v7062, %v7061
    %v7279 = vpack.c.b16 %v7064, %v7063
    %v7280 = vpack.c.b16 %v7066, %v7065
    %v7281 = vpack.c.b16 %v7068, %v7067
    %v7282 = vpack.c.b16 %v7070, %v7069
    %v7283 = vpack.c.b16 %v7072, %v7071
    %v7284 = vpack.c.b16 %v7074, %v7073
    %v7285 = vpack.c.b16 %v7076, %v7075
    %v7286 = vpack.c.b16 %v7078, %v7077
    %v7287 = vpack.c.b16 %v7080, %v7079
    %v7288 = vpack.c.b16 %v7082, %v7081
    %v7289 = vpack.c.b16 %v7084, %v7083
    %v7290 = vpack.c.b16 %v7086, %v7085
    %v7291 = vpack.c.b16 %v7088, %v7087
    %v7292 = vpack.c.b16 %v7090, %v7089
    %v7293 = vpack.c.b16 %v7092, %v7091
    %v7294 = vpack.c.b16 %v7094, %v7093
    %v7295 = vpack.c.b16 %v7096, %v7095
    %v7296 = vpack.c.b16 %v7098, %v7097
    %v7297 = vpack.c.b16 %v7100, %v7099
    %v7298 = vpack.c.b16 %v7102, %v7101
    %v7299 = vpack.c.b16 %v7104, %v7103
    %v7300 = vpack.c.b16 %v7106, %v7105
    %v7301 = vpack.c.b16 %v7108, %v7107
    %v7302 = vpack.c.b16 %v7110, %v7109
    %v7303 = vpack.c.b16 %v7112, %v7111
    %v7304 = vpack.c.b16 %v7114, %v7113
    %v7305 = vpack.c.b16 %v7116, %v7115
    %v7306 = vpack.c.b16 %v7118, %v7117
    %v7307 = vpack.c.b16 %v7120, %v7119
    %v7308 = vpack.c.b16 %v7122, %v7121
    %v7309 = vpack.c.b16 %v7124, %v7123
    %v7310 = vpack.c.b16 %v7126, %v7125
    %v7311 = vpack.c.b16 %v7128, %v7127
    %v7312 = vpack.c.b16 %v7130, %v7129
    %v7313 = vpack.c.b16 %v7132, %v7131
    %v7314 = vpack.c.b16 %v7134, %v7133
    %v7315 = vpack.c.b16 %v7136, %v7135
    %v7316 = vpack.c.b16 %v7138, %v7137
    %v7317 = vpack.c.b16 %v7140, %v7139
    %v7318 = vpack.c.b16 %v7142, %v7141
    %v7319 = vpack.c.b16 %v7144, %v7143
    %v7320 = vpack.c.b16 %v7146, %v7145
    %v7321 = vpack.c.b16 %v7148, %v7147
    %v7322 = vpack.c.b16 %v7150, %v7149
    %v7323 = vpack.c.b16 %v7152, %v7151
    %v7324 = vpack.c.b16 %v7154, %v7153
    %v7325 = vpack.c.b16 %v7156, %v7155
    %v7326 = vpack.c.b16 %v7158, %v7157
    %v7327 = vpack.c.b16 %v7160, %v7159
    %v7328 = vpack.c.b16 %v7162, %v7161
    %v7329 = vpack.c.b16 %v7164, %v7163
    %v7330 = vpack.c.b16 %v7166, %v7165
    %v7331 = vpack.c.b16 %v7168, %v7167
    %v7332 = vpack.c.b16 %v7170, %v7169
    %v7333 = vpack.c.b16 %v7172, %v7171
    %v7334 = vpack.c.b16 %v7174, %v7173
    %v7335 = vpack.c.b16 %v7176, %v7175
    %v7336 = vpack.c.b16 %v7178, %v7177
    %v7337 = vpack.c.b16 %v7180, %v7179
    %v7338 = vpack.c.b16 %v7182, %v7181
    %v7339 = vpack.c.b16 %v7184, %v7183
    %v7340 = vpack.c.b16 %v7186, %v7185
    %v7341 = vpack.c.b16 %v7188, %v7187
    %v7342 = vpack.c.b16 %v7190, %v7189
    %v7343 = vpack.c.b16 %v7192, %v7191
    %v7344 = vpack.c.b16 %v7194, %v7193
    %v7345 = vpack.c.b16 %v7196, %v7195
    %v7346 = vpack.c.b16 %v7198, %v7197
    %v7347 = vpack.c.b16 %v7200, %v7199
    %v7348 = vpack.c.b16 %v7202, %v7201
    %v7349 = vpack.c.b16 %v7204, %v7203
    %v7350 = vpack.c.b16 %v7206, %v7205
    %v7351 = vpack.c.b16 %v7208, %v7207
    %v7352 = vpack.c.b16 %v7210, %v7209
    %v7353 = vpack.c.b16 %v7212, %v7211
    %v7354 = vpack.c.b16 %v7214, %v7213
    %v7355 = vpack.c.b16 %v7216, %v7215
    %v7356 = vpack.c.b16 %v7218, %v7217
    %v7357 = vpack.c.b16 %v7220, %v7219
    %v7358 = vpack.c.b16 %v7222, %v7221
    %v7359 = vpack.c.b16 %v7224, %v7223
    %v7360 = vpack.c.b16 %v7226, %v7225
    %v7361 = vpack.c.b16 %v7228, %v7227
    %v7362 = vpack.c.b16 %v7230, %v7229
    %v7363 = vpack.c.b16 %v7232, %v7231
    %v7364 = vpack.c.b16 %v7234, %v7233
    %v7365 = vpack.c.b16 %v7236, %v7235
    %v7366 = vpack.c.b16 %v7238, %v7237
    %7495 = vmatpush.bf16.msra.mxu0 %v7246
    %7496 = vmatpush.bf16.msra.mxu0 %v7245
    %7497 = vmatpush.bf16.msra.mxu0 %v7244
    %7498 = vmatpush.bf16.msra.mxu0 %v7243
    %7499 = vmatpush.bf16.msra.mxu0 %v7242
    %7500 = vmatpush.bf16.msra.mxu0 %v7241
    %7501 = vmatpush.bf16.msra.mxu0 %v7240
    %7502 = vmatpush.bf16.msra.mxu0 %v7239
    %7503 = vmatmul.bf16.gmra.mxu0 %v6451
    %v7504 = vpop.f32.mrf.mxu0
    %v7505 = vadd.f32 %v6725, %v7504
    %v7506 = vpop.f32.mrf.mxu0
    %v7507 = vadd.f32 %v6725, %v7506
    %7508 = vdwg.mxu0
    %7509 = vmatpush.bf16.msra.mxu0 %v7254
    %7510 = vmatpush.bf16.msra.mxu0 %v7253
    %7511 = vmatpush.bf16.msra.mxu0 %v7252
    %7512 = vmatpush.bf16.msra.mxu0 %v7251
    %7513 = vmatpush.bf16.msra.mxu0 %v7250
    %7514 = vmatpush.bf16.msra.mxu0 %v7249
    %7515 = vmatpush.bf16.msra.mxu0 %v7248
    %7516 = vmatpush.bf16.msra.mxu0 %v7247
    %7517 = vmatmul.bf16.gmra.mxu0 %v6452
    %v7518 = vpop.f32.mrf.mxu0
    %v7519 = vadd.f32 %v7505, %v7518
    %v7520 = vpop.f32.mrf.mxu0
    %v7521 = vadd.f32 %v7507, %v7520
    %7522 = vdwg.mxu0
    %7523 = vmatpush.bf16.msra.mxu0 %v7262
    %7524 = vmatpush.bf16.msra.mxu0 %v7261
    %7525 = vmatpush.bf16.msra.mxu0 %v7260
    %7526 = vmatpush.bf16.msra.mxu0 %v7259
    %7527 = vmatpush.bf16.msra.mxu0 %v7258
    %7528 = vmatpush.bf16.msra.mxu0 %v7257
    %7529 = vmatpush.bf16.msra.mxu0 %v7256
    %7530 = vmatpush.bf16.msra.mxu0 %v7255
    %7531 = vmatmul.bf16.gmra.mxu0 %v6453
    %v7532 = vpop.f32.mrf.mxu0
    %v7533 = vadd.f32 %v7519, %v7532
    %v7534 = vpop.f32.mrf.mxu0
    %v7535 = vadd.f32 %v7521, %v7534
    %7536 = vdwg.mxu0
    %7537 = vmatpush.bf16.msra.mxu0 %v7270
    %7538 = vmatpush.bf16.msra.mxu0 %v7269
    %7539 = vmatpush.bf16.msra.mxu0 %v7268
    %7540 = vmatpush.bf16.msra.mxu0 %v7267
    %7541 = vmatpush.bf16.msra.mxu0 %v7266
    %7542 = vmatpush.bf16.msra.mxu0 %v7265
    %7543 = vmatpush.bf16.msra.mxu0 %v7264
    %7544 = vmatpush.bf16.msra.mxu0 %v7263
    %7545 = vmatmul.bf16.gmra.mxu0 %v6454
    %v7546 = vpop.f32.mrf.mxu0
    %v7547 = vadd.f32 %v7533, %v7546
    %v7548 = vpop.f32.mrf.mxu0
    %v7549 = vadd.f32 %v7535, %v7548
    %7550 = vdwg.mxu0
    %7551 = vmatpush.bf16.msra.mxu0 %v7278
    %7552 = vmatpush.bf16.msra.mxu0 %v7277
    %7553 = vmatpush.bf16.msra.mxu0 %v7276
    %7554 = vmatpush.bf16.msra.mxu0 %v7275
    %7555 = vmatpush.bf16.msra.mxu0 %v7274
    %7556 = vmatpush.bf16.msra.mxu0 %v7273
    %7557 = vmatpush.bf16.msra.mxu0 %v7272
    %7558 = vmatpush.bf16.msra.mxu0 %v7271
    %7559 = vmatmul.bf16.gmra.mxu0 %v6455
    %v7560 = vpop.f32.mrf.mxu0
    %v7561 = vadd.f32 %v7547, %v7560
    %v7562 = vpop.f32.mrf.mxu0
    %v7563 = vadd.f32 %v7549, %v7562
    %7564 = vdwg.mxu0
    %7565 = vmatpush.bf16.msra.mxu0 %v7286
    %7566 = vmatpush.bf16.msra.mxu0 %v7285
    %7567 = vmatpush.bf16.msra.mxu0 %v7284
    %7568 = vmatpush.bf16.msra.mxu0 %v7283
    %7569 = vmatpush.bf16.msra.mxu0 %v7282
    %7570 = vmatpush.bf16.msra.mxu0 %v7281
    %7571 = vmatpush.bf16.msra.mxu0 %v7280
    %7572 = vmatpush.bf16.msra.mxu0 %v7279
    %7573 = vmatmul.bf16.gmra.mxu0 %v6456
    %v7574 = vpop.f32.mrf.mxu0
    %v7575 = vadd.f32 %v7561, %v7574
    %v7576 = vpop.f32.mrf.mxu0
    %v7577 = vadd.f32 %v7563, %v7576
    %7578 = vdwg.mxu0
    %7579 = vmatpush.bf16.msra.mxu0 %v7294
    %7580 = vmatpush.bf16.msra.mxu0 %v7293
    %7581 = vmatpush.bf16.msra.mxu0 %v7292
    %7582 = vmatpush.bf16.msra.mxu0 %v7291
    %7583 = vmatpush.bf16.msra.mxu0 %v7290
    %7584 = vmatpush.bf16.msra.mxu0 %v7289
    %7585 = vmatpush.bf16.msra.mxu0 %v7288
    %7586 = vmatpush.bf16.msra.mxu0 %v7287
    %7587 = vmatmul.bf16.gmra.mxu0 %v6457
    %v7588 = vpop.f32.mrf.mxu0
    %v7589 = vadd.f32 %v7575, %v7588
    %v7590 = vpop.f32.mrf.mxu0
    %v7591 = vadd.f32 %v7577, %v7590
    %7592 = vdwg.mxu0
    %7593 = vmatpush.bf16.msra.mxu0 %v7302
    %7594 = vmatpush.bf16.msra.mxu0 %v7301
    %7595 = vmatpush.bf16.msra.mxu0 %v7300
    %7596 = vmatpush.bf16.msra.mxu0 %v7299
    %7597 = vmatpush.bf16.msra.mxu0 %v7298
    %7598 = vmatpush.bf16.msra.mxu0 %v7297
    %7599 = vmatpush.bf16.msra.mxu0 %v7296
    %7600 = vmatpush.bf16.msra.mxu0 %v7295
    %7601 = vmatmul.bf16.gmra.mxu0 %v6458
    %v7602 = vpop.f32.mrf.mxu0
    %v7603 = vadd.f32 %v7589, %v7602
    %v7604 = vpop.f32.mrf.mxu0
    %v7605 = vadd.f32 %v7591, %v7604
    %7606 = vdwg.mxu0
    %7607 = vmatpush.bf16.msra.mxu0 %v7310
    %7608 = vmatpush.bf16.msra.mxu0 %v7309
    %7609 = vmatpush.bf16.msra.mxu0 %v7308
    %7610 = vmatpush.bf16.msra.mxu0 %v7307
    %7611 = vmatpush.bf16.msra.mxu0 %v7306
    %7612 = vmatpush.bf16.msra.mxu0 %v7305
    %7613 = vmatpush.bf16.msra.mxu0 %v7304
    %7614 = vmatpush.bf16.msra.mxu0 %v7303
    %7615 = vmatmul.bf16.gmra.mxu0 %v6459
    %v7616 = vpop.f32.mrf.mxu0
    %v7617 = vadd.f32 %v7603, %v7616
    %v7618 = vpop.f32.mrf.mxu0
    %v7619 = vadd.f32 %v7605, %v7618
    %7620 = vdwg.mxu0
    %7621 = vmatpush.bf16.msra.mxu0 %v7318
    %7622 = vmatpush.bf16.msra.mxu0 %v7317
    %7623 = vmatpush.bf16.msra.mxu0 %v7316
    %7624 = vmatpush.bf16.msra.mxu0 %v7315
    %7625 = vmatpush.bf16.msra.mxu0 %v7314
    %7626 = vmatpush.bf16.msra.mxu0 %v7313
    %7627 = vmatpush.bf16.msra.mxu0 %v7312
    %7628 = vmatpush.bf16.msra.mxu0 %v7311
    %7629 = vmatmul.bf16.gmra.mxu0 %v6460
    %v7630 = vpop.f32.mrf.mxu0
    %v7631 = vadd.f32 %v7617, %v7630
    %v7632 = vpop.f32.mrf.mxu0
    %v7633 = vadd.f32 %v7619, %v7632
    %7634 = vdwg.mxu0
    %7635 = vmatpush.bf16.msra.mxu0 %v7326
    %7636 = vmatpush.bf16.msra.mxu0 %v7325
    %7637 = vmatpush.bf16.msra.mxu0 %v7324
    %7638 = vmatpush.bf16.msra.mxu0 %v7323
    %7639 = vmatpush.bf16.msra.mxu0 %v7322
    %7640 = vmatpush.bf16.msra.mxu0 %v7321
    %7641 = vmatpush.bf16.msra.mxu0 %v7320
    %7642 = vmatpush.bf16.msra.mxu0 %v7319
    %7643 = vmatmul.bf16.gmra.mxu0 %v6461
    %v7644 = vpop.f32.mrf.mxu0
    %v7645 = vadd.f32 %v7631, %v7644
    %v7646 = vpop.f32.mrf.mxu0
    %v7647 = vadd.f32 %v7633, %v7646
    %7648 = vdwg.mxu0
    %7649 = vmatpush.bf16.msra.mxu0 %v7334
    %7650 = vmatpush.bf16.msra.mxu0 %v7333
    %7651 = vmatpush.bf16.msra.mxu0 %v7332
    %7652 = vmatpush.bf16.msra.mxu0 %v7331
    %7653 = vmatpush.bf16.msra.mxu0 %v7330
    %7654 = vmatpush.bf16.msra.mxu0 %v7329
    %7655 = vmatpush.bf16.msra.mxu0 %v7328
    %7656 = vmatpush.bf16.msra.mxu0 %v7327
    %7657 = vmatmul.bf16.gmra.mxu0 %v6462
    %v7658 = vpop.f32.mrf.mxu0
    %v7659 = vadd.f32 %v7645, %v7658
    %v7660 = vpop.f32.mrf.mxu0
    %v7661 = vadd.f32 %v7647, %v7660
    %7662 = vdwg.mxu0
    %7663 = vmatpush.bf16.msra.mxu0 %v7342
    %7664 = vmatpush.bf16.msra.mxu0 %v7341
    %7665 = vmatpush.bf16.msra.mxu0 %v7340
    %7666 = vmatpush.bf16.msra.mxu0 %v7339
    %7667 = vmatpush.bf16.msra.mxu0 %v7338
    %7668 = vmatpush.bf16.msra.mxu0 %v7337
    %7669 = vmatpush.bf16.msra.mxu0 %v7336
    %7670 = vmatpush.bf16.msra.mxu0 %v7335
    %7671 = vmatmul.bf16.gmra.mxu0 %v6463
    %v7672 = vpop.f32.mrf.mxu0
    %v7673 = vadd.f32 %v7659, %v7672
    %v7674 = vpop.f32.mrf.mxu0
    %v7675 = vadd.f32 %v7661, %v7674
    %7676 = vdwg.mxu0
    %7677 = vmatpush.bf16.msra.mxu0 %v7350
    %7678 = vmatpush.bf16.msra.mxu0 %v7349
    %7679 = vmatpush.bf16.msra.mxu0 %v7348
    %7680 = vmatpush.bf16.msra.mxu0 %v7347
    %7681 = vmatpush.bf16.msra.mxu0 %v7346
    %7682 = vmatpush.bf16.msra.mxu0 %v7345
    %7683 = vmatpush.bf16.msra.mxu0 %v7344
    %7684 = vmatpush.bf16.msra.mxu0 %v7343
    %7685 = vmatmul.bf16.gmra.mxu0 %v6464
    %v7686 = vpop.f32.mrf.mxu0
    %v7687 = vadd.f32 %v7673, %v7686
    %v7688 = vpop.f32.mrf.mxu0
    %v7689 = vadd.f32 %v7675, %v7688
    %7690 = vdwg.mxu0
    %7691 = vmatpush.bf16.msra.mxu0 %v7358
    %7692 = vmatpush.bf16.msra.mxu0 %v7357
    %7693 = vmatpush.bf16.msra.mxu0 %v7356
    %7694 = vmatpush.bf16.msra.mxu0 %v7355
    %7695 = vmatpush.bf16.msra.mxu0 %v7354
    %7696 = vmatpush.bf16.msra.mxu0 %v7353
    %7697 = vmatpush.bf16.msra.mxu0 %v7352
    %7698 = vmatpush.bf16.msra.mxu0 %v7351
    %7699 = vmatmul.bf16.gmra.mxu0 %v6465
    %v7700 = vpop.f32.mrf.mxu0
    %v7701 = vadd.f32 %v7687, %v7700
    %v7702 = vpop.f32.mrf.mxu0
    %v7703 = vadd.f32 %v7689, %v7702
    %7704 = vdwg.mxu0
    %7705 = vmatpush.bf16.msra.mxu0 %v7366
    %7706 = vmatpush.bf16.msra.mxu0 %v7365
    %7707 = vmatpush.bf16.msra.mxu0 %v7364
    %7708 = vmatpush.bf16.msra.mxu0 %v7363
    %7709 = vmatpush.bf16.msra.mxu0 %v7362
    %7710 = vmatpush.bf16.msra.mxu0 %v7361
    %7711 = vmatpush.bf16.msra.mxu0 %v7360
    %7712 = vmatpush.bf16.msra.mxu0 %v7359
    %7713 = vmatmul.bf16.gmra.mxu0 %v6466
    %v7714 = vpop.f32.mrf.mxu0
    %v7715 = vadd.f32 %v7701, %v7714
    %v7716 = vpop.f32.mrf.mxu0
    %v7717 = vadd.f32 %v7703, %v7716
    %7718 = vdwg.mxu0
    %7719 = vst [vmem:[#allocation11] sm:$0xff] %v7715
    %7720 = vst [vmem:[#allocation11 + $0x8] sm:$0xff] %v7717
    // Predicated region
    $region42: #{tpu_custom_call.1} parent=1 // pred_check
      _
    $region43: #{tpu_custom_call.1} parent=1 // pred_check_branch
      %7722 = sbr.rel (0) target = $region45
    $region44: #{tpu_custom_call.1} parent=1 // pred_region
      %7724 = vsyncadd [#allocation4], 0
      %s7725 = sshll.u32 [#allocation11], 4
      %s7726 = int_to_ptr.vmem [resolvable:$true] %s7725
      %s7727 = sshll.u32 %s5, 4
      %s7728 = int_to_ptr.hbm [resolvable:$true] %s7727
      %7733 = dma.vmem_to_hbm [thread:$0]  %s7726, 256, %s7728, [#allocation4], 128, 128, 8
    $region45: #{tpu_custom_call.1} parent=1 // pred_fallthru
      _
    // Predicated region
    $region46: #{tpu_custom_call.1} parent=1 // pred_check
      _
    $region47: #{tpu_custom_call.1} parent=1 // pred_check_branch
      %7735 = sbr.rel (0) target = $region49
    $region48: #{tpu_custom_call.1} parent=1 // pred_region
      %7737 = dma.done [#allocation4], 256
    $region49: #{tpu_custom_call.1} parent=1 // pred_fallthru
      _
    %7738 = vsyncpa [#allocation3], 1
    %7739 = vsyncpa [#allocation6], 1
    %7740 = vsyncpa [#allocation9], 1
    %7741 = vsyncpa [#allocation4], 1

</llo_original>
